<compile_context>
chip_gen: v7x
topology: tpu7x:2x2x1
jax: 0.10.0
libtpu: 0.0.40
codegen_flags: <defaults>
</compile_context>

<pallas_src>
import functools
import math

import jax
import jax.numpy as jnp
from jax import lax
from jax.experimental import pallas as pl
from jax.experimental.pallas import tpu as pltpu

_VMEM_LIMIT = 48 * 1024 * 1024   # scoped-VMEM budget with headroom (fits v5e/v6e/v7x)
_NEG_INF = -1e30                 # large negative instead of -inf (avoids NaNs)
_LN_EPS = 1e-5                   # matches torch.nn.LayerNorm default


def _round_up(x, m):
    return (x + m - 1) // m * m


def _pick_seq_tile(s):
    # 256-wide tiles when they divide S (fills the 256-wide v6e/v7x MXU),
    # else 128; small multiples of 8 for tiny test shapes.
    if s % 256 == 0:
        return 256
    if s % 128 == 0 or s >= 128:
        return 128
    return _round_up(s, 8)


def _pick_row_tile(m):
    # Large row tiles amortize the ~0.35us per-grid-step overhead.
    for t in (512, 256, 128, 64, 32, 16, 8):
        if m % t == 0:
            return t
    return m


def _cp(sem):
    return pltpu.CompilerParams(dimension_semantics=sem,
                                vmem_limit_bytes=_VMEM_LIMIT)


# --------------------------------------------------------------------------
# QKV projection: GEMM + head-major Q/K/V emission (no host transpose)
# --------------------------------------------------------------------------

def _qkv_proj_kernel(x_ref, w_ref, b_ref, q_ref, k_ref, v_ref, *,
                     nheads, d_head, cdt):
    x = x_ref[...].astype(cdt)
    w = w_ref[...].astype(cdt)
    y = jnp.dot(x, w, preferred_element_type=jnp.float32)
    y = y + b_ref[...].astype(jnp.float32)            # (tm, 3*d_model), f32
    d_model = nheads * d_head
    # Emit head-major [H, tm, d_head] slabs directly (static lane slices;
    # amortized once per row tile -- avoids the HBM transpose round trip).
    for idx, o in enumerate((q_ref, k_ref, v_ref)):
        base = idx * d_model
        for h in range(nheads):
            o[h, :, :] = y[:, base + h * d_head: base + (h + 1) * d_head].astype(o.dtype)


def _qkv_proj(x, w, b, *, nheads, d_head, cdt):
    bsz, sp, d_model = x.shape
    tm = _pick_row_tile(sp)
    kern = functools.partial(_qkv_proj_kernel, nheads=nheads, d_head=d_head, cdt=cdt)
    out_sds = jax.ShapeDtypeStruct((bsz, nheads, sp, d_head), cdt)
    out_spec = pl.BlockSpec((None, nheads, tm, d_head), lambda b_, i: (b_, 0, i, 0))
    return pl.pallas_call(
        kern,
        grid=(bsz, sp // tm),
        in_specs=[
            pl.BlockSpec((None, tm, d_model), lambda b_, i: (b_, i, 0)),
            pl.BlockSpec((d_model, 3 * d_model), lambda b_, i: (0, 0)),  # stationary
            pl.BlockSpec((1, 3 * d_model), lambda b_, i: (0, 0)),
        ],
        out_specs=(out_spec, out_spec, out_spec),
        out_shape=(out_sds, out_sds, out_sds),
        compiler_params=_cp(("parallel", "parallel")),
    )(x, w, b)


# --------------------------------------------------------------------------
# Fused GEMM epilogues: out_proj+res+LN  and  FFN1+FFN2+res+LN
# --------------------------------------------------------------------------

def _out_res_ln_kernel(a_ref, w_ref, b_ref, res_ref, g_ref, be_ref, o_ref, *, cdt):
    h = jnp.dot(a_ref[...].astype(cdt), w_ref[...].astype(cdt),
                preferred_element_type=jnp.float32)
    h = h + b_ref[...].astype(jnp.float32) + res_ref[...].astype(jnp.float32)
    mu = jnp.mean(h, axis=-1, keepdims=True)
    c = h - mu
    var = jnp.mean(c * c, axis=-1, keepdims=True)
    y = c * lax.rsqrt(var + _LN_EPS)
    y = y * g_ref[...].astype(jnp.float32) + be_ref[...].astype(jnp.float32)
    o_ref[...] = y.astype(o_ref.dtype)


def _out_res_ln(a, w, b, res, gamma, beta, *, cdt):
    m, _ = res.shape
    n = w.shape[1]
    tm = _pick_row_tile(m)
    kern = functools.partial(_out_res_ln_kernel, cdt=cdt)
    return pl.pallas_call(
        kern,
        grid=(m // tm,),
        in_specs=[
            pl.BlockSpec((tm, a.shape[1]), lambda i: (i, 0)),
            pl.BlockSpec((a.shape[1], n), lambda i: (0, 0)),   # weight stationary
            pl.BlockSpec((1, n), lambda i: (0, 0)),
            pl.BlockSpec((tm, n), lambda i: (i, 0)),
            pl.BlockSpec((1, n), lambda i: (0, 0)),
            pl.BlockSpec((1, n), lambda i: (0, 0)),
        ],
        out_specs=pl.BlockSpec((tm, n), lambda i: (i, 0)),
        out_shape=jax.ShapeDtypeStruct((m, n), res.dtype),
        compiler_params=_cp(("parallel",)),
    )(a, w, b, res, gamma, beta)


def _ffn_res_ln_kernel(x_ref, w1_ref, b1_ref, w2_ref, b2_ref, g_ref, be_ref,
                       o_ref, *, cdt):
    x = x_ref[...].astype(jnp.float32)
    h = jnp.dot(x.astype(cdt), w1_ref[...].astype(cdt),
                preferred_element_type=jnp.float32)
    h = jnp.maximum(h + b1_ref[...].astype(jnp.float32), 0.0)
    y = jnp.dot(h.astype(cdt), w2_ref[...].astype(cdt),
                preferred_element_type=jnp.float32)
    y = y + b2_ref[...].astype(jnp.float32) + x        # residual (the FFN input)
    mu = jnp.mean(y, axis=-1, keepdims=True)
    c = y - mu
    var = jnp.mean(c * c, axis=-1, keepdims=True)
    z = c * lax.rsqrt(var + _LN_EPS)
    z = z * g_ref[...].astype(jnp.float32) + be_ref[...].astype(jnp.float32)
    o_ref[...] = z.astype(o_ref.dtype)


def _ffn_res_ln(x, w1, b1, w2, b2, gamma, beta, *, cdt):
    m, d_model = x.shape
    dff = w1.shape[1]
    tm = _pick_row_tile(m)
    kern = functools.partial(_ffn_res_ln_kernel, cdt=cdt)
    return pl.pallas_call(
        kern,
        grid=(m // tm,),
        in_specs=[
            pl.BlockSpec((tm, d_model), lambda i: (i, 0)),
            pl.BlockSpec((d_model, dff), lambda i: (0, 0)),    # W1 stationary
            pl.BlockSpec((1, dff), lambda i: (0, 0)),
            pl.BlockSpec((dff, d_model), lambda i: (0, 0)),    # W2 stationary
            pl.BlockSpec((1, d_model), lambda i: (0, 0)),
            pl.BlockSpec((1, d_model), lambda i: (0, 0)),
            pl.BlockSpec((1, d_model), lambda i: (0, 0)),
        ],
        out_specs=pl.BlockSpec((tm, d_model), lambda i: (i, 0)),
        out_shape=jax.ShapeDtypeStruct((m, d_model), x.dtype),
        compiler_params=_cp(("parallel",)),
    )(x, w1, b1, w2, b2, gamma, beta)


# --------------------------------------------------------------------------
# Flash attention: relative bias + in-kernel causal mask, flattened causal grid
# --------------------------------------------------------------------------

def _attn_kernel(qi_of_ref, ki_of_ref, q_ref, k_ref, v_ref, bias_ref, o_ref,
                 m_sc, l_sc, acc_sc, *, scale, seq_len, tile, nheads, d_head,
                 nk, causal):
    t = pl.program_id(1)
    qi = qi_of_ref[t]
    ki = ki_of_ref[t]

    @pl.when(ki == 0)
    def _init():
        m_sc[...] = jnp.full(m_sc.shape, _NEG_INF, jnp.float32)
        l_sc[...] = jnp.zeros(l_sc.shape, jnp.float32)
        acc_sc[...] = jnp.zeros(acc_sc.shape, jnp.float32)

    q = q_ref[...]                               # (H, tq, d_head) compute dtype
    k = k_ref[...]
    v = v_ref[...]
    scores = jnp.einsum("hqd,hkd->hqk", q, k,
                        preferred_element_type=jnp.float32) * scale
    scores = scores + bias_ref[...].astype(jnp.float32)        # bf16 bias tile

    # In-kernel causal + padding mask (free VPU filler; no mask DMA stream).
    row = qi * tile + lax.broadcasted_iota(jnp.int32, (tile, tile), 0)
    col = ki * tile + lax.broadcasted_iota(jnp.int32, (tile, tile), 1)
    blocked = col >= seq_len
    if causal:
        blocked = blocked | (col > row)
    scores = jnp.where(blocked[None, :, :], jnp.float32(_NEG_INF), scores)

    # Online softmax (f32 accumulators).
    m_prev = m_sc[...]
    m_new = jnp.maximum(m_prev, jnp.max(scores, axis=-1, keepdims=True))
    alpha = jnp.exp(m_prev - m_new)
    p = jnp.exp(scores - m_new)
    l_sc[...] = alpha * l_sc[...] + jnp.sum(p, axis=-1, keepdims=True)
    acc_sc[...] = alpha * acc_sc[...] + jnp.einsum(
        "hqk,hkd->hqd", p.astype(v.dtype), v, preferred_element_type=jnp.float32)
    m_sc[...] = m_new

    is_last = (ki == qi) if causal else (ki == nk - 1)

    @pl.when(is_last)
    def _finalize():
        inv_l = pl.reciprocal(l_sc[...], approx=True)          # EUP slot
        out = acc_sc[...] * inv_l                              # (H, tq, d_head)
        # Single lane-dense writeback: heads concatenated along lanes
        # -> (tq, H*d_head), one full-width store (no per-head masked stores).
        o_ref[...] = jnp.concatenate(
            [out[h] for h in range(nheads)], axis=-1).astype(o_ref.dtype)


def _flash_attention(q, k, v, bias_blocks, *, tile, scale, seq_len, causal):
    bsz, nheads, sp, d_head = q.shape
    d_model = nheads * d_head
    nq = sp // tile

    # Flattened (qi, ki) pairs: only ki <= qi for the causal mask -> no dead
    # grid steps.  Tables are scalar-prefetched to SMEM and drive index_maps.
    qi_list, ki_list = [], []
    for qi in range(nq):
        for ki in range(qi + 1 if causal else nq):
            qi_list.append(qi)
            ki_list.append(ki)
    qi_of = jnp.asarray(qi_list, dtype=jnp.int32)
    ki_of = jnp.asarray(ki_list, dtype=jnp.int32)
    nsteps = len(qi_list)

    def q_map(b, t, qi_of, ki_of):
        return (b, 0, qi_of[t], 0)

    def kv_map(b, t, qi_of, ki_of):
        return (b, 0, ki_of[t], 0)

    def bias_map(b, t, qi_of, ki_of):
        # Toeplitz block-diagonal index: d = (qi - ki) + (nq - 1).
        return (qi_of[t] - ki_of[t] + nq - 1, 0, 0, 0)

    def out_map(b, t, qi_of, ki_of):
        return (b, qi_of[t], 0)

    kern = functools.partial(_attn_kernel, scale=scale, seq_len=seq_len,
                             tile=tile, nheads=nheads, d_head=d_head,
                             nk=nq, causal=causal)
    grid_spec = pltpu.PrefetchScalarGridSpec(
        num_scalar_prefetch=2,
        grid=(bsz, nsteps),
        in_specs=[
            pl.BlockSpec((None, nheads, tile, d_head), q_map),
            pl.BlockSpec((None, nheads, tile, d_head), kv_map),
            pl.BlockSpec((None, nheads, tile, d_head), kv_map),
            pl.BlockSpec((None, nheads, tile, tile), bias_map),
        ],
        out_specs=pl.BlockSpec((None, tile, d_model), out_map),
        scratch_shapes=[
            pltpu.VMEM((nheads, tile, 1), jnp.float32),        # running max m
            pltpu.VMEM((nheads, tile, 1), jnp.float32),        # running sum l
            pltpu.VMEM((nheads, tile, d_head), jnp.float32),   # output accumulator
        ],
    )
    # NOTE: batch is the "parallel" axis (megacore sharding on v7x); the
    # flattened causal step axis must stay "arbitrary" (output-resident accum).
    return pl.pallas_call(
        kern,
        grid_spec=grid_spec,
        out_shape=jax.ShapeDtypeStruct((bsz, sp, d_model), q.dtype),
        compiler_params=_cp(("parallel", "arbitrary")),
    )(qi_of, ki_of, q, k, v, bias_blocks)


# --------------------------------------------------------------------------
# Host-side glue
# --------------------------------------------------------------------------

def _make_bias_blocks(rel_bias, tile, nq, max_rel, dtype):
    """rel_bias [2*max_rel+1, H] -> distinct block-diagonal tiles [2nq-1, H, T, T] (bf16).

    bias(i, j, h) = rel_bias[clamp(i - j + max_rel, 0, 2*max_rel), h]; only
    depends on (i - j), so with square tiles only 2*nq-1 distinct (T, T) tiles
    exist per head (O(H*S*T) instead of O(H*S^2)).
    """
    dblk = jnp.arange(2 * nq - 1) - (nq - 1)                 # qi - ki
    ii = jnp.arange(tile)
    rel = dblk[:, None, None] * tile + ii[None, :, None] - ii[None, None, :]
    idx = jnp.clip(rel + max_rel, 0, 2 * max_rel)            # [2nq-1, T, T]
    bb = rel_bias[idx]                                       # [2nq-1, T, T, H]
    return jnp.transpose(bb, (0, 3, 1, 2)).astype(dtype)


def _layer_forward(x, p, *, nheads, d_head, tile, max_rel, scale, seq_len,
                   causal, cdt):
    bsz, sp, d_model = x.shape
    m = bsz * sp

    # QKV projection, emitted head-major (no HBM transpose).
    q, k, v = _qkv_proj(x, p["w_qkv"], p["b_qkv"], nheads=nheads, d_head=d_head,
                        cdt=cdt)

    bias_blocks = _make_bias_blocks(p["rel_bias"], tile, sp // tile, max_rel, cdt)
    attn = _flash_attention(q, k, v, bias_blocks, tile=tile, scale=scale,
                            seq_len=seq_len, causal=causal)   # [B, Sp, D] bf16

    x2d = x.reshape(m, d_model)
    # out_proj + residual + LayerNorm fused into one pallas_call.
    x1 = _out_res_ln(attn.reshape(m, d_model), p["w_out"], p["b_out"],
                     res=x2d, gamma=p["ln1_g"], beta=p["ln1_b"], cdt=cdt)
    # FFN1(relu) + FFN2 + residual + LayerNorm fused into one pallas_call
    # (the m x dff hidden never touches HBM).
    x2 = _ffn_res_ln(x1, p["w_ff1"], p["b_ff1"], p["w_ff2"], p["b_ff2"],
                     gamma=p["ln2_g"], beta=p["ln2_b"], cdt=cdt)
    return x2.reshape(bsz, sp, d_model)


def relative_transformer_decoder_forward(x, tgt_mask, params, *, nhead,
                                          max_rel_dist,
                                          compute_dtype=jnp.bfloat16):
    """tgt_mask: None (no mask) or the standard causal upper-triangular bool mask.

    The mask is regenerated in-kernel from iota (no O(S^2) mask DMA stream); see
    TODO at the top of the file for arbitrary non-causal masks.
    """
    b_sz, s, d_model = x.shape
    d_head = d_model // nhead
    tile = _pick_seq_tile(s)
    sp = _round_up(s, tile)
    causal = tgt_mask is not None
    if sp != s:
        x = jnp.pad(x, ((0, 0), (0, sp - s), (0, 0)))
    scale = 1.0 / math.sqrt(d_head)
    out = x
    for p in params:
        out = _layer_forward(out, p, nheads=nhead, d_head=d_head, tile=tile,
                             max_rel=max_rel_dist, scale=scale, seq_len=s,
                             causal=causal, cdt=compute_dtype)
    return out[:, :s, :]


def prepare_decoder_params(params, compute_dtype=jnp.bfloat16):
    """Store the matmul weights in bf16 in HBM; LN params / biases stay f32."""
    cast_keys = ("w_qkv", "w_out", "w_ff1", "w_ff2")
    out = []
    for p in params:
        q = dict(p)
        for key in cast_keys:
            q[key] = p[key].astype(compute_dtype)
        out.append(q)
    return out


# --------------------------------------------------------------------------
# Example / smoke test
# --------------------------------------------------------------------------

def _init_params(key, num_layers, d_model, nhead, dff, max_rel):
    layers = []
    for _ in range(num_layers):
        key, *ks = jax.random.split(key, 8)
        sc = 0.05
        layers.append({
            "w_qkv": sc * jax.random.normal(ks[0], (d_model, 3 * d_model), jnp.float32),
            "b_qkv": sc * jax.random.normal(ks[1], (1, 3 * d_model), jnp.float32),
            "w_out": sc * jax.random.normal(ks[2], (d_model, d_model), jnp.float32),
            "b_out": sc * jax.random.normal(ks[3], (1, d_model), jnp.float32),
            "w_ff1": sc * jax.random.normal(ks[4], (d_model, dff), jnp.float32),
            "b_ff1": jnp.zeros((1, dff), jnp.float32),
            "w_ff2": sc * jax.random.normal(ks[5], (dff, d_model), jnp.float32),
            "b_ff2": jnp.zeros((1, d_model), jnp.float32),
            "ln1_g": jnp.ones((1, d_model), jnp.float32),
            "ln1_b": jnp.zeros((1, d_model), jnp.float32),
            "ln2_g": jnp.ones((1, d_model), jnp.float32),
            "ln2_b": jnp.zeros((1, d_model), jnp.float32),
            "rel_bias": 0.1 * jax.random.normal(ks[6], (2 * max_rel + 1, nhead), jnp.float32),
        })
    return layers


if __name__ == "__main__":
    key = jax.random.PRNGKey(0)
    batch, seq = 2, 8
    d_model, nhead, dff, num_layers, max_rel = 32, 4, 64, 2, 4

    kx, kp = jax.random.split(key)
    x = jax.random.normal(kx, (batch, seq, d_model), jnp.float32)
    tgt_mask = jnp.triu(jnp.ones((seq, seq), dtype=bool), k=1)   # causal decoder mask

    params = _init_params(kp, num_layers, d_model, nhead, dff, max_rel)
    params = prepare_decoder_params(params, jnp.bfloat16)        # bf16 weights in HBM

    fwd = jax.jit(functools.partial(relative_transformer_decoder_forward,
                                    nhead=nhead, max_rel_dist=max_rel))
    out = fwd(x, tgt_mask, params)
    jax.block_until_ready(out)
    assert out.shape == (batch, seq, d_model)
    assert bool(jnp.all(jnp.isfinite(out)))
    print("KERNEL_OK")
</pallas_src>

<mosaic_0001>
module attributes {stable_mosaic.version = 11 : i64} {
  func.func @_qkv_proj_kernel(%arg0: i32, %arg1: i32, %arg2: memref<1x8x32xf32, #tpu.memory_space<vmem>>, %arg3: memref<32x96xbf16, #tpu.memory_space<vmem>>, %arg4: memref<1x96xf32, #tpu.memory_space<vmem>>, %arg5: memref<1x4x8x8xbf16, #tpu.memory_space<vmem>>, %arg6: memref<1x4x8x8xbf16, #tpu.memory_space<vmem>>, %arg7: memref<1x4x8x8xbf16, #tpu.memory_space<vmem>>) attributes {dimension_semantics = [#tpu.dimension_semantics<parallel>, #tpu.dimension_semantics<parallel>], iteration_bounds = array<i64: 2, 1>, scalar_prefetch = 0 : i64, scratch_operands = 0 : i64, tpu.core_type = #tpu.core_type<tc>, window_params = [{transform_indices = @transform_0, window_bounds = array<i64: 1, 8, 32>}, {pipeline_mode = #tpu.pipeline_mode<synchronous>, transform_indices = @transform_1, window_bounds = array<i64: 32, 96>}, {pipeline_mode = #tpu.pipeline_mode<synchronous>, transform_indices = @transform_2, window_bounds = array<i64: 1, 96>}, {transform_indices = @transform_3, window_bounds = array<i64: 1, 4, 8, 8>}, {transform_indices = @transform_4, window_bounds = array<i64: 1, 4, 8, 8>}, {transform_indices = @transform_5, window_bounds = array<i64: 1, 4, 8, 8>}]} {
    %c0 = arith.constant 0 : index
    %c0_0 = arith.constant 0 : index
    %c0_1 = arith.constant 0 : index
    %0 = vector.load %arg2[%c0, %c0_0, %c0_1] : memref<1x8x32xf32, #tpu.memory_space<vmem>>, vector<1x8x32xf32>
    %1 = vector.shape_cast %0 : vector<1x8x32xf32> to vector<8x32xf32>
    %2 = arith.truncf %1 : vector<8x32xf32> to vector<8x32xbf16>
    %c0_2 = arith.constant 0 : index
    %c0_3 = arith.constant 0 : index
    %3 = vector.load %arg3[%c0_2, %c0_3] : memref<32x96xbf16, #tpu.memory_space<vmem>>, vector<32x96xbf16>
    %cst = arith.constant dense<0.000000e+00> : vector<8x96xf32>
    %4 = tpu.matmul %2, %3, %cst {dimension_numbers = #tpu.dot_dimension_numbers<[1], [0], [0], [1], [0, 0, 1, 1], [], []>} : vector<8x32xbf16>, vector<32x96xbf16>, vector<8x96xf32> -> vector<8x96xf32>
    %c0_4 = arith.constant 0 : index
    %c0_5 = arith.constant 0 : index
    %5 = vector.load %arg4[%c0_4, %c0_5] : memref<1x96xf32, #tpu.memory_space<vmem>>, vector<1x96xf32>
    %6 = vector.broadcast %5 : vector<1x96xf32> to vector<8x96xf32>
    %7 = arith.addf %4, %6 : vector<8x96xf32>
    %8 = vector.extract_strided_slice %7 {offsets = [0, 0], sizes = [8, 8], strides = [1, 1]} : vector<8x96xf32> to vector<8x8xf32>
    %9 = arith.truncf %8 : vector<8x8xf32> to vector<8x8xbf16>
    %c0_6 = arith.constant 0 : index
    %c0_7 = arith.constant 0 : index
    %c0_8 = arith.constant 0 : index
    %c0_9 = arith.constant 0 : index
    %10 = vector.load %arg5[%c0_6, %c0_7, %c0_8, %c0_9] : memref<1x4x8x8xbf16, #tpu.memory_space<vmem>>, vector<1x1x8x8xbf16>
    %11 = vector.shape_cast %10 : vector<1x1x8x8xbf16> to vector<8x8xbf16>
    %12 = vector.shape_cast %9 : vector<8x8xbf16> to vector<1x1x8x8xbf16>
    tpu.vector_store %arg5[%c0_6, %c0_7, %c0_8, %c0_9], %12 {strides = array<i32>} : memref<1x4x8x8xbf16, #tpu.memory_space<vmem>>, vector<1x1x8x8xbf16>,
    %13 = vector.extract_strided_slice %7 {offsets = [0, 8], sizes = [8, 8], strides = [1, 1]} : vector<8x96xf32> to vector<8x8xf32>
    %14 = arith.truncf %13 : vector<8x8xf32> to vector<8x8xbf16>
    %c0_10 = arith.constant 0 : index
    %c1 = arith.constant 1 : index
    %c0_11 = arith.constant 0 : index
    %c0_12 = arith.constant 0 : index
    %15 = vector.load %arg5[%c0_10, %c1, %c0_11, %c0_12] : memref<1x4x8x8xbf16, #tpu.memory_space<vmem>>, vector<1x1x8x8xbf16>
    %16 = vector.shape_cast %15 : vector<1x1x8x8xbf16> to vector<8x8xbf16>
    %17 = vector.shape_cast %14 : vector<8x8xbf16> to vector<1x1x8x8xbf16>
    tpu.vector_store %arg5[%c0_10, %c1, %c0_11, %c0_12], %17 {strides = array<i32>} : memref<1x4x8x8xbf16, #tpu.memory_space<vmem>>, vector<1x1x8x8xbf16>,
    %18 = vector.extract_strided_slice %7 {offsets = [0, 16], sizes = [8, 8], strides = [1, 1]} : vector<8x96xf32> to vector<8x8xf32>
    %19 = arith.truncf %18 : vector<8x8xf32> to vector<8x8xbf16>
    %c0_13 = arith.constant 0 : index
    %c2 = arith.constant 2 : index
    %c0_14 = arith.constant 0 : index
    %c0_15 = arith.constant 0 : index
    %20 = vector.load %arg5[%c0_13, %c2, %c0_14, %c0_15] : memref<1x4x8x8xbf16, #tpu.memory_space<vmem>>, vector<1x1x8x8xbf16>
    %21 = vector.shape_cast %20 : vector<1x1x8x8xbf16> to vector<8x8xbf16>
    %22 = vector.shape_cast %19 : vector<8x8xbf16> to vector<1x1x8x8xbf16>
    tpu.vector_store %arg5[%c0_13, %c2, %c0_14, %c0_15], %22 {strides = array<i32>} : memref<1x4x8x8xbf16, #tpu.memory_space<vmem>>, vector<1x1x8x8xbf16>,
    %23 = vector.extract_strided_slice %7 {offsets = [0, 24], sizes = [8, 8], strides = [1, 1]} : vector<8x96xf32> to vector<8x8xf32>
    %24 = arith.truncf %23 : vector<8x8xf32> to vector<8x8xbf16>
    %c0_16 = arith.constant 0 : index
    %c3 = arith.constant 3 : index
    %c0_17 = arith.constant 0 : index
    %c0_18 = arith.constant 0 : index
    %25 = vector.load %arg5[%c0_16, %c3, %c0_17, %c0_18] : memref<1x4x8x8xbf16, #tpu.memory_space<vmem>>, vector<1x1x8x8xbf16>
    %26 = vector.shape_cast %25 : vector<1x1x8x8xbf16> to vector<8x8xbf16>
    %27 = vector.shape_cast %24 : vector<8x8xbf16> to vector<1x1x8x8xbf16>
    tpu.vector_store %arg5[%c0_16, %c3, %c0_17, %c0_18], %27 {strides = array<i32>} : memref<1x4x8x8xbf16, #tpu.memory_space<vmem>>, vector<1x1x8x8xbf16>,
    %28 = vector.extract_strided_slice %7 {offsets = [0, 32], sizes = [8, 8], strides = [1, 1]} : vector<8x96xf32> to vector<8x8xf32>
    %29 = arith.truncf %28 : vector<8x8xf32> to vector<8x8xbf16>
    %c0_19 = arith.constant 0 : index
    %c0_20 = arith.constant 0 : index
    %c0_21 = arith.constant 0 : index
    %c0_22 = arith.constant 0 : index
    %30 = vector.load %arg6[%c0_19, %c0_20, %c0_21, %c0_22] : memref<1x4x8x8xbf16, #tpu.memory_space<vmem>>, vector<1x1x8x8xbf16>
    %31 = vector.shape_cast %30 : vector<1x1x8x8xbf16> to vector<8x8xbf16>
    %32 = vector.shape_cast %29 : vector<8x8xbf16> to vector<1x1x8x8xbf16>
    tpu.vector_store %arg6[%c0_19, %c0_20, %c0_21, %c0_22], %32 {strides = array<i32>} : memref<1x4x8x8xbf16, #tpu.memory_space<vmem>>, vector<1x1x8x8xbf16>,
    %33 = vector.extract_strided_slice %7 {offsets = [0, 40], sizes = [8, 8], strides = [1, 1]} : vector<8x96xf32> to vector<8x8xf32>
    %34 = arith.truncf %33 : vector<8x8xf32> to vector<8x8xbf16>
    %c0_23 = arith.constant 0 : index
    %c1_24 = arith.constant 1 : index
    %c0_25 = arith.constant 0 : index
    %c0_26 = arith.constant 0 : index
    %35 = vector.load %arg6[%c0_23, %c1_24, %c0_25, %c0_26] : memref<1x4x8x8xbf16, #tpu.memory_space<vmem>>, vector<1x1x8x8xbf16>
    %36 = vector.shape_cast %35 : vector<1x1x8x8xbf16> to vector<8x8xbf16>
    %37 = vector.shape_cast %34 : vector<8x8xbf16> to vector<1x1x8x8xbf16>
    tpu.vector_store %arg6[%c0_23, %c1_24, %c0_25, %c0_26], %37 {strides = array<i32>} : memref<1x4x8x8xbf16, #tpu.memory_space<vmem>>, vector<1x1x8x8xbf16>,
    %38 = vector.extract_strided_slice %7 {offsets = [0, 48], sizes = [8, 8], strides = [1, 1]} : vector<8x96xf32> to vector<8x8xf32>
    %39 = arith.truncf %38 : vector<8x8xf32> to vector<8x8xbf16>
    %c0_27 = arith.constant 0 : index
    %c2_28 = arith.constant 2 : index
    %c0_29 = arith.constant 0 : index
    %c0_30 = arith.constant 0 : index
    %40 = vector.load %arg6[%c0_27, %c2_28, %c0_29, %c0_30] : memref<1x4x8x8xbf16, #tpu.memory_space<vmem>>, vector<1x1x8x8xbf16>
    %41 = vector.shape_cast %40 : vector<1x1x8x8xbf16> to vector<8x8xbf16>
    %42 = vector.shape_cast %39 : vector<8x8xbf16> to vector<1x1x8x8xbf16>
    tpu.vector_store %arg6[%c0_27, %c2_28, %c0_29, %c0_30], %42 {strides = array<i32>} : memref<1x4x8x8xbf16, #tpu.memory_space<vmem>>, vector<1x1x8x8xbf16>,
    %43 = vector.extract_strided_slice %7 {offsets = [0, 56], sizes = [8, 8], strides = [1, 1]} : vector<8x96xf32> to vector<8x8xf32>
    %44 = arith.truncf %43 : vector<8x8xf32> to vector<8x8xbf16>
    %c0_31 = arith.constant 0 : index
    %c3_32 = arith.constant 3 : index
    %c0_33 = arith.constant 0 : index
    %c0_34 = arith.constant 0 : index
    %45 = vector.load %arg6[%c0_31, %c3_32, %c0_33, %c0_34] : memref<1x4x8x8xbf16, #tpu.memory_space<vmem>>, vector<1x1x8x8xbf16>
    %46 = vector.shape_cast %45 : vector<1x1x8x8xbf16> to vector<8x8xbf16>
    %47 = vector.shape_cast %44 : vector<8x8xbf16> to vector<1x1x8x8xbf16>
    tpu.vector_store %arg6[%c0_31, %c3_32, %c0_33, %c0_34], %47 {strides = array<i32>} : memref<1x4x8x8xbf16, #tpu.memory_space<vmem>>, vector<1x1x8x8xbf16>,
    %48 = vector.extract_strided_slice %7 {offsets = [0, 64], sizes = [8, 8], strides = [1, 1]} : vector<8x96xf32> to vector<8x8xf32>
    %49 = arith.truncf %48 : vector<8x8xf32> to vector<8x8xbf16>
    %c0_35 = arith.constant 0 : index
    %c0_36 = arith.constant 0 : index
    %c0_37 = arith.constant 0 : index
    %c0_38 = arith.constant 0 : index
    %50 = vector.load %arg7[%c0_35, %c0_36, %c0_37, %c0_38] : memref<1x4x8x8xbf16, #tpu.memory_space<vmem>>, vector<1x1x8x8xbf16>
    %51 = vector.shape_cast %50 : vector<1x1x8x8xbf16> to vector<8x8xbf16>
    %52 = vector.shape_cast %49 : vector<8x8xbf16> to vector<1x1x8x8xbf16>
    tpu.vector_store %arg7[%c0_35, %c0_36, %c0_37, %c0_38], %52 {strides = array<i32>} : memref<1x4x8x8xbf16, #tpu.memory_space<vmem>>, vector<1x1x8x8xbf16>,
    %53 = vector.extract_strided_slice %7 {offsets = [0, 72], sizes = [8, 8], strides = [1, 1]} : vector<8x96xf32> to vector<8x8xf32>
    %54 = arith.truncf %53 : vector<8x8xf32> to vector<8x8xbf16>
    %c0_39 = arith.constant 0 : index
    %c1_40 = arith.constant 1 : index
    %c0_41 = arith.constant 0 : index
    %c0_42 = arith.constant 0 : index
    %55 = vector.load %arg7[%c0_39, %c1_40, %c0_41, %c0_42] : memref<1x4x8x8xbf16, #tpu.memory_space<vmem>>, vector<1x1x8x8xbf16>
    %56 = vector.shape_cast %55 : vector<1x1x8x8xbf16> to vector<8x8xbf16>
    %57 = vector.shape_cast %54 : vector<8x8xbf16> to vector<1x1x8x8xbf16>
    tpu.vector_store %arg7[%c0_39, %c1_40, %c0_41, %c0_42], %57 {strides = array<i32>} : memref<1x4x8x8xbf16, #tpu.memory_space<vmem>>, vector<1x1x8x8xbf16>,
    %58 = vector.extract_strided_slice %7 {offsets = [0, 80], sizes = [8, 8], strides = [1, 1]} : vector<8x96xf32> to vector<8x8xf32>
    %59 = arith.truncf %58 : vector<8x8xf32> to vector<8x8xbf16>
    %c0_43 = arith.constant 0 : index
    %c2_44 = arith.constant 2 : index
    %c0_45 = arith.constant 0 : index
    %c0_46 = arith.constant 0 : index
    %60 = vector.load %arg7[%c0_43, %c2_44, %c0_45, %c0_46] : memref<1x4x8x8xbf16, #tpu.memory_space<vmem>>, vector<1x1x8x8xbf16>
    %61 = vector.shape_cast %60 : vector<1x1x8x8xbf16> to vector<8x8xbf16>
    %62 = vector.shape_cast %59 : vector<8x8xbf16> to vector<1x1x8x8xbf16>
    tpu.vector_store %arg7[%c0_43, %c2_44, %c0_45, %c0_46], %62 {strides = array<i32>} : memref<1x4x8x8xbf16, #tpu.memory_space<vmem>>, vector<1x1x8x8xbf16>,
    %63 = vector.extract_strided_slice %7 {offsets = [0, 88], sizes = [8, 8], strides = [1, 1]} : vector<8x96xf32> to vector<8x8xf32>
    %64 = arith.truncf %63 : vector<8x8xf32> to vector<8x8xbf16>
    %c0_47 = arith.constant 0 : index
    %c3_48 = arith.constant 3 : index
    %c0_49 = arith.constant 0 : index
    %c0_50 = arith.constant 0 : index
    %65 = vector.load %arg7[%c0_47, %c3_48, %c0_49, %c0_50] : memref<1x4x8x8xbf16, #tpu.memory_space<vmem>>, vector<1x1x8x8xbf16>
    %66 = vector.shape_cast %65 : vector<1x1x8x8xbf16> to vector<8x8xbf16>
    %67 = vector.shape_cast %64 : vector<8x8xbf16> to vector<1x1x8x8xbf16>
    tpu.vector_store %arg7[%c0_47, %c3_48, %c0_49, %c0_50], %67 {strides = array<i32>} : memref<1x4x8x8xbf16, #tpu.memory_space<vmem>>, vector<1x1x8x8xbf16>,
    return
  }
  func.func @transform_0(%arg0: i32, %arg1: i32) -> (i32, i32, i32) {
    %c0_i32 = arith.constant 0 : i32
    %c0_i32_0 = arith.constant 0 : i32
    return %arg0, %arg1, %c0_i32 : i32, i32, i32
  }
  func.func @transform_1(%arg0: i32, %arg1: i32) -> (i32, i32) {
    %c0_i32 = arith.constant 0 : i32
    %c0_i32_0 = arith.constant 0 : i32
    %c0_i32_1 = arith.constant 0 : i32
    return %c0_i32, %c0_i32_0 : i32, i32
  }
  func.func @transform_2(%arg0: i32, %arg1: i32) -> (i32, i32) {
    %c0_i32 = arith.constant 0 : i32
    %c0_i32_0 = arith.constant 0 : i32
    %c0_i32_1 = arith.constant 0 : i32
    return %c0_i32, %c0_i32_0 : i32, i32
  }
  func.func @transform_3(%arg0: i32, %arg1: i32) -> (i32, i32, i32, i32) {
    %c0_i32 = arith.constant 0 : i32
    %c0_i32_0 = arith.constant 0 : i32
    %c0_i32_1 = arith.constant 0 : i32
    return %arg0, %c0_i32, %arg1, %c0_i32_0 : i32, i32, i32, i32
  }
  func.func @transform_4(%arg0: i32, %arg1: i32) -> (i32, i32, i32, i32) {
    %c0_i32 = arith.constant 0 : i32
    %c0_i32_0 = arith.constant 0 : i32
    %c0_i32_1 = arith.constant 0 : i32
    return %arg0, %c0_i32, %arg1, %c0_i32_0 : i32, i32, i32, i32
  }
  func.func @transform_5(%arg0: i32, %arg1: i32) -> (i32, i32, i32, i32) {
    %c0_i32 = arith.constant 0 : i32
    %c0_i32_0 = arith.constant 0 : i32
    %c0_i32_1 = arith.constant 0 : i32
    return %arg0, %c0_i32, %arg1, %c0_i32_0 : i32, i32, i32, i32
  }
}

module attributes {stable_mosaic.version = 11 : i64} {
  func.func @_attn_kernel(%arg0: i32, %arg1: i32, %arg2: memref<1xi32, #tpu.memory_space<smem>>, %arg3: memref<1xi32, #tpu.memory_space<smem>>, %arg4: memref<1x4x8x8xbf16, #tpu.memory_space<vmem>>, %arg5: memref<1x4x8x8xbf16, #tpu.memory_space<vmem>>, %arg6: memref<1x4x8x8xbf16, #tpu.memory_space<vmem>>, %arg7: memref<1x4x8x8xbf16, #tpu.memory_space<vmem>>, %arg8: memref<1x8x32xbf16, #tpu.memory_space<vmem>>, %arg9: memref<4x8x1xf32, #tpu.memory_space<vmem>>, %arg10: memref<4x8x1xf32, #tpu.memory_space<vmem>>, %arg11: memref<4x8x8xf32, #tpu.memory_space<vmem>>) attributes {dimension_semantics = [#tpu.dimension_semantics<parallel>, #tpu.dimension_semantics<arbitrary>], iteration_bounds = array<i64: 2, 1>, scalar_prefetch = 2 : i64, scratch_operands = 3 : i64, tpu.core_type = #tpu.core_type<tc>, window_params = [{transform_indices = @transform_0, window_bounds = array<i64: 1, 4, 8, 8>}, {transform_indices = @transform_1, window_bounds = array<i64: 1, 4, 8, 8>}, {transform_indices = @transform_2, window_bounds = array<i64: 1, 4, 8, 8>}, {transform_indices = @transform_3, window_bounds = array<i64: 1, 4, 8, 8>}, {transform_indices = @transform_4, window_bounds = array<i64: 1, 8, 32>}]} {
    %0 = arith.index_cast %arg1 : i32 to index
    %1 = memref.load %arg2[%0] : memref<1xi32, #tpu.memory_space<smem>>
    %2 = arith.index_cast %arg1 : i32 to index
    %3 = memref.load %arg3[%2] : memref<1xi32, #tpu.memory_space<smem>>
    %c0_i32 = arith.constant 0 : i32
    %4 = arith.cmpi eq, %3, %c0_i32 : i32
    %5 = arith.extui %4 : i1 to i32
    %c0_i32_0 = arith.constant 0 : i32
    %6 = arith.cmpi ne, %5, %c0_i32_0 : i32
    scf.if %6 {
      %cst_42 = arith.constant -1.000000e+30 : f32
      %63 = vector.broadcast %cst_42 : f32 to vector<4x8x1xf32>
      %c0_43 = arith.constant 0 : index
      %c0_44 = arith.constant 0 : index
      %c0_45 = arith.constant 0 : index
      %64 = vector.load %arg9[%c0_43, %c0_44, %c0_45] : memref<4x8x1xf32, #tpu.memory_space<vmem>>, vector<4x8x1xf32>
      tpu.vector_store %arg9[%c0_43, %c0_44, %c0_45], %63 {strides = array<i32>} : memref<4x8x1xf32, #tpu.memory_space<vmem>>, vector<4x8x1xf32>,
      %cst_46 = arith.constant 0.000000e+00 : f32
      %65 = vector.broadcast %cst_46 : f32 to vector<4x8x1xf32>
      %c0_47 = arith.constant 0 : index
      %c0_48 = arith.constant 0 : index
      %c0_49 = arith.constant 0 : index
      %66 = vector.load %arg10[%c0_47, %c0_48, %c0_49] : memref<4x8x1xf32, #tpu.memory_space<vmem>>, vector<4x8x1xf32>
      tpu.vector_store %arg10[%c0_47, %c0_48, %c0_49], %65 {strides = array<i32>} : memref<4x8x1xf32, #tpu.memory_space<vmem>>, vector<4x8x1xf32>,
      %cst_50 = arith.constant 0.000000e+00 : f32
      %67 = vector.broadcast %cst_50 : f32 to vector<4x8x8xf32>
      %c0_51 = arith.constant 0 : index
      %c0_52 = arith.constant 0 : index
      %c0_53 = arith.constant 0 : index
      %68 = vector.load %arg11[%c0_51, %c0_52, %c0_53] : memref<4x8x8xf32, #tpu.memory_space<vmem>>, vector<4x8x8xf32>
      tpu.vector_store %arg11[%c0_51, %c0_52, %c0_53], %67 {strides = array<i32>} : memref<4x8x8xf32, #tpu.memory_space<vmem>>, vector<4x8x8xf32>,
    } else {
    }
    %c0 = arith.constant 0 : index
    %c0_1 = arith.constant 0 : index
    %c0_2 = arith.constant 0 : index
    %c0_3 = arith.constant 0 : index
    %7 = vector.load %arg4[%c0, %c0_1, %c0_2, %c0_3] : memref<1x4x8x8xbf16, #tpu.memory_space<vmem>>, vector<1x4x8x8xbf16>
    %8 = vector.shape_cast %7 : vector<1x4x8x8xbf16> to vector<4x8x8xbf16>
    %c0_4 = arith.constant 0 : index
    %c0_5 = arith.constant 0 : index
    %c0_6 = arith.constant 0 : index
    %c0_7 = arith.constant 0 : index
    %9 = vector.load %arg5[%c0_4, %c0_5, %c0_6, %c0_7] : memref<1x4x8x8xbf16, #tpu.memory_space<vmem>>, vector<1x4x8x8xbf16>
    %10 = vector.shape_cast %9 : vector<1x4x8x8xbf16> to vector<4x8x8xbf16>
    %c0_8 = arith.constant 0 : index
    %c0_9 = arith.constant 0 : index
    %c0_10 = arith.constant 0 : index
    %c0_11 = arith.constant 0 : index
    %11 = vector.load %arg6[%c0_8, %c0_9, %c0_10, %c0_11] : memref<1x4x8x8xbf16, #tpu.memory_space<vmem>>, vector<1x4x8x8xbf16>
    %12 = vector.shape_cast %11 : vector<1x4x8x8xbf16> to vector<4x8x8xbf16>
    "tpu.trace_start"() <{level = 10 : i32, message = "hqd,hkd->hqk"}> : () -> ()
    %cst = arith.constant dense<0.000000e+00> : vector<4x8x8xf32>
    %13 = tpu.matmul %8, %10, %cst {dimension_numbers = #tpu.dot_dimension_numbers<[2], [2], [1], [1], [0, 0, 0, 1, 1, 1], [0], [0]>} : vector<4x8x8xbf16>, vector<4x8x8xbf16>, vector<4x8x8xf32> -> vector<4x8x8xf32>
    "tpu.trace_stop"() : () -> ()
    %cst_12 = arith.constant 0.353553385 : f32
    %14 = vector.broadcast %cst_12 : f32 to vector<4x8x8xf32>
    %15 = arith.mulf %13, %14 : vector<4x8x8xf32>
    %c0_13 = arith.constant 0 : index
    %c0_14 = arith.constant 0 : index
    %c0_15 = arith.constant 0 : index
    %c0_16 = arith.constant 0 : index
    %16 = vector.load %arg7[%c0_13, %c0_14, %c0_15, %c0_16] : memref<1x4x8x8xbf16, #tpu.memory_space<vmem>>, vector<1x4x8x8xbf16>
    %17 = vector.shape_cast %16 : vector<1x4x8x8xbf16> to vector<4x8x8xbf16>
    %18 = arith.extf %17 : vector<4x8x8xbf16> to vector<4x8x8xf32>
    %19 = arith.addf %15, %18 : vector<4x8x8xf32>
    %c8_i32 = arith.constant 8 : i32
    %20 = arith.muli %1, %c8_i32 : i32
    %21 = tpu.iota {dimensions = array<i32: 0>} : vector<8x8xi32>
    %22 = vector.broadcast %20 : i32 to vector<8x8xi32>
    %23 = arith.addi %22, %21 : vector<8x8xi32>
    %c8_i32_17 = arith.constant 8 : i32
    %24 = arith.muli %3, %c8_i32_17 : i32
    %25 = tpu.iota {dimensions = array<i32: 1>} : vector<8x8xi32>
    %26 = vector.broadcast %24 : i32 to vector<8x8xi32>
    %27 = arith.addi %26, %25 : vector<8x8xi32>
    %c8_i32_18 = arith.constant 8 : i32
    %28 = vector.broadcast %c8_i32_18 : i32 to vector<8x8xi32>
    %29 = arith.cmpi sge, %27, %28 : vector<8x8xi32>
    %30 = arith.cmpi sgt, %27, %23 : vector<8x8xi32>
    %31 = arith.ori %29, %30 : vector<8x8xi1>
    %32 = vector.shape_cast %31 : vector<8x8xi1> to vector<1x8x8xi1>
    %cst_19 = arith.constant -1.000000e+30 : f32
    %33 = vector.shape_cast %32 : vector<1x8x8xi1> to vector<1x8x8xi1>
    %34 = vector.broadcast %33 : vector<1x8x8xi1> to vector<4x8x8xi1>
    %35 = vector.broadcast %cst_19 : f32 to vector<4x8x8xf32>
    %36 = arith.select %34, %35, %19 : vector<4x8x8xi1>, vector<4x8x8xf32>
    %c0_20 = arith.constant 0 : index
    %c0_21 = arith.constant 0 : index
    %c0_22 = arith.constant 0 : index
    %37 = vector.load %arg9[%c0_20, %c0_21, %c0_22] : memref<4x8x1xf32, #tpu.memory_space<vmem>>, vector<4x8x1xf32>
    %cst_23 = arith.constant dense<0xFF800000> : vector<4x8xf32>
    %38 = vector.multi_reduction <maximumf>, %36, %cst_23 [2] : vector<4x8x8xf32> to vector<4x8xf32>
    %39 = vector.shape_cast %38 : vector<4x8xf32> to vector<4x8x1xf32>
    %40 = arith.maximumf %37, %39 : vector<4x8x1xf32>
    %41 = arith.subf %37, %40 : vector<4x8x1xf32>
    %42 = math.exp %41 : vector<4x8x1xf32>
    %43 = vector.broadcast %40 : vector<4x8x1xf32> to vector<4x8x8xf32>
    %44 = arith.subf %36, %43 : vector<4x8x8xf32>
    %45 = math.exp %44 : vector<4x8x8xf32>
    %c0_24 = arith.constant 0 : index
    %c0_25 = arith.constant 0 : index
    %c0_26 = arith.constant 0 : index
    %46 = vector.load %arg10[%c0_24, %c0_25, %c0_26] : memref<4x8x1xf32, #tpu.memory_space<vmem>>, vector<4x8x1xf32>
    %47 = arith.mulf %42, %46 : vector<4x8x1xf32>
    %cst_27 = arith.constant dense<0.000000e+00> : vector<4x8xf32>
    %48 = vector.multi_reduction <add>, %45, %cst_27 [2] : vector<4x8x8xf32> to vector<4x8xf32>
    %49 = vector.shape_cast %48 : vector<4x8xf32> to vector<4x8x1xf32>
    %50 = arith.addf %47, %49 : vector<4x8x1xf32>
    %c0_28 = arith.constant 0 : index
    %c0_29 = arith.constant 0 : index
    %c0_30 = arith.constant 0 : index
    %51 = vector.load %arg10[%c0_28, %c0_29, %c0_30] : memref<4x8x1xf32, #tpu.memory_space<vmem>>, vector<4x8x1xf32>
    tpu.vector_store %arg10[%c0_28, %c0_29, %c0_30], %50 {strides = array<i32>} : memref<4x8x1xf32, #tpu.memory_space<vmem>>, vector<4x8x1xf32>,
    %c0_31 = arith.constant 0 : index
    %c0_32 = arith.constant 0 : index
    %c0_33 = arith.constant 0 : index
    %52 = vector.load %arg11[%c0_31, %c0_32, %c0_33] : memref<4x8x8xf32, #tpu.memory_space<vmem>>, vector<4x8x8xf32>
    %53 = vector.broadcast %42 : vector<4x8x1xf32> to vector<4x8x8xf32>
    %54 = arith.mulf %53, %52 : vector<4x8x8xf32>
    %55 = arith.truncf %45 : vector<4x8x8xf32> to vector<4x8x8xbf16>
    "tpu.trace_start"() <{level = 10 : i32, message = "hqk,hkd->hqd"}> : () -> ()
    %cst_34 = arith.constant dense<0.000000e+00> : vector<4x8x8xf32>
    %56 = tpu.matmul %55, %12, %cst_34 {dimension_numbers = #tpu.dot_dimension_numbers<[2], [1], [1], [2], [0, 0, 0, 1, 1, 2], [0], [0]>} : vector<4x8x8xbf16>, vector<4x8x8xbf16>, vector<4x8x8xf32> -> vector<4x8x8xf32>
    "tpu.trace_stop"() : () -> ()
    %57 = arith.addf %54, %56 : vector<4x8x8xf32>
    %c0_35 = arith.constant 0 : index
    %c0_36 = arith.constant 0 : index
    %c0_37 = arith.constant 0 : index
    %58 = vector.load %arg11[%c0_35, %c0_36, %c0_37] : memref<4x8x8xf32, #tpu.memory_space<vmem>>, vector<4x8x8xf32>
    tpu.vector_store %arg11[%c0_35, %c0_36, %c0_37], %57 {strides = array<i32>} : memref<4x8x8xf32, #tpu.memory_space<vmem>>, vector<4x8x8xf32>,
    %c0_38 = arith.constant 0 : index
    %c0_39 = arith.constant 0 : index
    %c0_40 = arith.constant 0 : index
    %59 = vector.load %arg9[%c0_38, %c0_39, %c0_40] : memref<4x8x1xf32, #tpu.memory_space<vmem>>, vector<4x8x1xf32>
    tpu.vector_store %arg9[%c0_38, %c0_39, %c0_40], %40 {strides = array<i32>} : memref<4x8x1xf32, #tpu.memory_space<vmem>>, vector<4x8x1xf32>,
    %60 = arith.cmpi eq, %3, %1 : i32
    %61 = arith.extui %60 : i1 to i32
    %c0_i32_41 = arith.constant 0 : i32
    %62 = arith.cmpi ne, %61, %c0_i32_41 : i32
    scf.if %62 {
      %c0_42 = arith.constant 0 : index
      %c0_43 = arith.constant 0 : index
      %c0_44 = arith.constant 0 : index
      %63 = vector.load %arg10[%c0_42, %c0_43, %c0_44] : memref<4x8x1xf32, #tpu.memory_space<vmem>>, vector<4x8x1xf32>
      %64 = tpu.reciprocal %63 {approx = true} : vector<4x8x1xf32> -> vector<4x8x1xf32>
      %c0_45 = arith.constant 0 : index
      %c0_46 = arith.constant 0 : index
      %c0_47 = arith.constant 0 : index
      %65 = vector.load %arg11[%c0_45, %c0_46, %c0_47] : memref<4x8x8xf32, #tpu.memory_space<vmem>>, vector<4x8x8xf32>
      %66 = vector.broadcast %64 : vector<4x8x1xf32> to vector<4x8x8xf32>
      %67 = arith.mulf %65, %66 : vector<4x8x8xf32>
      %68 = vector.extract_strided_slice %67 {offsets = [0, 0, 0], sizes = [1, 8, 8], strides = [1, 1, 1]} : vector<4x8x8xf32> to vector<1x8x8xf32>
      %69 = vector.shape_cast %68 : vector<1x8x8xf32> to vector<8x8xf32>
      %70 = vector.extract_strided_slice %67 {offsets = [1, 0, 0], sizes = [1, 8, 8], strides = [1, 1, 1]} : vector<4x8x8xf32> to vector<1x8x8xf32>
      %71 = vector.shape_cast %70 : vector<1x8x8xf32> to vector<8x8xf32>
      %72 = vector.extract_strided_slice %67 {offsets = [2, 0, 0], sizes = [1, 8, 8], strides = [1, 1, 1]} : vector<4x8x8xf32> to vector<1x8x8xf32>
      %73 = vector.shape_cast %72 : vector<1x8x8xf32> to vector<8x8xf32>
      %74 = vector.extract_strided_slice %67 {offsets = [3, 0, 0], sizes = [1, 8, 8], strides = [1, 1, 1]} : vector<4x8x8xf32> to vector<1x8x8xf32>
      %75 = vector.shape_cast %74 : vector<1x8x8xf32> to vector<8x8xf32>
      %76 = tpu.concatenate %69, %71, %73, %75 in 1 : vector<8x8xf32>, vector<8x8xf32>, vector<8x8xf32>, vector<8x8xf32> -> vector<8x32xf32>
      %77 = arith.truncf %76 : vector<8x32xf32> to vector<8x32xbf16>
      %c0_48 = arith.constant 0 : index
      %c0_49 = arith.constant 0 : index
      %c0_50 = arith.constant 0 : index
      %78 = vector.load %arg8[%c0_48, %c0_49, %c0_50] : memref<1x8x32xbf16, #tpu.memory_space<vmem>>, vector<1x8x32xbf16>
      %79 = vector.shape_cast %78 : vector<1x8x32xbf16> to vector<8x32xbf16>
      %80 = vector.shape_cast %77 : vector<8x32xbf16> to vector<1x8x32xbf16>
      tpu.vector_store %arg8[%c0_48, %c0_49, %c0_50], %80 {strides = array<i32>} : memref<1x8x32xbf16, #tpu.memory_space<vmem>>, vector<1x8x32xbf16>,
    } else {
    }
    return
  }
  func.func @transform_0(%arg0: i32, %arg1: i32, %arg2: memref<1xi32, #tpu.memory_space<smem>>, %arg3: memref<1xi32, #tpu.memory_space<smem>>) -> (i32, i32, i32, i32) {
    %0 = arith.index_cast %arg1 : i32 to index
    %1 = memref.load %arg2[%0] : memref<1xi32, #tpu.memory_space<smem>>
    %c0_i32 = arith.constant 0 : i32
    %c0_i32_0 = arith.constant 0 : i32
    %c0_i32_1 = arith.constant 0 : i32
    return %arg0, %c0_i32, %1, %c0_i32_0 : i32, i32, i32, i32
  }
  func.func @transform_1(%arg0: i32, %arg1: i32, %arg2: memref<1xi32, #tpu.memory_space<smem>>, %arg3: memref<1xi32, #tpu.memory_space<smem>>) -> (i32, i32, i32, i32) {
    %0 = arith.index_cast %arg1 : i32 to index
    %1 = memref.load %arg3[%0] : memref<1xi32, #tpu.memory_space<smem>>
    %c0_i32 = arith.constant 0 : i32
    %c0_i32_0 = arith.constant 0 : i32
    %c0_i32_1 = arith.constant 0 : i32
    return %arg0, %c0_i32, %1, %c0_i32_0 : i32, i32, i32, i32
  }
  func.func @transform_2(%arg0: i32, %arg1: i32, %arg2: memref<1xi32, #tpu.memory_space<smem>>, %arg3: memref<1xi32, #tpu.memory_space<smem>>) -> (i32, i32, i32, i32) {
    %0 = arith.index_cast %arg1 : i32 to index
    %1 = memref.load %arg3[%0] : memref<1xi32, #tpu.memory_space<smem>>
    %c0_i32 = arith.constant 0 : i32
    %c0_i32_0 = arith.constant 0 : i32
    %c0_i32_1 = arith.constant 0 : i32
    return %arg0, %c0_i32, %1, %c0_i32_0 : i32, i32, i32, i32
  }
  func.func @transform_3(%arg0: i32, %arg1: i32, %arg2: memref<1xi32, #tpu.memory_space<smem>>, %arg3: memref<1xi32, #tpu.memory_space<smem>>) -> (i32, i32, i32, i32) {
    %0 = arith.index_cast %arg1 : i32 to index
    %1 = memref.load %arg2[%0] : memref<1xi32, #tpu.memory_space<smem>>
    %2 = arith.index_cast %arg1 : i32 to index
    %3 = memref.load %arg3[%2] : memref<1xi32, #tpu.memory_space<smem>>
    %4 = arith.subi %1, %3 : i32
    %c1_i32 = arith.constant 1 : i32
    %5 = arith.addi %4, %c1_i32 : i32
    %c1_i32_0 = arith.constant 1 : i32
    %6 = arith.subi %5, %c1_i32_0 : i32
    %c0_i32 = arith.constant 0 : i32
    %c0_i32_1 = arith.constant 0 : i32
    %c0_i32_2 = arith.constant 0 : i32
    %c0_i32_3 = arith.constant 0 : i32
    return %6, %c0_i32, %c0_i32_1, %c0_i32_2 : i32, i32, i32, i32
  }
  func.func @transform_4(%arg0: i32, %arg1: i32, %arg2: memref<1xi32, #tpu.memory_space<smem>>, %arg3: memref<1xi32, #tpu.memory_space<smem>>) -> (i32, i32, i32) {
    %0 = arith.index_cast %arg1 : i32 to index
    %1 = memref.load %arg2[%0] : memref<1xi32, #tpu.memory_space<smem>>
    %c0_i32 = arith.constant 0 : i32
    %c0_i32_0 = arith.constant 0 : i32
    return %arg0, %1, %c0_i32 : i32, i32, i32
  }
}

module attributes {stable_mosaic.version = 11 : i64} {
  func.func @_out_res_ln_kernel(%arg0: i32, %arg1: memref<16x32xbf16, #tpu.memory_space<vmem>>, %arg2: memref<32x32xbf16, #tpu.memory_space<vmem>>, %arg3: memref<1x32xf32, #tpu.memory_space<vmem>>, %arg4: memref<16x32xf32, #tpu.memory_space<vmem>>, %arg5: memref<1x32xf32, #tpu.memory_space<vmem>>, %arg6: memref<1x32xf32, #tpu.memory_space<vmem>>, %arg7: memref<16x32xf32, #tpu.memory_space<vmem>>) attributes {dimension_semantics = [#tpu.dimension_semantics<parallel>], iteration_bounds = array<i64: 1>, scalar_prefetch = 0 : i64, scratch_operands = 0 : i64, tpu.core_type = #tpu.core_type<tc>, window_params = [{transform_indices = @transform_0, window_bounds = array<i64: 16, 32>}, {pipeline_mode = #tpu.pipeline_mode<synchronous>, transform_indices = @transform_1, window_bounds = array<i64: 32, 32>}, {pipeline_mode = #tpu.pipeline_mode<synchronous>, transform_indices = @transform_2, window_bounds = array<i64: 1, 32>}, {transform_indices = @transform_3, window_bounds = array<i64: 16, 32>}, {pipeline_mode = #tpu.pipeline_mode<synchronous>, transform_indices = @transform_4, window_bounds = array<i64: 1, 32>}, {pipeline_mode = #tpu.pipeline_mode<synchronous>, transform_indices = @transform_5, window_bounds = array<i64: 1, 32>}, {transform_indices = @transform_6, window_bounds = array<i64: 16, 32>}]} {
    %c0 = arith.constant 0 : index
    %c0_0 = arith.constant 0 : index
    %0 = vector.load %arg1[%c0, %c0_0] : memref<16x32xbf16, #tpu.memory_space<vmem>>, vector<16x32xbf16>
    %c0_1 = arith.constant 0 : index
    %c0_2 = arith.constant 0 : index
    %1 = vector.load %arg2[%c0_1, %c0_2] : memref<32x32xbf16, #tpu.memory_space<vmem>>, vector<32x32xbf16>
    %cst = arith.constant dense<0.000000e+00> : vector<16x32xf32>
    %2 = tpu.matmul %0, %1, %cst {dimension_numbers = #tpu.dot_dimension_numbers<[1], [0], [0], [1], [0, 0, 1, 1], [], []>} : vector<16x32xbf16>, vector<32x32xbf16>, vector<16x32xf32> -> vector<16x32xf32>
    %c0_3 = arith.constant 0 : index
    %c0_4 = arith.constant 0 : index
    %3 = vector.load %arg3[%c0_3, %c0_4] : memref<1x32xf32, #tpu.memory_space<vmem>>, vector<1x32xf32>
    %4 = vector.broadcast %3 : vector<1x32xf32> to vector<16x32xf32>
    %5 = arith.addf %2, %4 : vector<16x32xf32>
    %c0_5 = arith.constant 0 : index
    %c0_6 = arith.constant 0 : index
    %6 = vector.load %arg4[%c0_5, %c0_6] : memref<16x32xf32, #tpu.memory_space<vmem>>, vector<16x32xf32>
    %7 = arith.addf %5, %6 : vector<16x32xf32>
    %cst_7 = arith.constant dense<0.000000e+00> : vector<16xf32>
    %8 = vector.multi_reduction <add>, %7, %cst_7 [1] : vector<16x32xf32> to vector<16xf32>
    %9 = vector.shape_cast %8 : vector<16xf32> to vector<16x1xf32>
    %cst_8 = arith.constant 3.200000e+01 : f32
    %10 = vector.broadcast %cst_8 : f32 to vector<16x1xf32>
    %11 = arith.divf %9, %10 : vector<16x1xf32>
    %12 = vector.broadcast %11 : vector<16x1xf32> to vector<16x32xf32>
    %13 = arith.subf %7, %12 : vector<16x32xf32>
    %14 = arith.mulf %13, %13 : vector<16x32xf32>
    %cst_9 = arith.constant dense<0.000000e+00> : vector<16xf32>
    %15 = vector.multi_reduction <add>, %14, %cst_9 [1] : vector<16x32xf32> to vector<16xf32>
    %16 = vector.shape_cast %15 : vector<16xf32> to vector<16x1xf32>
    %cst_10 = arith.constant 3.200000e+01 : f32
    %17 = vector.broadcast %cst_10 : f32 to vector<16x1xf32>
    %18 = arith.divf %16, %17 : vector<16x1xf32>
    %cst_11 = arith.constant 9.99999974E-6 : f32
    %19 = vector.broadcast %cst_11 : f32 to vector<16x1xf32>
    %20 = arith.addf %18, %19 : vector<16x1xf32>
    %21 = math.rsqrt %20 : vector<16x1xf32>
    %22 = vector.broadcast %21 : vector<16x1xf32> to vector<16x32xf32>
    %23 = arith.mulf %13, %22 : vector<16x32xf32>
    %c0_12 = arith.constant 0 : index
    %c0_13 = arith.constant 0 : index
    %24 = vector.load %arg5[%c0_12, %c0_13] : memref<1x32xf32, #tpu.memory_space<vmem>>, vector<1x32xf32>
    %25 = vector.broadcast %24 : vector<1x32xf32> to vector<16x32xf32>
    %26 = arith.mulf %23, %25 : vector<16x32xf32>
    %c0_14 = arith.constant 0 : index
    %c0_15 = arith.constant 0 : index
    %27 = vector.load %arg6[%c0_14, %c0_15] : memref<1x32xf32, #tpu.memory_space<vmem>>, vector<1x32xf32>
    %28 = vector.broadcast %27 : vector<1x32xf32> to vector<16x32xf32>
    %29 = arith.addf %26, %28 : vector<16x32xf32>
    %c0_16 = arith.constant 0 : index
    %c0_17 = arith.constant 0 : index
    %30 = vector.load %arg7[%c0_16, %c0_17] : memref<16x32xf32, #tpu.memory_space<vmem>>, vector<16x32xf32>
    tpu.vector_store %arg7[%c0_16, %c0_17], %29 {strides = array<i32>} : memref<16x32xf32, #tpu.memory_space<vmem>>, vector<16x32xf32>,
    return
  }
  func.func @transform_0(%arg0: i32) -> (i32, i32) {
    %c0_i32 = arith.constant 0 : i32
    %c0_i32_0 = arith.constant 0 : i32
    return %arg0, %c0_i32 : i32, i32
  }
  func.func @transform_1(%arg0: i32) -> (i32, i32) {
    %c0_i32 = arith.constant 0 : i32
    %c0_i32_0 = arith.constant 0 : i32
    %c0_i32_1 = arith.constant 0 : i32
    return %c0_i32, %c0_i32_0 : i32, i32
  }
  func.func @transform_2(%arg0: i32) -> (i32, i32) {
    %c0_i32 = arith.constant 0 : i32
    %c0_i32_0 = arith.constant 0 : i32
    %c0_i32_1 = arith.constant 0 : i32
    return %c0_i32, %c0_i32_0 : i32, i32
  }
  func.func @transform_3(%arg0: i32) -> (i32, i32) {
    %c0_i32 = arith.constant 0 : i32
    %c0_i32_0 = arith.constant 0 : i32
    return %arg0, %c0_i32 : i32, i32
  }
  func.func @transform_4(%arg0: i32) -> (i32, i32) {
    %c0_i32 = arith.constant 0 : i32
    %c0_i32_0 = arith.constant 0 : i32
    %c0_i32_1 = arith.constant 0 : i32
    return %c0_i32, %c0_i32_0 : i32, i32
  }
  func.func @transform_5(%arg0: i32) -> (i32, i32) {
    %c0_i32 = arith.constant 0 : i32
    %c0_i32_0 = arith.constant 0 : i32
    %c0_i32_1 = arith.constant 0 : i32
    return %c0_i32, %c0_i32_0 : i32, i32
  }
  func.func @transform_6(%arg0: i32) -> (i32, i32) {
    %c0_i32 = arith.constant 0 : i32
    %c0_i32_0 = arith.constant 0 : i32
    return %arg0, %c0_i32 : i32, i32
  }
}

module attributes {stable_mosaic.version = 11 : i64} {
  func.func @_ffn_res_ln_kernel(%arg0: i32, %arg1: memref<16x32xf32, #tpu.memory_space<vmem>>, %arg2: memref<32x64xbf16, #tpu.memory_space<vmem>>, %arg3: memref<1x64xf32, #tpu.memory_space<vmem>>, %arg4: memref<64x32xbf16, #tpu.memory_space<vmem>>, %arg5: memref<1x32xf32, #tpu.memory_space<vmem>>, %arg6: memref<1x32xf32, #tpu.memory_space<vmem>>, %arg7: memref<1x32xf32, #tpu.memory_space<vmem>>, %arg8: memref<16x32xf32, #tpu.memory_space<vmem>>) attributes {dimension_semantics = [#tpu.dimension_semantics<parallel>], iteration_bounds = array<i64: 1>, scalar_prefetch = 0 : i64, scratch_operands = 0 : i64, tpu.core_type = #tpu.core_type<tc>, window_params = [{transform_indices = @transform_0, window_bounds = array<i64: 16, 32>}, {pipeline_mode = #tpu.pipeline_mode<synchronous>, transform_indices = @transform_1, window_bounds = array<i64: 32, 64>}, {pipeline_mode = #tpu.pipeline_mode<synchronous>, transform_indices = @transform_2, window_bounds = array<i64: 1, 64>}, {pipeline_mode = #tpu.pipeline_mode<synchronous>, transform_indices = @transform_3, window_bounds = array<i64: 64, 32>}, {pipeline_mode = #tpu.pipeline_mode<synchronous>, transform_indices = @transform_4, window_bounds = array<i64: 1, 32>}, {pipeline_mode = #tpu.pipeline_mode<synchronous>, transform_indices = @transform_5, window_bounds = array<i64: 1, 32>}, {pipeline_mode = #tpu.pipeline_mode<synchronous>, transform_indices = @transform_6, window_bounds = array<i64: 1, 32>}, {transform_indices = @transform_7, window_bounds = array<i64: 16, 32>}]} {
    %c0 = arith.constant 0 : index
    %c0_0 = arith.constant 0 : index
    %0 = vector.load %arg1[%c0, %c0_0] : memref<16x32xf32, #tpu.memory_space<vmem>>, vector<16x32xf32>
    %1 = arith.truncf %0 : vector<16x32xf32> to vector<16x32xbf16>
    %c0_1 = arith.constant 0 : index
    %c0_2 = arith.constant 0 : index
    %2 = vector.load %arg2[%c0_1, %c0_2] : memref<32x64xbf16, #tpu.memory_space<vmem>>, vector<32x64xbf16>
    %cst = arith.constant dense<0.000000e+00> : vector<16x64xf32>
    %3 = tpu.matmul %1, %2, %cst {dimension_numbers = #tpu.dot_dimension_numbers<[1], [0], [0], [1], [0, 0, 1, 1], [], []>} : vector<16x32xbf16>, vector<32x64xbf16>, vector<16x64xf32> -> vector<16x64xf32>
    %c0_3 = arith.constant 0 : index
    %c0_4 = arith.constant 0 : index
    %4 = vector.load %arg3[%c0_3, %c0_4] : memref<1x64xf32, #tpu.memory_space<vmem>>, vector<1x64xf32>
    %5 = vector.broadcast %4 : vector<1x64xf32> to vector<16x64xf32>
    %6 = arith.addf %3, %5 : vector<16x64xf32>
    %cst_5 = arith.constant 0.000000e+00 : f32
    %7 = vector.broadcast %cst_5 : f32 to vector<16x64xf32>
    %8 = arith.maximumf %6, %7 : vector<16x64xf32>
    %9 = arith.truncf %8 : vector<16x64xf32> to vector<16x64xbf16>
    %c0_6 = arith.constant 0 : index
    %c0_7 = arith.constant 0 : index
    %10 = vector.load %arg4[%c0_6, %c0_7] : memref<64x32xbf16, #tpu.memory_space<vmem>>, vector<64x32xbf16>
    %cst_8 = arith.constant dense<0.000000e+00> : vector<16x32xf32>
    %11 = tpu.matmul %9, %10, %cst_8 {dimension_numbers = #tpu.dot_dimension_numbers<[1], [0], [0], [1], [0, 0, 1, 1], [], []>} : vector<16x64xbf16>, vector<64x32xbf16>, vector<16x32xf32> -> vector<16x32xf32>
    %c0_9 = arith.constant 0 : index
    %c0_10 = arith.constant 0 : index
    %12 = vector.load %arg5[%c0_9, %c0_10] : memref<1x32xf32, #tpu.memory_space<vmem>>, vector<1x32xf32>
    %13 = vector.broadcast %12 : vector<1x32xf32> to vector<16x32xf32>
    %14 = arith.addf %11, %13 : vector<16x32xf32>
    %15 = arith.addf %14, %0 : vector<16x32xf32>
    %cst_11 = arith.constant dense<0.000000e+00> : vector<16xf32>
    %16 = vector.multi_reduction <add>, %15, %cst_11 [1] : vector<16x32xf32> to vector<16xf32>
    %17 = vector.shape_cast %16 : vector<16xf32> to vector<16x1xf32>
    %cst_12 = arith.constant 3.200000e+01 : f32
    %18 = vector.broadcast %cst_12 : f32 to vector<16x1xf32>
    %19 = arith.divf %17, %18 : vector<16x1xf32>
    %20 = vector.broadcast %19 : vector<16x1xf32> to vector<16x32xf32>
    %21 = arith.subf %15, %20 : vector<16x32xf32>
    %22 = arith.mulf %21, %21 : vector<16x32xf32>
    %cst_13 = arith.constant dense<0.000000e+00> : vector<16xf32>
    %23 = vector.multi_reduction <add>, %22, %cst_13 [1] : vector<16x32xf32> to vector<16xf32>
    %24 = vector.shape_cast %23 : vector<16xf32> to vector<16x1xf32>
    %cst_14 = arith.constant 3.200000e+01 : f32
    %25 = vector.broadcast %cst_14 : f32 to vector<16x1xf32>
    %26 = arith.divf %24, %25 : vector<16x1xf32>
    %cst_15 = arith.constant 9.99999974E-6 : f32
    %27 = vector.broadcast %cst_15 : f32 to vector<16x1xf32>
    %28 = arith.addf %26, %27 : vector<16x1xf32>
    %29 = math.rsqrt %28 : vector<16x1xf32>
    %30 = vector.broadcast %29 : vector<16x1xf32> to vector<16x32xf32>
    %31 = arith.mulf %21, %30 : vector<16x32xf32>
    %c0_16 = arith.constant 0 : index
    %c0_17 = arith.constant 0 : index
    %32 = vector.load %arg6[%c0_16, %c0_17] : memref<1x32xf32, #tpu.memory_space<vmem>>, vector<1x32xf32>
    %33 = vector.broadcast %32 : vector<1x32xf32> to vector<16x32xf32>
    %34 = arith.mulf %31, %33 : vector<16x32xf32>
    %c0_18 = arith.constant 0 : index
    %c0_19 = arith.constant 0 : index
    %35 = vector.load %arg7[%c0_18, %c0_19] : memref<1x32xf32, #tpu.memory_space<vmem>>, vector<1x32xf32>
    %36 = vector.broadcast %35 : vector<1x32xf32> to vector<16x32xf32>
    %37 = arith.addf %34, %36 : vector<16x32xf32>
    %c0_20 = arith.constant 0 : index
    %c0_21 = arith.constant 0 : index
    %38 = vector.load %arg8[%c0_20, %c0_21] : memref<16x32xf32, #tpu.memory_space<vmem>>, vector<16x32xf32>
    tpu.vector_store %arg8[%c0_20, %c0_21], %37 {strides = array<i32>} : memref<16x32xf32, #tpu.memory_space<vmem>>, vector<16x32xf32>,
    return
  }
  func.func @transform_0(%arg0: i32) -> (i32, i32) {
    %c0_i32 = arith.constant 0 : i32
    %c0_i32_0 = arith.constant 0 : i32
    return %arg0, %c0_i32 : i32, i32
  }
  func.func @transform_1(%arg0: i32) -> (i32, i32) {
    %c0_i32 = arith.constant 0 : i32
    %c0_i32_0 = arith.constant 0 : i32
    %c0_i32_1 = arith.constant 0 : i32
    return %c0_i32, %c0_i32_0 : i32, i32
  }
  func.func @transform_2(%arg0: i32) -> (i32, i32) {
    %c0_i32 = arith.constant 0 : i32
    %c0_i32_0 = arith.constant 0 : i32
    %c0_i32_1 = arith.constant 0 : i32
    return %c0_i32, %c0_i32_0 : i32, i32
  }
  func.func @transform_3(%arg0: i32) -> (i32, i32) {
    %c0_i32 = arith.constant 0 : i32
    %c0_i32_0 = arith.constant 0 : i32
    %c0_i32_1 = arith.constant 0 : i32
    return %c0_i32, %c0_i32_0 : i32, i32
  }
  func.func @transform_4(%arg0: i32) -> (i32, i32) {
    %c0_i32 = arith.constant 0 : i32
    %c0_i32_0 = arith.constant 0 : i32
    %c0_i32_1 = arith.constant 0 : i32
    return %c0_i32, %c0_i32_0 : i32, i32
  }
  func.func @transform_5(%arg0: i32) -> (i32, i32) {
    %c0_i32 = arith.constant 0 : i32
    %c0_i32_0 = arith.constant 0 : i32
    %c0_i32_1 = arith.constant 0 : i32
    return %c0_i32, %c0_i32_0 : i32, i32
  }
  func.func @transform_6(%arg0: i32) -> (i32, i32) {
    %c0_i32 = arith.constant 0 : i32
    %c0_i32_0 = arith.constant 0 : i32
    %c0_i32_1 = arith.constant 0 : i32
    return %c0_i32, %c0_i32_0 : i32, i32
  }
  func.func @transform_7(%arg0: i32) -> (i32, i32) {
    %c0_i32 = arith.constant 0 : i32
    %c0_i32_0 = arith.constant 0 : i32
    return %arg0, %c0_i32 : i32, i32
  }
}

module attributes {stable_mosaic.version = 11 : i64} {
  func.func @_ffn_res_ln_kernel(%arg0: i32, %arg1: memref<16x32xf32, #tpu.memory_space<vmem>>, %arg2: memref<32x64xbf16, #tpu.memory_space<vmem>>, %arg3: memref<1x64xf32, #tpu.memory_space<vmem>>, %arg4: memref<64x32xbf16, #tpu.memory_space<vmem>>, %arg5: memref<1x32xf32, #tpu.memory_space<vmem>>, %arg6: memref<1x32xf32, #tpu.memory_space<vmem>>, %arg7: memref<1x32xf32, #tpu.memory_space<vmem>>, %arg8: memref<16x32xf32, #tpu.memory_space<vmem>>) attributes {dimension_semantics = [#tpu.dimension_semantics<parallel>], iteration_bounds = array<i64: 1>, scalar_prefetch = 0 : i64, scratch_operands = 0 : i64, tpu.core_type = #tpu.core_type<tc>, window_params = [{transform_indices = @transform_0, window_bounds = array<i64: 16, 32>}, {pipeline_mode = #tpu.pipeline_mode<synchronous>, transform_indices = @transform_1, window_bounds = array<i64: 32, 64>}, {pipeline_mode = #tpu.pipeline_mode<synchronous>, transform_indices = @transform_2, window_bounds = array<i64: 1, 64>}, {pipeline_mode = #tpu.pipeline_mode<synchronous>, transform_indices = @transform_3, window_bounds = array<i64: 64, 32>}, {pipeline_mode = #tpu.pipeline_mode<synchronous>, transform_indices = @transform_4, window_bounds = array<i64: 1, 32>}, {pipeline_mode = #tpu.pipeline_mode<synchronous>, transform_indices = @transform_5, window_bounds = array<i64: 1, 32>}, {pipeline_mode = #tpu.pipeline_mode<synchronous>, transform_indices = @transform_6, window_bounds = array<i64: 1, 32>}, {transform_indices = @transform_7, window_bounds = array<i64: 16, 32>}]} {
    %c0 = arith.constant 0 : index
    %c0_0 = arith.constant 0 : index
    %0 = vector.load %arg1[%c0, %c0_0] : memref<16x32xf32, #tpu.memory_space<vmem>>, vector<16x32xf32>
    %1 = arith.truncf %0 : vector<16x32xf32> to vector<16x32xbf16>
    %c0_1 = arith.constant 0 : index
    %c0_2 = arith.constant 0 : index
    %2 = vector.load %arg2[%c0_1, %c0_2] : memref<32x64xbf16, #tpu.memory_space<vmem>>, vector<32x64xbf16>
    %cst = arith.constant dense<0.000000e+00> : vector<16x64xf32>
    %3 = tpu.matmul %1, %2, %cst {dimension_numbers = #tpu.dot_dimension_numbers<[1], [0], [0], [1], [0, 0, 1, 1], [], []>} : vector<16x32xbf16>, vector<32x64xbf16>, vector<16x64xf32> -> vector<16x64xf32>
    %c0_3 = arith.constant 0 : index
    %c0_4 = arith.constant 0 : index
    %4 = vector.load %arg3[%c0_3, %c0_4] : memref<1x64xf32, #tpu.memory_space<vmem>>, vector<1x64xf32>
    %5 = vector.broadcast %4 : vector<1x64xf32> to vector<16x64xf32>
    %6 = arith.addf %3, %5 : vector<16x64xf32>
    %cst_5 = arith.constant 0.000000e+00 : f32
    %7 = vector.broadcast %cst_5 : f32 to vector<16x64xf32>
    %8 = arith.maximumf %6, %7 : vector<16x64xf32>
    %9 = arith.truncf %8 : vector<16x64xf32> to vector<16x64xbf16>
    %c0_6 = arith.constant 0 : index
    %c0_7 = arith.constant 0 : index
    %10 = vector.load %arg4[%c0_6, %c0_7] : memref<64x32xbf16, #tpu.memory_space<vmem>>, vector<64x32xbf16>
    %cst_8 = arith.constant dense<0.000000e+00> : vector<16x32xf32>
    %11 = tpu.matmul %9, %10, %cst_8 {dimension_numbers = #tpu.dot_dimension_numbers<[1], [0], [0], [1], [0, 0, 1, 1], [], []>} : vector<16x64xbf16>, vector<64x32xbf16>, vector<16x32xf32> -> vector<16x32xf32>
    %c0_9 = arith.constant 0 : index
    %c0_10 = arith.constant 0 : index
    %12 = vector.load %arg5[%c0_9, %c0_10] : memref<1x32xf32, #tpu.memory_space<vmem>>, vector<1x32xf32>
    %13 = vector.broadcast %12 : vector<1x32xf32> to vector<16x32xf32>
    %14 = arith.addf %11, %13 : vector<16x32xf32>
    %15 = arith.addf %14, %0 : vector<16x32xf32>
    %cst_11 = arith.constant dense<0.000000e+00> : vector<16xf32>
    %16 = vector.multi_reduction <add>, %15, %cst_11 [1] : vector<16x32xf32> to vector<16xf32>
    %17 = vector.shape_cast %16 : vector<16xf32> to vector<16x1xf32>
    %cst_12 = arith.constant 3.200000e+01 : f32
    %18 = vector.broadcast %cst_12 : f32 to vector<16x1xf32>
    %19 = arith.divf %17, %18 : vector<16x1xf32>
    %20 = vector.broadcast %19 : vector<16x1xf32> to vector<16x32xf32>
    %21 = arith.subf %15, %20 : vector<16x32xf32>
    %22 = arith.mulf %21, %21 : vector<16x32xf32>
    %cst_13 = arith.constant dense<0.000000e+00> : vector<16xf32>
    %23 = vector.multi_reduction <add>, %22, %cst_13 [1] : vector<16x32xf32> to vector<16xf32>
    %24 = vector.shape_cast %23 : vector<16xf32> to vector<16x1xf32>
    %cst_14 = arith.constant 3.200000e+01 : f32
    %25 = vector.broadcast %cst_14 : f32 to vector<16x1xf32>
    %26 = arith.divf %24, %25 : vector<16x1xf32>
    %cst_15 = arith.constant 9.99999974E-6 : f32
    %27 = vector.broadcast %cst_15 : f32 to vector<16x1xf32>
    %28 = arith.addf %26, %27 : vector<16x1xf32>
    %29 = math.rsqrt %28 : vector<16x1xf32>
    %30 = vector.broadcast %29 : vector<16x1xf32> to vector<16x32xf32>
    %31 = arith.mulf %21, %30 : vector<16x32xf32>
    %c0_16 = arith.constant 0 : index
    %c0_17 = arith.constant 0 : index
    %32 = vector.load %arg6[%c0_16, %c0_17] : memref<1x32xf32, #tpu.memory_space<vmem>>, vector<1x32xf32>
    %33 = vector.broadcast %32 : vector<1x32xf32> to vector<16x32xf32>
    %34 = arith.mulf %31, %33 : vector<16x32xf32>
    %c0_18 = arith.constant 0 : index
    %c0_19 = arith.constant 0 : index
    %35 = vector.load %arg7[%c0_18, %c0_19] : memref<1x32xf32, #tpu.memory_space<vmem>>, vector<1x32xf32>
    %36 = vector.broadcast %35 : vector<1x32xf32> to vector<16x32xf32>
    %37 = arith.addf %34, %36 : vector<16x32xf32>
    %c0_20 = arith.constant 0 : index
    %c0_21 = arith.constant 0 : index
    %38 = vector.load %arg8[%c0_20, %c0_21] : memref<16x32xf32, #tpu.memory_space<vmem>>, vector<16x32xf32>
    tpu.vector_store %arg8[%c0_20, %c0_21], %37 {strides = array<i32>} : memref<16x32xf32, #tpu.memory_space<vmem>>, vector<16x32xf32>,
    return
  }
  func.func @transform_0(%arg0: i32) -> (i32, i32) {
    %c0_i32 = arith.constant 0 : i32
    %c0_i32_0 = arith.constant 0 : i32
    return %arg0, %c0_i32 : i32, i32
  }
  func.func @transform_1(%arg0: i32) -> (i32, i32) {
    %c0_i32 = arith.constant 0 : i32
    %c0_i32_0 = arith.constant 0 : i32
    %c0_i32_1 = arith.constant 0 : i32
    return %c0_i32, %c0_i32_0 : i32, i32
  }
  func.func @transform_2(%arg0: i32) -> (i32, i32) {
    %c0_i32 = arith.constant 0 : i32
    %c0_i32_0 = arith.constant 0 : i32
    %c0_i32_1 = arith.constant 0 : i32
    return %c0_i32, %c0_i32_0 : i32, i32
  }
  func.func @transform_3(%arg0: i32) -> (i32, i32) {
    %c0_i32 = arith.constant 0 : i32
    %c0_i32_0 = arith.constant 0 : i32
    %c0_i32_1 = arith.constant 0 : i32
    return %c0_i32, %c0_i32_0 : i32, i32
  }
  func.func @transform_4(%arg0: i32) -> (i32, i32) {
    %c0_i32 = arith.constant 0 : i32
    %c0_i32_0 = arith.constant 0 : i32
    %c0_i32_1 = arith.constant 0 : i32
    return %c0_i32, %c0_i32_0 : i32, i32
  }
  func.func @transform_5(%arg0: i32) -> (i32, i32) {
    %c0_i32 = arith.constant 0 : i32
    %c0_i32_0 = arith.constant 0 : i32
    %c0_i32_1 = arith.constant 0 : i32
    return %c0_i32, %c0_i32_0 : i32, i32
  }
  func.func @transform_6(%arg0: i32) -> (i32, i32) {
    %c0_i32 = arith.constant 0 : i32
    %c0_i32_0 = arith.constant 0 : i32
    %c0_i32_1 = arith.constant 0 : i32
    return %c0_i32, %c0_i32_0 : i32, i32
  }
  func.func @transform_7(%arg0: i32) -> (i32, i32) {
    %c0_i32 = arith.constant 0 : i32
    %c0_i32_0 = arith.constant 0 : i32
    return %arg0, %c0_i32 : i32, i32
  }
}

</mosaic_0001>

<llo_original>
// kernel: relative_transformer_decoder_forward.8
$region0: #{relative_transformer_decoder_forward.8}
  #allocation0 [shape = 'u32[]', space=smem, size = 0x4, offset = 0x4, fixed_abs, tag = 'smem constant byte address 0x4 - core index']
  #allocation1 [shape = 'u32[144,128]{1,0:T(1,128)}', space=vmem, size = 0x12000, scoped, tag = 'internal scratch']
  %s0 = inlined_call_operand.vmem [shape: f32[2,8,32], index: 0, kind: input, shape index: {}]
  %s1 = inlined_call_operand.vmem [shape: bf16[32,96], index: 1, kind: input, shape index: {}]
  %s2 = inlined_call_operand.vmem [shape: f32[1,96], index: 2, kind: input, shape index: {}]
  %s3 = inlined_call_operand.vmem [shape: bf16[2,4,8,8], index: 3, kind: output, shape index: {0}]
  %s4 = inlined_call_operand.vmem [shape: bf16[2,4,8,8], index: 4, kind: output, shape index: {1}]
  %s5 = inlined_call_operand.vmem [shape: bf16[2,4,8,8], index: 5, kind: output, shape index: {2}]
  %6 = xla_tuple %s3, %s4, %s5
  %s7 = sld [smem:[#allocation0]]
  $region61: #{relative_transformer_decoder_forward.8} parent=0
    _
  %s9 = ssub.s32 1, %s7
  %s10 = scalar_select 0, %s9, %s7
  loop: start=0, step=1, limit=4
  $region2: #{relative_transformer_decoder_forward.8} parent=0 // loop_pre_header
    _
  $region3: #{relative_transformer_decoder_forward.8} parent=0 // loop_header
    %s12 = sphi 0, %s16
    %p13 = scmp.ge.s32.totalorder %s12, 4
    %s19 = sphi 0, %s31
    %s20 = sphi 0, %s27
    %s21 = sphi 0, %s19
    %s22 = sphi 0, %s20
    %s23 = sphi 0, %s21
    %s24 = sphi 0, %s22
    %s36 = sphi 0, %s38
    %s39 = sphi 0, %s36
    %s40 = sphi 0, %s39
    %s56 = sphi 0, %s40
    %s60 = sphi 0, %s60
    %s62 = sphi 0, %s60
    %s63 = sphi 0, %s62
    %s77 = sphi 0, %s63
    %s81 = sphi 0, %s81
    %s83 = sphi 0, %s81
    %s84 = sphi 0, %s83
    %s98 = sphi 0, %s84
    %s106 = sphi 0, %s108
    %s109 = sphi 0, %s106
    %s110 = sphi 0, %s109
    %s126 = sphi 0, %s110
    %s134 = sphi 0, %s136
    %s137 = sphi 0, %s134
    %s138 = sphi 0, %s137
    %s154 = sphi 0, %s138
    %s162 = sphi 0, %s164
    %s165 = sphi 0, %s162
    %s166 = sphi 0, %s165
    %s182 = sphi 0, %s166
  $region4: #{relative_transformer_decoder_forward.8} parent=0 // loop_header_branch
    %15 = sbr.rel (%p13) target = $region8
  $region5: #{relative_transformer_decoder_forward.8} parent=0 // loop_body
    %s17 = ssub.s32 %s12, 1
    %s18 = ssub.s32 %s12, 2
    %s25 = sadd.s32 1, %s20
    %p26 = scmp.ge.s32.totalorder %s25, 1
    %s27 = scalar_select %p26, 0, %s25
    %s28 = sadd.s32 1, %s19
    %s29 = scalar_select %p26, %s28, %s19
    %p30 = scmp.ge.s32.totalorder %s29, 2
    %s31 = scalar_select %p30, 0, %s29
    %s32 = ssub.s32 %s19, %s31
    %s33 = ssub.s32 %s20, %s27
    %s34 = sor.u32 %s32, %s33
    %p35 = scmp.eq.s32.totalorder %s34, 0
    %s37 = sadd.s32 %s36, 1
    %s38 = scalar_select %p35, %s36, %s37
    %p41 = pneg %p35
    %p42 = scmp.eq.s32.totalorder %s12, 1
    %p43 = por %p41, %p42
    %p44 = scmp.ne.s32.totalorder %s36, %s39
    %p45 = scmp.eq.s32.totalorder %s12, 0
    %p46 = por %p44, %p45
    %p47 = scmp.ne.s32.totalorder %s36, %s39
    %p48 = scmp.eq.s32.totalorder %s17, 1
    %p49 = por %p47, %p48
    %p50 = scmp.ne.s32.totalorder %s39, %s40
    %p51 = scmp.eq.s32.totalorder %s17, 0
    %p52 = por %p50, %p51
    %p53 = scmp.ne.s32.totalorder %s39, %s40
    %p54 = scmp.eq.s32.totalorder %s18, 1
    %p55 = por %p53, %p54
    %p57 = scmp.ne.s32.totalorder %s40, %s56
    %p58 = scmp.eq.s32.totalorder %s18, 0
    %p59 = por %p57, %p58
    %s61 = sadd.s32 %s60, 1
    %p64 = scmp.eq.s32.totalorder %s12, 1
    %p65 = scmp.ne.s32.totalorder %s60, %s62
    %p66 = scmp.eq.s32.totalorder %s12, 0
    %p67 = por %p65, %p66
    %p68 = scmp.ne.s32.totalorder %s60, %s62
    %p69 = scmp.eq.s32.totalorder %s17, 1
    %p70 = por %p68, %p69
    %p71 = scmp.ne.s32.totalorder %s62, %s63
    %p72 = scmp.eq.s32.totalorder %s17, 0
    %p73 = por %p71, %p72
    %p74 = scmp.ne.s32.totalorder %s62, %s63
    %p75 = scmp.eq.s32.totalorder %s18, 1
    %p76 = por %p74, %p75
    %p78 = scmp.ne.s32.totalorder %s63, %s77
    %p79 = scmp.eq.s32.totalorder %s18, 0
    %p80 = por %p78, %p79
    %s82 = sadd.s32 %s81, 1
    %p85 = scmp.eq.s32.totalorder %s12, 1
    %p86 = scmp.ne.s32.totalorder %s81, %s83
    %p87 = scmp.eq.s32.totalorder %s12, 0
    %p88 = por %p86, %p87
    %p89 = scmp.ne.s32.totalorder %s81, %s83
    %p90 = scmp.eq.s32.totalorder %s17, 1
    %p91 = por %p89, %p90
    %p92 = scmp.ne.s32.totalorder %s83, %s84
    %p93 = scmp.eq.s32.totalorder %s17, 0
    %p94 = por %p92, %p93
    %p95 = scmp.ne.s32.totalorder %s83, %s84
    %p96 = scmp.eq.s32.totalorder %s18, 1
    %p97 = por %p95, %p96
    %p99 = scmp.ne.s32.totalorder %s84, %s98
    %p100 = scmp.eq.s32.totalorder %s18, 0
    %p101 = por %p99, %p100
    %s102 = ssub.s32 %s19, %s31
    %s103 = ssub.s32 %s20, %s27
    %s104 = sor.u32 %s102, %s103
    %p105 = scmp.eq.s32.totalorder %s104, 0
    %s107 = sadd.s32 %s106, 1
    %s108 = scalar_select %p105, %s106, %s107
    %p111 = pneg %p105
    %p112 = scmp.eq.s32.totalorder %s12, 1
    %p113 = por %p111, %p112
    %p114 = scmp.ne.s32.totalorder %s106, %s109
    %p115 = scmp.eq.s32.totalorder %s12, 0
    %p116 = por %p114, %p115
    %p117 = scmp.ne.s32.totalorder %s106, %s109
    %p118 = scmp.eq.s32.totalorder %s17, 1
    %p119 = por %p117, %p118
    %p120 = scmp.ne.s32.totalorder %s109, %s110
    %p121 = scmp.eq.s32.totalorder %s17, 0
    %p122 = por %p120, %p121
    %p123 = scmp.ne.s32.totalorder %s109, %s110
    %p124 = scmp.eq.s32.totalorder %s18, 1
    %p125 = por %p123, %p124
    %p127 = scmp.ne.s32.totalorder %s110, %s126
    %p128 = scmp.eq.s32.totalorder %s18, 0
    %p129 = por %p127, %p128
    %s130 = ssub.s32 %s19, %s31
    %s131 = ssub.s32 %s20, %s27
    %s132 = sor.u32 %s130, %s131
    %p133 = scmp.eq.s32.totalorder %s132, 0
    %s135 = sadd.s32 %s134, 1
    %s136 = scalar_select %p133, %s134, %s135
    %p139 = pneg %p133
    %p140 = scmp.eq.s32.totalorder %s12, 1
    %p141 = por %p139, %p140
    %p142 = scmp.ne.s32.totalorder %s134, %s137
    %p143 = scmp.eq.s32.totalorder %s12, 0
    %p144 = por %p142, %p143
    %p145 = scmp.ne.s32.totalorder %s134, %s137
    %p146 = scmp.eq.s32.totalorder %s17, 1
    %p147 = por %p145, %p146
    %p148 = scmp.ne.s32.totalorder %s137, %s138
    %p149 = scmp.eq.s32.totalorder %s17, 0
    %p150 = por %p148, %p149
    %p151 = scmp.ne.s32.totalorder %s137, %s138
    %p152 = scmp.eq.s32.totalorder %s18, 1
    %p153 = por %p151, %p152
    %p155 = scmp.ne.s32.totalorder %s138, %s154
    %p156 = scmp.eq.s32.totalorder %s18, 0
    %p157 = por %p155, %p156
    %s158 = ssub.s32 %s19, %s31
    %s159 = ssub.s32 %s20, %s27
    %s160 = sor.u32 %s158, %s159
    %p161 = scmp.eq.s32.totalorder %s160, 0
    %s163 = sadd.s32 %s162, 1
    %s164 = scalar_select %p161, %s162, %s163
    %p167 = pneg %p161
    %p168 = scmp.eq.s32.totalorder %s12, 1
    %p169 = por %p167, %p168
    %p170 = scmp.ne.s32.totalorder %s162, %s165
    %p171 = scmp.eq.s32.totalorder %s12, 0
    %p172 = por %p170, %p171
    %p173 = scmp.ne.s32.totalorder %s162, %s165
    %p174 = scmp.eq.s32.totalorder %s17, 1
    %p175 = por %p173, %p174
    %p176 = scmp.ne.s32.totalorder %s165, %s166
    %p177 = scmp.eq.s32.totalorder %s17, 0
    %p178 = por %p176, %p177
    %p179 = scmp.ne.s32.totalorder %s165, %s166
    %p180 = scmp.eq.s32.totalorder %s18, 1
    %p181 = por %p179, %p180
    %p183 = scmp.ne.s32.totalorder %s166, %s182
    %p184 = scmp.eq.s32.totalorder %s18, 0
    %p185 = por %p183, %p184
    %p186 = scmp.le.s32.totalorder 1, %s12
    %p187 = scmp.lt.s32.totalorder %s12, 3
    %p188 = pnand %p186, %p187
    %p189 = pneg %p188
    // Predicated region
    $region9: #{relative_transformer_decoder_forward.8} parent=5 // pred_check
      _
    $region10: #{relative_transformer_decoder_forward.8} parent=5 // pred_check_branch
      %191 = sbr.rel (%p188) target = $region12
    $region11: #{relative_transformer_decoder_forward.8} parent=5 // pred_region
      %s192 = ssub.s32 %s12, 1
      // Predicated region
      $region13: #{relative_transformer_decoder_forward.8} parent=11 // pred_check
        %p193 = pneg %p73
      $region14: #{relative_transformer_decoder_forward.8} parent=11 // pred_check_branch
        %195 = sbr.rel (%p193) target = $region16
      $region15: #{relative_transformer_decoder_forward.8} parent=11 // pred_region
        _
      $region16: #{relative_transformer_decoder_forward.8} parent=11 // pred_fallthru
        _
      // Predicated region
      $region17: #{relative_transformer_decoder_forward.8} parent=11 // pred_check
        %p196 = pneg %p94
      $region18: #{relative_transformer_decoder_forward.8} parent=11 // pred_check_branch
        %198 = sbr.rel (%p196) target = $region20
      $region19: #{relative_transformer_decoder_forward.8} parent=11 // pred_region
        _
      $region20: #{relative_transformer_decoder_forward.8} parent=11 // pred_fallthru
        _
    $region12: #{relative_transformer_decoder_forward.8} parent=5 // pred_fallthru
      _
    %p199 = scmp.lt.s32.totalorder %s12, 2
    // Predicated region
    $region21: #{relative_transformer_decoder_forward.8} parent=5 // pred_check
      %p200 = pneg %p199
    $region22: #{relative_transformer_decoder_forward.8} parent=5 // pred_check_branch
      %202 = sbr.rel (%p200) target = $region24
    $region23: #{relative_transformer_decoder_forward.8} parent=5 // pred_region
      // Predicated region
      $region25: #{relative_transformer_decoder_forward.8} parent=23 // pred_check
        %p203 = pneg %p46
      $region26: #{relative_transformer_decoder_forward.8} parent=23 // pred_check_branch
        %205 = sbr.rel (%p203) target = $region28
      $region27: #{relative_transformer_decoder_forward.8} parent=23 // pred_region
        %p206 = scmp.lt.s32.totalorder %s19, 1
        %s207 = scalar_select %p206, %s19, 1
        %p208 = scmp.lt.s32.totalorder %s20, 0
        %s209 = scalar_select %p208, %s20, 0
        %s210 = sadd.s32 %s209, %s207
        %s211 = smul.addr %s210, 8
        %s212 = scalar_lea.vmem %s0, %s211
      $region28: #{relative_transformer_decoder_forward.8} parent=23 // pred_fallthru
        _
    $region24: #{relative_transformer_decoder_forward.8} parent=5 // pred_fallthru
      _
    %p213 = scmp.le.s32.totalorder 1, %s12
    %p214 = scmp.lt.s32.totalorder %s12, 3
    %p215 = pnand %p213, %p214
    %p216 = pneg %p215
    // Predicated region
    $region29: #{relative_transformer_decoder_forward.8} parent=5 // pred_check
      _
    $region30: #{relative_transformer_decoder_forward.8} parent=5 // pred_check_branch
      %218 = sbr.rel (%p215) target = $region32
    $region31: #{relative_transformer_decoder_forward.8} parent=5 // pred_region
      %s219 = ssub.s32 %s12, 1
      %p220 = scmp.lt.s32.totalorder %s21, 1
      %s221 = scalar_select %p220, %s21, 1
      %p222 = scmp.lt.s32.totalorder %s22, 0
      %s223 = scalar_select %p222, %s22, 0
      %s224 = sadd.s32 %s223, %s221
      %s225 = smul.addr %s224, 8
      %s226 = scalar_lea.vmem %s0, %s225
      %p227 = pneg %p52
      %p228 = pneg %p49
      %p229 = pneg %p73
      %p230 = pneg %p70
      %p231 = pneg %p94
      %p232 = pneg %p91
      %p233 = pneg %p122
      %p234 = pneg %p119
      %p235 = scmp.lt.s32.totalorder %s21, 1
      %s236 = scalar_select %p235, %s21, 1
      %p237 = scmp.lt.s32.totalorder %s22, 0
      %s238 = scalar_select %p237, %s22, 0
      %s239 = smul.addr %s236, 4
      %s240 = sadd.s32 %s238, %s239
      %s241 = smul.addr %s240, 4
      %s242 = scalar_lea.vmem %s3, %s241
      %p243 = pneg %p150
      %p244 = pneg %p147
      %p245 = scmp.lt.s32.totalorder %s21, 1
      %s246 = scalar_select %p245, %s21, 1
      %p247 = scmp.lt.s32.totalorder %s22, 0
      %s248 = scalar_select %p247, %s22, 0
      %s249 = smul.addr %s246, 4
      %s250 = sadd.s32 %s248, %s249
      %s251 = smul.addr %s250, 4
      %s252 = scalar_lea.vmem %s4, %s251
      %p253 = pneg %p178
      %p254 = pneg %p175
      %p255 = scmp.lt.s32.totalorder %s21, 1
      %s256 = scalar_select %p255, %s21, 1
      %p257 = scmp.lt.s32.totalorder %s22, 0
      %s258 = scalar_select %p257, %s22, 0
      %s259 = smul.addr %s256, 4
      %s260 = sadd.s32 %s258, %s259
      %s261 = smul.addr %s260, 4
      %s262 = scalar_lea.vmem %s5, %s261
      %p263 = scmp.lt.s32.totalorder %s21, 1
      %s264 = scalar_select %p263, %s21, 1
      %p265 = scmp.lt.s32.totalorder %s22, 0
      %s266 = scalar_select %p265, %s22, 0
      %s267 = sadd.s32 %s266, %s264
      %s268 = smul.addr %s267, 8
      %s269 = scalar_lea.vmem %s0, %s268
      %p270 = scmp.lt.s32.totalorder %s21, 1
      %s271 = scalar_select %p270, %s21, 1
      %p272 = scmp.lt.s32.totalorder %s22, 0
      %s273 = scalar_select %p272, %s22, 0
      %s274 = smul.addr %s271, 4
      %s275 = sadd.s32 %s273, %s274
      %s276 = smul.addr %s275, 4
      %s277 = scalar_lea.vmem %s3, %s276
      %p278 = scmp.lt.s32.totalorder %s21, 1
      %s279 = scalar_select %p278, %s21, 1
      %p280 = scmp.lt.s32.totalorder %s22, 0
      %s281 = scalar_select %p280, %s22, 0
      %s282 = smul.addr %s279, 4
      %s283 = sadd.s32 %s281, %s282
      %s284 = smul.addr %s283, 4
      %s285 = scalar_lea.vmem %s4, %s284
      %p286 = scmp.lt.s32.totalorder %s21, 1
      %s287 = scalar_select %p286, %s21, 1
      %p288 = scmp.lt.s32.totalorder %s22, 0
      %s289 = scalar_select %p288, %s22, 0
      %s290 = smul.addr %s287, 4
      %s291 = sadd.s32 %s289, %s290
      %s292 = smul.addr %s291, 4
      %s293 = scalar_lea.vmem %s5, %s292
      %v295 = vld [vmem:[%s269] sm:$0xff]
      %v296 = vpack.c.bf16 %v295, %v295
      %v297 = vld [vmem:[%s1] sm:$0xf]
      %v298 = vld [vmem:[%s1 + $0x4] sm:$0xf]
      %v299 = vld [vmem:[%s1 + $0x8] sm:$0xf]
      %v300 = vld [vmem:[%s1 + $0xc] sm:$0xf]
      %v301 = vld [vmem:[%s2] sm:$0x1]
      %v303 = vlaneseq
      %v304 = vshrl.u32 %v303, 7
      %v305 = vsub.s32 0, %v304
      %v306 = vrot.slane %v301, %v305
      %v312 = vunpack.c.l.b16 %v297
      %v313 = vunpack.c.l.b16 %v298
      %v314 = vunpack.c.l.b16 %v299
      %v315 = vunpack.c.l.b16 %v300
      %v316 = vpack.c.b16 %v313, %v312
      %v317 = vpack.c.b16 %v315, %v314
      %vm320 = vcmask 261120
      %v322 = vsel %vm320, %v296, 0
      %324 = vmatprep.subr.bf16.mxu0 0
      %325 = vmatpush1.bf16.msra.mxu0 %v316
      %326 = vmatprep.subr.bf16.mxu0 0
      %327 = vmatpush1.bf16.msra.mxu0 %v317
      %328 = vmatprep.subr.bf16.mxu0 0
      %329 = vmatpush1.bf16.msra.mxu0 0
      %330 = vmatprep.subr.bf16.mxu0 0
      %331 = vmatpush1.bf16.msra.mxu0 0
      %332 = vmatprep.subr.bf16.mxu0 0
      %333 = vmatpush1.bf16.msra.mxu0 0
      %334 = vmatprep.subr.bf16.mxu0 0
      %335 = vmatpush1.bf16.msra.mxu0 0
      %336 = vmatprep.subr.bf16.mxu0 0
      %337 = vmatpush1.bf16.msra.mxu0 0
      %338 = vmatprep.subr.bf16.mxu0 0
      %339 = vmatpush1.bf16.msra.mxu0 0
      %340 = vmatprep.subr.bf16.mxu0 0
      %341 = vmatpush1.bf16.msra.mxu0 0
      %342 = vmatprep.subr.bf16.mxu0 0
      %343 = vmatpush1.bf16.msra.mxu0 0
      %344 = vmatprep.subr.bf16.mxu0 0
      %345 = vmatpush1.bf16.msra.mxu0 0
      %346 = vmatprep.subr.bf16.mxu0 0
      %347 = vmatpush1.bf16.msra.mxu0 0
      %348 = vmatprep.subr.bf16.mxu0 0
      %349 = vmatpush1.bf16.msra.mxu0 0
      %350 = vmatprep.subr.bf16.mxu0 0
      %351 = vmatpush1.bf16.msra.mxu0 0
      %352 = vmatprep.subr.bf16.mxu0 0
      %353 = vmatpush1.bf16.msra.mxu0 0
      %354 = vmatprep.subr.bf16.mxu0 0
      %355 = vmatpush1.bf16.msra.mxu0 0
      %356 = vmatprep.mubr.bf16.mxu0 0
      %357 = vmatmul.mubr.bf16.gmra.mrb[0].mxu0 %v322
      %v358 = vpop.f32.mrb[0].mxu0
      %v359 = vadd.f32 %v306, %v358
      %v360 = vpop.f32.mrb[0].mxu0
      %v361 = vpop.f32.mrb[0].mxu0
      %v362 = vpop.f32.mrb[0].mxu0
      %363 = vdwg.mxu0
      %v364 = vpack.c.bf16 %v359, %v359
      %vm365 = vcmask 60416
      %366 = vst.msk [vmem:[%s277] sm:$0xf] %vm365, %v364
      %v368 = vunpack.c.l.b16 %v364
      %v369 = vpack.c.b16 %v368, %v368
      %370 = vrot.lane.b32.xlu0 %v369, 120
      %v371 = vpop.permute.xlu0 %370
      %s373 = scalar_lea.vmem %s277, 4
      %374 = vst.msk [vmem:[%s373] sm:$0xf] %vm365, %v371
      %375 = vrot.lane.b32.xlu0 %v369, 112
      %v376 = vpop.permute.xlu0 %375
      %s378 = scalar_lea.vmem %s277, 8
      %379 = vst.msk [vmem:[%s378] sm:$0xf] %vm365, %v376
      %380 = vrot.lane.b32.xlu0 %v369, 104
      %v381 = vpop.permute.xlu0 %380
      %s383 = scalar_lea.vmem %s277, 12
      %384 = vst.msk [vmem:[%s383] sm:$0xf] %vm365, %v381
      %385 = vrot.lane.b32.xlu0 %v369, 96
      %v386 = vpop.permute.xlu0 %385
      %388 = vst.msk [vmem:[%s285] sm:$0xf] %vm365, %v386
      %389 = vrot.lane.b32.xlu0 %v369, 88
      %v390 = vpop.permute.xlu0 %389
      %s392 = scalar_lea.vmem %s285, 4
      %393 = vst.msk [vmem:[%s392] sm:$0xf] %vm365, %v390
      %394 = vrot.lane.b32.xlu0 %v369, 80
      %v395 = vpop.permute.xlu0 %394
      %s397 = scalar_lea.vmem %s285, 8
      %398 = vst.msk [vmem:[%s397] sm:$0xf] %vm365, %v395
      %399 = vrot.lane.b32.xlu0 %v369, 72
      %v400 = vpop.permute.xlu0 %399
      %s402 = scalar_lea.vmem %s285, 12
      %403 = vst.msk [vmem:[%s402] sm:$0xf] %vm365, %v400
      %404 = vrot.lane.b32.xlu0 %v369, 64
      %v405 = vpop.permute.xlu0 %404
      %407 = vst.msk [vmem:[%s293] sm:$0xf] %vm365, %v405
      %408 = vrot.lane.b32.xlu0 %v369, 56
      %v409 = vpop.permute.xlu0 %408
      %s411 = scalar_lea.vmem %s293, 4
      %412 = vst.msk [vmem:[%s411] sm:$0xf] %vm365, %v409
      %413 = vrot.lane.b32.xlu0 %v369, 48
      %v414 = vpop.permute.xlu0 %413
      %s416 = scalar_lea.vmem %s293, 8
      %417 = vst.msk [vmem:[%s416] sm:$0xf] %vm365, %v414
      %418 = vrot.lane.b32.xlu0 %v369, 40
      %v419 = vpop.permute.xlu0 %418
      %s421 = scalar_lea.vmem %s293, 12
      %422 = vst.msk [vmem:[%s421] sm:$0xf] %vm365, %v419
      %p423 = scmp.lt.s32.totalorder %s21, 1
      %s424 = scalar_select %p423, %s21, 1
      %p425 = scmp.lt.s32.totalorder %s22, 0
      %s426 = scalar_select %p425, %s22, 0
      %s427 = smul.addr %s424, 4
      %s428 = sadd.s32 %s426, %s427
      %s429 = smul.addr %s428, 4
      %s430 = scalar_lea.vmem %s3, %s429
      %p431 = scmp.lt.s32.totalorder %s21, 1
      %s432 = scalar_select %p431, %s21, 1
      %p433 = scmp.lt.s32.totalorder %s22, 0
      %s434 = scalar_select %p433, %s22, 0
      %s435 = smul.addr %s432, 4
      %s436 = sadd.s32 %s434, %s435
      %s437 = smul.addr %s436, 4
      %s438 = scalar_lea.vmem %s4, %s437
      %p439 = scmp.lt.s32.totalorder %s21, 1
      %s440 = scalar_select %p439, %s21, 1
      %p441 = scmp.lt.s32.totalorder %s22, 0
      %s442 = scalar_select %p441, %s22, 0
      %s443 = smul.addr %s440, 4
      %s444 = sadd.s32 %s442, %s443
      %s445 = smul.addr %s444, 4
      %s446 = scalar_lea.vmem %s5, %s445
      // Predicated region
      $region33: #{relative_transformer_decoder_forward.8} parent=31 // pred_check
        %p447 = pneg %p119
      $region34: #{relative_transformer_decoder_forward.8} parent=31 // pred_check_branch
        %449 = sbr.rel (%p447) target = $region36
      $region35: #{relative_transformer_decoder_forward.8} parent=31 // pred_region
        _
      $region36: #{relative_transformer_decoder_forward.8} parent=31 // pred_fallthru
        _
      // Predicated region
      $region37: #{relative_transformer_decoder_forward.8} parent=31 // pred_check
        %p450 = pneg %p147
      $region38: #{relative_transformer_decoder_forward.8} parent=31 // pred_check_branch
        %452 = sbr.rel (%p450) target = $region40
      $region39: #{relative_transformer_decoder_forward.8} parent=31 // pred_region
        _
      $region40: #{relative_transformer_decoder_forward.8} parent=31 // pred_fallthru
        _
      // Predicated region
      $region41: #{relative_transformer_decoder_forward.8} parent=31 // pred_check
        %p453 = pneg %p175
      $region42: #{relative_transformer_decoder_forward.8} parent=31 // pred_check_branch
        %455 = sbr.rel (%p453) target = $region44
      $region43: #{relative_transformer_decoder_forward.8} parent=31 // pred_region
        _
      $region44: #{relative_transformer_decoder_forward.8} parent=31 // pred_fallthru
        _
    $region32: #{relative_transformer_decoder_forward.8} parent=5 // pred_fallthru
      _
    %p456 = scmp.le.s32.totalorder 2, %s12
    // Predicated region
    $region45: #{relative_transformer_decoder_forward.8} parent=5 // pred_check
      %p457 = pneg %p456
    $region46: #{relative_transformer_decoder_forward.8} parent=5 // pred_check_branch
      %459 = sbr.rel (%p457) target = $region48
    $region47: #{relative_transformer_decoder_forward.8} parent=5 // pred_region
      %s460 = ssub.s32 %s12, 2
      // Predicated region
      $region49: #{relative_transformer_decoder_forward.8} parent=47 // pred_check
        %p461 = pneg %p125
      $region50: #{relative_transformer_decoder_forward.8} parent=47 // pred_check_branch
        %463 = sbr.rel (%p461) target = $region52
      $region51: #{relative_transformer_decoder_forward.8} parent=47 // pred_region
        %p464 = scmp.lt.s32.totalorder %s23, 1
        %s465 = scalar_select %p464, %s23, 1
        %p466 = scmp.lt.s32.totalorder %s24, 0
        %s467 = scalar_select %p466, %s24, 0
        %s468 = smul.addr %s465, 4
        %s469 = sadd.s32 %s467, %s468
        %s470 = smul.addr %s469, 4
        %s471 = scalar_lea.vmem %s3, %s470
      $region52: #{relative_transformer_decoder_forward.8} parent=47 // pred_fallthru
        _
      // Predicated region
      $region53: #{relative_transformer_decoder_forward.8} parent=47 // pred_check
        %p472 = pneg %p153
      $region54: #{relative_transformer_decoder_forward.8} parent=47 // pred_check_branch
        %474 = sbr.rel (%p472) target = $region56
      $region55: #{relative_transformer_decoder_forward.8} parent=47 // pred_region
        %p475 = scmp.lt.s32.totalorder %s23, 1
        %s476 = scalar_select %p475, %s23, 1
        %p477 = scmp.lt.s32.totalorder %s24, 0
        %s478 = scalar_select %p477, %s24, 0
        %s479 = smul.addr %s476, 4
        %s480 = sadd.s32 %s478, %s479
        %s481 = smul.addr %s480, 4
        %s482 = scalar_lea.vmem %s4, %s481
      $region56: #{relative_transformer_decoder_forward.8} parent=47 // pred_fallthru
        _
      // Predicated region
      $region57: #{relative_transformer_decoder_forward.8} parent=47 // pred_check
        %p483 = pneg %p181
      $region58: #{relative_transformer_decoder_forward.8} parent=47 // pred_check_branch
        %485 = sbr.rel (%p483) target = $region60
      $region59: #{relative_transformer_decoder_forward.8} parent=47 // pred_region
        %p486 = scmp.lt.s32.totalorder %s23, 1
        %s487 = scalar_select %p486, %s23, 1
        %p488 = scmp.lt.s32.totalorder %s24, 0
        %s489 = scalar_select %p488, %s24, 0
        %s490 = smul.addr %s487, 4
        %s491 = sadd.s32 %s489, %s490
        %s492 = smul.addr %s491, 4
        %s493 = scalar_lea.vmem %s5, %s492
      $region60: #{relative_transformer_decoder_forward.8} parent=47 // pred_fallthru
        _
    $region48: #{relative_transformer_decoder_forward.8} parent=5 // pred_fallthru
      _
  $region6: #{relative_transformer_decoder_forward.8} parent=0 // loop_footer
    %s16 = sadd.s32 1, %s12
  $region7: #{relative_transformer_decoder_forward.8} parent=0 // loop_footer_branch
    %11 = sbr.rel target = $region3
  $region8: #{relative_transformer_decoder_forward.8} parent=0 // loop_exit
    _

// kernel: relative_transformer_decoder_forward.10
$region0: #{relative_transformer_decoder_forward.10}
  #allocation0 [shape = 'u32[]', space=smem, size = 0x4, offset = 0x4, fixed_abs, tag = 'smem constant byte address 0x4 - core index']
  #allocation1 [shape = 'u32[144,128]{1,0:T(1,128)}', space=vmem, size = 0x12000, scoped, tag = 'internal scratch']
  %s0 = inlined_call_operand.vmem [shape: bf16[16,32], index: 0, kind: input, shape index: {}]
  %s1 = inlined_call_operand.vmem [shape: bf16[32,32], index: 1, kind: input, shape index: {}]
  %s2 = inlined_call_operand.vmem [shape: f32[1,32], index: 2, kind: input, shape index: {}]
  %s3 = inlined_call_operand.vmem [shape: f32[16,32], index: 3, kind: input, shape index: {}]
  %s4 = inlined_call_operand.vmem [shape: f32[1,32], index: 4, kind: input, shape index: {}]
  %s5 = inlined_call_operand.vmem [shape: f32[1,32], index: 5, kind: input, shape index: {}]
  %s6 = inlined_call_operand.vmem [shape: f32[16,32], index: 6, kind: output, shape index: {}]
  %s7 = sld [smem:[#allocation0]]
  $region34: #{relative_transformer_decoder_forward.10} parent=0
    _
  %s9 = ssub.s32 1, %s7
  %s10 = scalar_select 0, %s9, %s7
  // Predicated region
  $region2: #{relative_transformer_decoder_forward.10} parent=0 // pred_check
    _
  $region3: #{relative_transformer_decoder_forward.10} parent=0 // pred_check_branch
    %12 = sbr.rel (0) target = $region5
  $region4: #{relative_transformer_decoder_forward.10} parent=0 // pred_region
    _
  $region5: #{relative_transformer_decoder_forward.10} parent=0 // pred_fallthru
    _
  // Predicated region
  $region6: #{relative_transformer_decoder_forward.10} parent=0 // pred_check
    _
  $region7: #{relative_transformer_decoder_forward.10} parent=0 // pred_check_branch
    %14 = sbr.rel (0) target = $region9
  $region8: #{relative_transformer_decoder_forward.10} parent=0 // pred_region
    _
  $region9: #{relative_transformer_decoder_forward.10} parent=0 // pred_fallthru
    _
  // Predicated region
  $region10: #{relative_transformer_decoder_forward.10} parent=0 // pred_check
    _
  $region11: #{relative_transformer_decoder_forward.10} parent=0 // pred_check_branch
    %16 = sbr.rel (0) target = $region13
  $region12: #{relative_transformer_decoder_forward.10} parent=0 // pred_region
    _
  $region13: #{relative_transformer_decoder_forward.10} parent=0 // pred_fallthru
    _
  // Predicated region
  $region14: #{relative_transformer_decoder_forward.10} parent=0 // pred_check
    _
  $region15: #{relative_transformer_decoder_forward.10} parent=0 // pred_check_branch
    %18 = sbr.rel (0) target = $region17
  $region16: #{relative_transformer_decoder_forward.10} parent=0 // pred_region
    _
  $region17: #{relative_transformer_decoder_forward.10} parent=0 // pred_fallthru
    _
  // Predicated region
  $region18: #{relative_transformer_decoder_forward.10} parent=0 // pred_check
    _
  $region19: #{relative_transformer_decoder_forward.10} parent=0 // pred_check_branch
    %20 = sbr.rel (0) target = $region21
  $region20: #{relative_transformer_decoder_forward.10} parent=0 // pred_region
    _
  $region21: #{relative_transformer_decoder_forward.10} parent=0 // pred_fallthru
    _
  // Predicated region
  $region22: #{relative_transformer_decoder_forward.10} parent=0 // pred_check
    _
  $region23: #{relative_transformer_decoder_forward.10} parent=0 // pred_check_branch
    %22 = sbr.rel (0) target = $region25
  $region24: #{relative_transformer_decoder_forward.10} parent=0 // pred_region
    _
  $region25: #{relative_transformer_decoder_forward.10} parent=0 // pred_fallthru
    _
  %v24 = vld [vmem:[%s0] sm:$0xf]
  %v25 = vld [vmem:[%s0 + $0x4] sm:$0xf]
  %v26 = vld [vmem:[%s1] sm:$0xf]
  %v27 = vld [vmem:[%s1 + $0x4] sm:$0xf]
  %v28 = vld [vmem:[%s1 + $0x8] sm:$0xf]
  %v29 = vld [vmem:[%s1 + $0xc] sm:$0xf]
  %v30 = vld [vmem:[%s2] sm:$0x1]
  %v32 = vlaneseq
  %v33 = vshrl.u32 %v32, 7
  %v34 = vsub.s32 0, %v33
  %v35 = vrot.slane %v30, %v34
  %v39 = vunpack.c.l.b16 %v24
  %v40 = vunpack.c.l.b16 %v25
  %v41 = vpack.c.b16 %v40, %v39
  %v46 = vunpack.c.l.b16 %v26
  %v47 = vunpack.c.l.b16 %v27
  %v48 = vunpack.c.l.b16 %v28
  %v49 = vunpack.c.l.b16 %v29
  %v50 = vpack.c.b16 %v47, %v46
  %v51 = vpack.c.b16 %v49, %v48
  %vm54 = vcmask 261120
  %v56 = vsel %vm54, %v41, 0
  %58 = vmatprep.subr.bf16.mxu0 0
  %59 = vmatpush1.bf16.msra.mxu0 %v50
  %60 = vmatprep.subr.bf16.mxu0 0
  %61 = vmatpush1.bf16.msra.mxu0 %v51
  %62 = vmatprep.subr.bf16.mxu0 0
  %63 = vmatpush1.bf16.msra.mxu0 0
  %64 = vmatprep.subr.bf16.mxu0 0
  %65 = vmatpush1.bf16.msra.mxu0 0
  %66 = vmatprep.subr.bf16.mxu0 0
  %67 = vmatpush1.bf16.msra.mxu0 0
  %68 = vmatprep.subr.bf16.mxu0 0
  %69 = vmatpush1.bf16.msra.mxu0 0
  %70 = vmatprep.subr.bf16.mxu0 0
  %71 = vmatpush1.bf16.msra.mxu0 0
  %72 = vmatprep.subr.bf16.mxu0 0
  %73 = vmatpush1.bf16.msra.mxu0 0
  %74 = vmatprep.subr.bf16.mxu0 0
  %75 = vmatpush1.bf16.msra.mxu0 0
  %76 = vmatprep.subr.bf16.mxu0 0
  %77 = vmatpush1.bf16.msra.mxu0 0
  %78 = vmatprep.subr.bf16.mxu0 0
  %79 = vmatpush1.bf16.msra.mxu0 0
  %80 = vmatprep.subr.bf16.mxu0 0
  %81 = vmatpush1.bf16.msra.mxu0 0
  %82 = vmatprep.subr.bf16.mxu0 0
  %83 = vmatpush1.bf16.msra.mxu0 0
  %84 = vmatprep.subr.bf16.mxu0 0
  %85 = vmatpush1.bf16.msra.mxu0 0
  %86 = vmatprep.subr.bf16.mxu0 0
  %87 = vmatpush1.bf16.msra.mxu0 0
  %88 = vmatprep.subr.bf16.mxu0 0
  %89 = vmatpush1.bf16.msra.mxu0 0
  %90 = vmatprep.mubr.bf16.mxu0 0
  %91 = vmatmul.mubr.bf16.gmra.mrb[0].mxu0 %v56
  %v92 = vpop.f32.mrb[0].mxu0
  %v93 = vadd.f32 %v35, %v92
  %v94 = vpop.f32.mrb[0].mxu0
  %v95 = vpop.f32.mrb[0].mxu0
  %v96 = vadd.f32 %v35, %v95
  %v97 = vpop.f32.mrb[0].mxu0
  %98 = vdwg.mxu0
  %v99 = vld [vmem:[%s3] sm:$0xff]
  %v100 = vld [vmem:[%s3 + $0x8] sm:$0xff]
  %v101 = vadd.f32 %v93, %v99
  %v102 = vadd.f32 %v96, %v100
  %v103 = vsel %vm54, %v101, 0.0
  %104 = vadd.xlane.f32.xlu0 %v103
  %v105 = vpop.xlane.xlu0 %104
  %v106 = vsel %vm54, %v102, 0.0
  %107 = vadd.xlane.f32.xlu0 %v106
  %v108 = vpop.xlane.xlu0 %107
  %v109 = vrcp.pop 32.0
  %v110 = vmul.f32 %v105, %v109
  %v111 = vmul.f32 %v108, %v109
  %v112 = vsub.f32 %v101, %v110
  %v113 = vsub.f32 %v102, %v111
  %v114 = vmul.f32 %v112, %v112
  %v115 = vmul.f32 %v113, %v113
  %v116 = vsel %vm54, %v114, 0.0
  %117 = vadd.xlane.f32.xlu0 %v116
  %v118 = vpop.xlane.xlu0 %117
  %v119 = vsel %vm54, %v115, 0.0
  %120 = vadd.xlane.f32.xlu0 %v119
  %v121 = vpop.xlane.xlu0 %120
  %v122 = vmul.f32 %v118, %v109
  %v123 = vmul.f32 %v121, %v109
  %v124 = vadd.f32 %v122, 1e-05
  %v125 = vadd.f32 %v123, 1e-05
  %v126 = vrsqrt.pop %v124
  %v127 = vrsqrt.pop %v125
  %v128 = vmul.f32 %v112, %v126
  %v129 = vmul.f32 %v113, %v127
  %v130 = vld [vmem:[%s4] sm:$0x1]
  %v132 = vlaneseq
  %v133 = vshrl.u32 %v132, 7
  %v134 = vsub.s32 0, %v133
  %v135 = vrot.slane %v130, %v134
  %v137 = vmul.f32 %v128, %v135
  %v138 = vmul.f32 %v129, %v135
  %v139 = vld [vmem:[%s5] sm:$0x1]
  %v141 = vlaneseq
  %v142 = vshrl.u32 %v141, 7
  %v143 = vsub.s32 0, %v142
  %v144 = vrot.slane %v139, %v143
  %v146 = vadd.f32 %v137, %v144
  %v147 = vadd.f32 %v138, %v144
  %148 = vst.msk [vmem:[%s6] sm:$0xff] %vm54, %v146
  %149 = vst.msk [vmem:[%s6 + $0x8] sm:$0xff] %vm54, %v147
  // Predicated region
  $region26: #{relative_transformer_decoder_forward.10} parent=0 // pred_check
    _
  $region27: #{relative_transformer_decoder_forward.10} parent=0 // pred_check_branch
    %151 = sbr.rel (0) target = $region29
  $region28: #{relative_transformer_decoder_forward.10} parent=0 // pred_region
    _
  $region29: #{relative_transformer_decoder_forward.10} parent=0 // pred_fallthru
    _
  // Predicated region
  $region30: #{relative_transformer_decoder_forward.10} parent=0 // pred_check
    _
  $region31: #{relative_transformer_decoder_forward.10} parent=0 // pred_check_branch
    %153 = sbr.rel (0) target = $region33
  $region32: #{relative_transformer_decoder_forward.10} parent=0 // pred_region
    _
  $region33: #{relative_transformer_decoder_forward.10} parent=0 // pred_fallthru
    _

// kernel: relative_transformer_decoder_forward.11
$region0: #{relative_transformer_decoder_forward.11}
  #allocation0 [shape = 'u32[]', space=smem, size = 0x4, offset = 0x4, fixed_abs, tag = 'smem constant byte address 0x4 - core index']
  #allocation1 [shape = 'u32[144,128]{1,0:T(1,128)}', space=vmem, size = 0x12000, scoped, tag = 'internal scratch']
  %s0 = inlined_call_operand.vmem [shape: f32[16,32], index: 0, kind: input, shape index: {}]
  %s1 = inlined_call_operand.vmem [shape: bf16[32,64], index: 1, kind: input, shape index: {}]
  %s2 = inlined_call_operand.vmem [shape: f32[1,64], index: 2, kind: input, shape index: {}]
  %s3 = inlined_call_operand.vmem [shape: bf16[64,32], index: 3, kind: input, shape index: {}]
  %s4 = inlined_call_operand.vmem [shape: f32[1,32], index: 4, kind: input, shape index: {}]
  %s5 = inlined_call_operand.vmem [shape: f32[1,32], index: 5, kind: input, shape index: {}]
  %s6 = inlined_call_operand.vmem [shape: f32[1,32], index: 6, kind: input, shape index: {}]
  %s7 = inlined_call_operand.vmem [shape: f32[16,32], index: 7, kind: output, shape index: {}]
  %s8 = sld [smem:[#allocation0]]
  $region38: #{relative_transformer_decoder_forward.11} parent=0
    _
  %s10 = ssub.s32 1, %s8
  %s11 = scalar_select 0, %s10, %s8
  // Predicated region
  $region2: #{relative_transformer_decoder_forward.11} parent=0 // pred_check
    _
  $region3: #{relative_transformer_decoder_forward.11} parent=0 // pred_check_branch
    %13 = sbr.rel (0) target = $region5
  $region4: #{relative_transformer_decoder_forward.11} parent=0 // pred_region
    _
  $region5: #{relative_transformer_decoder_forward.11} parent=0 // pred_fallthru
    _
  // Predicated region
  $region6: #{relative_transformer_decoder_forward.11} parent=0 // pred_check
    _
  $region7: #{relative_transformer_decoder_forward.11} parent=0 // pred_check_branch
    %15 = sbr.rel (0) target = $region9
  $region8: #{relative_transformer_decoder_forward.11} parent=0 // pred_region
    _
  $region9: #{relative_transformer_decoder_forward.11} parent=0 // pred_fallthru
    _
  // Predicated region
  $region10: #{relative_transformer_decoder_forward.11} parent=0 // pred_check
    _
  $region11: #{relative_transformer_decoder_forward.11} parent=0 // pred_check_branch
    %17 = sbr.rel (0) target = $region13
  $region12: #{relative_transformer_decoder_forward.11} parent=0 // pred_region
    _
  $region13: #{relative_transformer_decoder_forward.11} parent=0 // pred_fallthru
    _
  // Predicated region
  $region14: #{relative_transformer_decoder_forward.11} parent=0 // pred_check
    _
  $region15: #{relative_transformer_decoder_forward.11} parent=0 // pred_check_branch
    %19 = sbr.rel (0) target = $region17
  $region16: #{relative_transformer_decoder_forward.11} parent=0 // pred_region
    _
  $region17: #{relative_transformer_decoder_forward.11} parent=0 // pred_fallthru
    _
  // Predicated region
  $region18: #{relative_transformer_decoder_forward.11} parent=0 // pred_check
    _
  $region19: #{relative_transformer_decoder_forward.11} parent=0 // pred_check_branch
    %21 = sbr.rel (0) target = $region21
  $region20: #{relative_transformer_decoder_forward.11} parent=0 // pred_region
    _
  $region21: #{relative_transformer_decoder_forward.11} parent=0 // pred_fallthru
    _
  // Predicated region
  $region22: #{relative_transformer_decoder_forward.11} parent=0 // pred_check
    _
  $region23: #{relative_transformer_decoder_forward.11} parent=0 // pred_check_branch
    %23 = sbr.rel (0) target = $region25
  $region24: #{relative_transformer_decoder_forward.11} parent=0 // pred_region
    _
  $region25: #{relative_transformer_decoder_forward.11} parent=0 // pred_fallthru
    _
  // Predicated region
  $region26: #{relative_transformer_decoder_forward.11} parent=0 // pred_check
    _
  $region27: #{relative_transformer_decoder_forward.11} parent=0 // pred_check_branch
    %25 = sbr.rel (0) target = $region29
  $region28: #{relative_transformer_decoder_forward.11} parent=0 // pred_region
    _
  $region29: #{relative_transformer_decoder_forward.11} parent=0 // pred_fallthru
    _
  %v27 = vld [vmem:[%s0] sm:$0xff]
  %v28 = vld [vmem:[%s0 + $0x8] sm:$0xff]
  %v29 = vpack.c.bf16 %v28, %v27
  %v30 = vld [vmem:[%s1] sm:$0xf]
  %v31 = vld [vmem:[%s1 + $0x4] sm:$0xf]
  %v32 = vld [vmem:[%s1 + $0x8] sm:$0xf]
  %v33 = vld [vmem:[%s1 + $0xc] sm:$0xf]
  %v34 = vld [vmem:[%s2] sm:$0x1]
  %v36 = vlaneseq
  %v37 = vshrl.u32 %v36, 7
  %v38 = vsub.s32 0, %v37
  %v39 = vrot.slane %v34, %v38
  %v45 = vunpack.c.l.b16 %v30
  %v46 = vunpack.c.l.b16 %v31
  %v47 = vunpack.c.l.b16 %v32
  %v48 = vunpack.c.l.b16 %v33
  %v49 = vpack.c.b16 %v46, %v45
  %v50 = vpack.c.b16 %v48, %v47
  %vm53 = vcmask 261120
  %v55 = vsel %vm53, %v29, 0
  %57 = vmatprep.subr.bf16.mxu0 0
  %58 = vmatpush1.bf16.msra.mxu0 %v49
  %59 = vmatprep.subr.bf16.mxu0 0
  %60 = vmatpush1.bf16.msra.mxu0 %v50
  %61 = vmatprep.subr.bf16.mxu0 0
  %62 = vmatpush1.bf16.msra.mxu0 0
  %63 = vmatprep.subr.bf16.mxu0 0
  %64 = vmatpush1.bf16.msra.mxu0 0
  %65 = vmatprep.subr.bf16.mxu0 0
  %66 = vmatpush1.bf16.msra.mxu0 0
  %67 = vmatprep.subr.bf16.mxu0 0
  %68 = vmatpush1.bf16.msra.mxu0 0
  %69 = vmatprep.subr.bf16.mxu0 0
  %70 = vmatpush1.bf16.msra.mxu0 0
  %71 = vmatprep.subr.bf16.mxu0 0
  %72 = vmatpush1.bf16.msra.mxu0 0
  %73 = vmatprep.subr.bf16.mxu0 0
  %74 = vmatpush1.bf16.msra.mxu0 0
  %75 = vmatprep.subr.bf16.mxu0 0
  %76 = vmatpush1.bf16.msra.mxu0 0
  %77 = vmatprep.subr.bf16.mxu0 0
  %78 = vmatpush1.bf16.msra.mxu0 0
  %79 = vmatprep.subr.bf16.mxu0 0
  %80 = vmatpush1.bf16.msra.mxu0 0
  %81 = vmatprep.subr.bf16.mxu0 0
  %82 = vmatpush1.bf16.msra.mxu0 0
  %83 = vmatprep.subr.bf16.mxu0 0
  %84 = vmatpush1.bf16.msra.mxu0 0
  %85 = vmatprep.subr.bf16.mxu0 0
  %86 = vmatpush1.bf16.msra.mxu0 0
  %87 = vmatprep.subr.bf16.mxu0 0
  %88 = vmatpush1.bf16.msra.mxu0 0
  %89 = vmatprep.mubr.bf16.mxu0 0
  %90 = vmatmul.mubr.bf16.gmra.mrb[0].mxu0 %v55
  %v91 = vpop.f32.mrb[0].mxu0
  %v92 = vadd.f32 %v39, %v91
  %v93 = vpop.f32.mrb[0].mxu0
  %v94 = vpop.f32.mrb[0].mxu0
  %v95 = vadd.f32 %v39, %v94
  %v96 = vpop.f32.mrb[0].mxu0
  %97 = vdwg.mxu0
  %v98 = vmax.f32 %v92, 0.0
  %v99 = vmax.f32 %v95, 0.0
  %v100 = vpack.c.bf16 %v99, %v98
  %v101 = vld [vmem:[%s3] sm:$0xf]
  %v102 = vld [vmem:[%s3 + $0x4] sm:$0xf]
  %v103 = vld [vmem:[%s3 + $0x8] sm:$0xf]
  %v104 = vld [vmem:[%s3 + $0xc] sm:$0xf]
  %v105 = vld [vmem:[%s3 + $0x10] sm:$0xf]
  %v106 = vld [vmem:[%s3 + $0x14] sm:$0xf]
  %v107 = vld [vmem:[%s3 + $0x18] sm:$0xf]
  %v108 = vld [vmem:[%s3 + $0x1c] sm:$0xf]
  %v109 = vld [vmem:[%s4] sm:$0x1]
  %v111 = vlaneseq
  %v112 = vshrl.u32 %v111, 7
  %v113 = vsub.s32 0, %v112
  %v114 = vrot.slane %v109, %v113
  %v124 = vunpack.c.l.b16 %v101
  %v125 = vunpack.c.l.b16 %v102
  %v126 = vunpack.c.l.b16 %v103
  %v127 = vunpack.c.l.b16 %v104
  %v128 = vunpack.c.l.b16 %v105
  %v129 = vunpack.c.l.b16 %v106
  %v130 = vunpack.c.l.b16 %v107
  %v131 = vunpack.c.l.b16 %v108
  %v132 = vpack.c.b16 %v125, %v124
  %v133 = vpack.c.b16 %v127, %v126
  %v134 = vpack.c.b16 %v129, %v128
  %v135 = vpack.c.b16 %v131, %v130
  %vm140 = vcmask 523264
  %v142 = vsel %vm140, %v100, 0
  %144 = vmatprep.subr.bf16.mxu0 0
  %145 = vmatpush1.bf16.msra.mxu0 %v132
  %146 = vmatprep.subr.bf16.mxu0 0
  %147 = vmatpush1.bf16.msra.mxu0 %v133
  %148 = vmatprep.subr.bf16.mxu0 0
  %149 = vmatpush1.bf16.msra.mxu0 %v134
  %150 = vmatprep.subr.bf16.mxu0 0
  %151 = vmatpush1.bf16.msra.mxu0 %v135
  %152 = vmatprep.subr.bf16.mxu0 0
  %153 = vmatpush1.bf16.msra.mxu0 0
  %154 = vmatprep.subr.bf16.mxu0 0
  %155 = vmatpush1.bf16.msra.mxu0 0
  %156 = vmatprep.subr.bf16.mxu0 0
  %157 = vmatpush1.bf16.msra.mxu0 0
  %158 = vmatprep.subr.bf16.mxu0 0
  %159 = vmatpush1.bf16.msra.mxu0 0
  %160 = vmatprep.subr.bf16.mxu0 0
  %161 = vmatpush1.bf16.msra.mxu0 0
  %162 = vmatprep.subr.bf16.mxu0 0
  %163 = vmatpush1.bf16.msra.mxu0 0
  %164 = vmatprep.subr.bf16.mxu0 0
  %165 = vmatpush1.bf16.msra.mxu0 0
  %166 = vmatprep.subr.bf16.mxu0 0
  %167 = vmatpush1.bf16.msra.mxu0 0
  %168 = vmatprep.subr.bf16.mxu0 0
  %169 = vmatpush1.bf16.msra.mxu0 0
  %170 = vmatprep.subr.bf16.mxu0 0
  %171 = vmatpush1.bf16.msra.mxu0 0
  %172 = vmatprep.subr.bf16.mxu0 0
  %173 = vmatpush1.bf16.msra.mxu0 0
  %174 = vmatprep.subr.bf16.mxu0 0
  %175 = vmatpush1.bf16.msra.mxu0 0
  %176 = vmatprep.mubr.bf16.mxu0 0
  %177 = vmatmul.mubr.bf16.gmra.mrb[0].mxu0 %v142
  %v178 = vpop.f32.mrb[0].mxu0
  %v179 = vadd.f32 %v114, %v178
  %v180 = vpop.f32.mrb[0].mxu0
  %v181 = vpop.f32.mrb[0].mxu0
  %v182 = vadd.f32 %v114, %v181
  %v183 = vpop.f32.mrb[0].mxu0
  %184 = vdwg.mxu0
  %v185 = vadd.f32 %v179, %v27
  %v186 = vadd.f32 %v182, %v28
  %v187 = vsel %vm53, %v185, 0.0
  %188 = vadd.xlane.f32.xlu0 %v187
  %v189 = vpop.xlane.xlu0 %188
  %v190 = vsel %vm53, %v186, 0.0
  %191 = vadd.xlane.f32.xlu0 %v190
  %v192 = vpop.xlane.xlu0 %191
  %v193 = vrcp.pop 32.0
  %v194 = vmul.f32 %v189, %v193
  %v195 = vmul.f32 %v192, %v193
  %v196 = vsub.f32 %v185, %v194
  %v197 = vsub.f32 %v186, %v195
  %v198 = vmul.f32 %v196, %v196
  %v199 = vmul.f32 %v197, %v197
  %v200 = vsel %vm53, %v198, 0.0
  %201 = vadd.xlane.f32.xlu0 %v200
  %v202 = vpop.xlane.xlu0 %201
  %v203 = vsel %vm53, %v199, 0.0
  %204 = vadd.xlane.f32.xlu0 %v203
  %v205 = vpop.xlane.xlu0 %204
  %v206 = vmul.f32 %v202, %v193
  %v207 = vmul.f32 %v205, %v193
  %v208 = vadd.f32 %v206, 1e-05
  %v209 = vadd.f32 %v207, 1e-05
  %v210 = vrsqrt.pop %v208
  %v211 = vrsqrt.pop %v209
  %v212 = vmul.f32 %v196, %v210
  %v213 = vmul.f32 %v197, %v211
  %v214 = vld [vmem:[%s5] sm:$0x1]
  %v216 = vlaneseq
  %v217 = vshrl.u32 %v216, 7
  %v218 = vsub.s32 0, %v217
  %v219 = vrot.slane %v214, %v218
  %v221 = vmul.f32 %v212, %v219
  %v222 = vmul.f32 %v213, %v219
  %v223 = vld [vmem:[%s6] sm:$0x1]
  %v225 = vlaneseq
  %v226 = vshrl.u32 %v225, 7
  %v227 = vsub.s32 0, %v226
  %v228 = vrot.slane %v223, %v227
  %v230 = vadd.f32 %v221, %v228
  %v231 = vadd.f32 %v222, %v228
  %232 = vst.msk [vmem:[%s7] sm:$0xff] %vm53, %v230
  %233 = vst.msk [vmem:[%s7 + $0x8] sm:$0xff] %vm53, %v231
  // Predicated region
  $region30: #{relative_transformer_decoder_forward.11} parent=0 // pred_check
    _
  $region31: #{relative_transformer_decoder_forward.11} parent=0 // pred_check_branch
    %235 = sbr.rel (0) target = $region33
  $region32: #{relative_transformer_decoder_forward.11} parent=0 // pred_region
    _
  $region33: #{relative_transformer_decoder_forward.11} parent=0 // pred_fallthru
    _
  // Predicated region
  $region34: #{relative_transformer_decoder_forward.11} parent=0 // pred_check
    _
  $region35: #{relative_transformer_decoder_forward.11} parent=0 // pred_check_branch
    %237 = sbr.rel (0) target = $region37
  $region36: #{relative_transformer_decoder_forward.11} parent=0 // pred_region
    _
  $region37: #{relative_transformer_decoder_forward.11} parent=0 // pred_fallthru
    _

// kernel: relative_transformer_decoder_forward.9
$region0: #{relative_transformer_decoder_forward.9}
  #allocation0 [shape = 'u32[]', space=smem, size = 0x4, offset = 0x4, fixed_abs, tag = 'smem constant byte address 0x4 - core index']
  #allocation1 [shape = 'u32[144,128]{1,0:T(1,128)}', space=vmem, size = 0x12000, scoped, tag = 'internal scratch']
  #allocation2 [shape = 'f32[4,8,1]{2,1,0:T(8,128)}', space=vmem, size = 0x4000, scoped, tag = 'scratch operand']
  #allocation3 [shape = 'f32[4,8,1]{2,1,0:T(8,128)}', space=vmem, size = 0x4000, scoped, tag = 'scratch operand']
  #allocation4 [shape = 'f32[4,8,8]{2,1,0:T(8,128)}', space=vmem, size = 0x4000, scoped, tag = 'scratch operand']
  #allocation5 [shape = 's32[1]{0}', space=sflag, size = 0x4, scoped, tag = 'scoped memory for relative_transformer_decoder_forward.9']
  #allocation6 [shape = 's32[1]{0:T(128)S(6)}', space=smem, size = 0x200, scoped, tag = 'prefetched SMEM operand 0']
  #allocation7 [shape = 's32[1]{0:T(128)S(6)}', space=smem, size = 0x200, scoped, tag = 'prefetched SMEM operand 1']
  %s0 = inlined_call_operand.<no memory space> [shape: s32[1], index: 0, kind: input, shape index: {}, may-alias: {0,1}]
  %s1 = inlined_call_operand.<no memory space> [shape: s32[1], index: 1, kind: input, shape index: {}, may-alias: {0,1}]
  %s2 = inlined_call_operand.vmem [shape: bf16[2,4,8,8], index: 2, kind: input, shape index: {}]
  %s3 = inlined_call_operand.vmem [shape: bf16[2,4,8,8], index: 3, kind: input, shape index: {}]
  %s4 = inlined_call_operand.vmem [shape: bf16[2,4,8,8], index: 4, kind: input, shape index: {}]
  %s5 = inlined_call_operand.vmem [shape: bf16[1,4,8,8], index: 5, kind: input, shape index: {}]
  %s6 = inlined_call_operand.vmem [shape: bf16[2,8,32], index: 6, kind: output, shape index: {}]
  %s7 = sld [smem:[#allocation0]]
  $region57: #{relative_transformer_decoder_forward.9} parent=0
    _
  %s9 = ssub.s32 1, %s7
  %s10 = scalar_select 0, %s9, %s7
  %11 = sst [smem:[#allocation6]] %s0
  %12 = sst [smem:[#allocation7]] %s1
  loop: start=0, step=1, limit=4
  $region2: #{relative_transformer_decoder_forward.9} parent=0 // loop_pre_header
    _
  $region3: #{relative_transformer_decoder_forward.9} parent=0 // loop_header
    %s14 = sphi 0, %s18
    %p15 = scmp.ge.s32.totalorder %s14, 4
    %s21 = sphi 0, %s33
    %s22 = sphi 0, %s29
    %s23 = sphi 0, %s21
    %s24 = sphi 0, %s22
    %s25 = sphi 0, %s23
    %s26 = sphi 0, %s24
    %s40 = sphi 0, %s42
    %s43 = sphi 0, %s40
    %s44 = sphi 0, %s43
    %s60 = sphi 0, %s44
    %s70 = sphi 0, %s72
    %s73 = sphi 0, %s70
    %s74 = sphi 0, %s73
    %s90 = sphi 0, %s74
    %s100 = sphi 0, %s102
    %s103 = sphi 0, %s100
    %s104 = sphi 0, %s103
    %s120 = sphi 0, %s104
    %s132 = sphi 0, %s134
    %s135 = sphi 0, %s132
    %s136 = sphi 0, %s135
    %s152 = sphi 0, %s136
    %s162 = sphi 0, %s164
    %s165 = sphi 0, %s162
    %s166 = sphi 0, %s165
    %s182 = sphi 0, %s166
  $region4: #{relative_transformer_decoder_forward.9} parent=0 // loop_header_branch
    %17 = sbr.rel (%p15) target = $region8
  $region5: #{relative_transformer_decoder_forward.9} parent=0 // loop_body
    %s19 = ssub.s32 %s14, 1
    %s20 = ssub.s32 %s14, 2
    %s27 = sadd.s32 1, %s22
    %p28 = scmp.ge.s32.totalorder %s27, 1
    %s29 = scalar_select %p28, 0, %s27
    %s30 = sadd.s32 1, %s21
    %s31 = scalar_select %p28, %s30, %s21
    %p32 = scmp.ge.s32.totalorder %s31, 2
    %s33 = scalar_select %p32, 0, %s31
    %s34 = sld [smem:[#allocation6 + %s22]]
    %s35 = sld [smem:[#allocation6 + %s29]]
    %s36 = ssub.s32 %s21, %s33
    %s37 = ssub.s32 %s34, %s35
    %s38 = sor.u32 %s36, %s37
    %p39 = scmp.eq.s32.totalorder %s38, 0
    %s41 = sadd.s32 %s40, 1
    %s42 = scalar_select %p39, %s40, %s41
    %p45 = pneg %p39
    %p46 = scmp.eq.s32.totalorder %s14, 1
    %p47 = por %p45, %p46
    %p48 = scmp.ne.s32.totalorder %s40, %s43
    %p49 = scmp.eq.s32.totalorder %s14, 0
    %p50 = por %p48, %p49
    %p51 = scmp.ne.s32.totalorder %s40, %s43
    %p52 = scmp.eq.s32.totalorder %s19, 1
    %p53 = por %p51, %p52
    %p54 = scmp.ne.s32.totalorder %s43, %s44
    %p55 = scmp.eq.s32.totalorder %s19, 0
    %p56 = por %p54, %p55
    %p57 = scmp.ne.s32.totalorder %s43, %s44
    %p58 = scmp.eq.s32.totalorder %s20, 1
    %p59 = por %p57, %p58
    %p61 = scmp.ne.s32.totalorder %s44, %s60
    %p62 = scmp.eq.s32.totalorder %s20, 0
    %p63 = por %p61, %p62
    %s64 = sld [smem:[#allocation7 + %s22]]
    %s65 = sld [smem:[#allocation7 + %s29]]
    %s66 = ssub.s32 %s21, %s33
    %s67 = ssub.s32 %s64, %s65
    %s68 = sor.u32 %s66, %s67
    %p69 = scmp.eq.s32.totalorder %s68, 0
    %s71 = sadd.s32 %s70, 1
    %s72 = scalar_select %p69, %s70, %s71
    %p75 = pneg %p69
    %p76 = scmp.eq.s32.totalorder %s14, 1
    %p77 = por %p75, %p76
    %p78 = scmp.ne.s32.totalorder %s70, %s73
    %p79 = scmp.eq.s32.totalorder %s14, 0
    %p80 = por %p78, %p79
    %p81 = scmp.ne.s32.totalorder %s70, %s73
    %p82 = scmp.eq.s32.totalorder %s19, 1
    %p83 = por %p81, %p82
    %p84 = scmp.ne.s32.totalorder %s73, %s74
    %p85 = scmp.eq.s32.totalorder %s19, 0
    %p86 = por %p84, %p85
    %p87 = scmp.ne.s32.totalorder %s73, %s74
    %p88 = scmp.eq.s32.totalorder %s20, 1
    %p89 = por %p87, %p88
    %p91 = scmp.ne.s32.totalorder %s74, %s90
    %p92 = scmp.eq.s32.totalorder %s20, 0
    %p93 = por %p91, %p92
    %s94 = sld [smem:[#allocation7 + %s22]]
    %s95 = sld [smem:[#allocation7 + %s29]]
    %s96 = ssub.s32 %s21, %s33
    %s97 = ssub.s32 %s94, %s95
    %s98 = sor.u32 %s96, %s97
    %p99 = scmp.eq.s32.totalorder %s98, 0
    %s101 = sadd.s32 %s100, 1
    %s102 = scalar_select %p99, %s100, %s101
    %p105 = pneg %p99
    %p106 = scmp.eq.s32.totalorder %s14, 1
    %p107 = por %p105, %p106
    %p108 = scmp.ne.s32.totalorder %s100, %s103
    %p109 = scmp.eq.s32.totalorder %s14, 0
    %p110 = por %p108, %p109
    %p111 = scmp.ne.s32.totalorder %s100, %s103
    %p112 = scmp.eq.s32.totalorder %s19, 1
    %p113 = por %p111, %p112
    %p114 = scmp.ne.s32.totalorder %s103, %s104
    %p115 = scmp.eq.s32.totalorder %s19, 0
    %p116 = por %p114, %p115
    %p117 = scmp.ne.s32.totalorder %s103, %s104
    %p118 = scmp.eq.s32.totalorder %s20, 1
    %p119 = por %p117, %p118
    %p121 = scmp.ne.s32.totalorder %s104, %s120
    %p122 = scmp.eq.s32.totalorder %s20, 0
    %p123 = por %p121, %p122
    %s124 = sld [smem:[#allocation6 + %s22]]
    %s125 = sld [smem:[#allocation7 + %s22]]
    %s126 = ssub.s32 %s124, %s125
    %s127 = sld [smem:[#allocation6 + %s29]]
    %s128 = sld [smem:[#allocation7 + %s29]]
    %s129 = ssub.s32 %s127, %s128
    %s130 = ssub.s32 %s126, %s129
    %p131 = scmp.eq.s32.totalorder %s130, 0
    %s133 = sadd.s32 %s132, 1
    %s134 = scalar_select %p131, %s132, %s133
    %p137 = pneg %p131
    %p138 = scmp.eq.s32.totalorder %s14, 1
    %p139 = por %p137, %p138
    %p140 = scmp.ne.s32.totalorder %s132, %s135
    %p141 = scmp.eq.s32.totalorder %s14, 0
    %p142 = por %p140, %p141
    %p143 = scmp.ne.s32.totalorder %s132, %s135
    %p144 = scmp.eq.s32.totalorder %s19, 1
    %p145 = por %p143, %p144
    %p146 = scmp.ne.s32.totalorder %s135, %s136
    %p147 = scmp.eq.s32.totalorder %s19, 0
    %p148 = por %p146, %p147
    %p149 = scmp.ne.s32.totalorder %s135, %s136
    %p150 = scmp.eq.s32.totalorder %s20, 1
    %p151 = por %p149, %p150
    %p153 = scmp.ne.s32.totalorder %s136, %s152
    %p154 = scmp.eq.s32.totalorder %s20, 0
    %p155 = por %p153, %p154
    %s156 = sld [smem:[#allocation6 + %s22]]
    %s157 = sld [smem:[#allocation6 + %s29]]
    %s158 = ssub.s32 %s21, %s33
    %s159 = ssub.s32 %s156, %s157
    %s160 = sor.u32 %s158, %s159
    %p161 = scmp.eq.s32.totalorder %s160, 0
    %s163 = sadd.s32 %s162, 1
    %s164 = scalar_select %p161, %s162, %s163
    %p167 = pneg %p161
    %p168 = scmp.eq.s32.totalorder %s14, 1
    %p169 = por %p167, %p168
    %p170 = scmp.ne.s32.totalorder %s162, %s165
    %p171 = scmp.eq.s32.totalorder %s14, 0
    %p172 = por %p170, %p171
    %p173 = scmp.ne.s32.totalorder %s162, %s165
    %p174 = scmp.eq.s32.totalorder %s19, 1
    %p175 = por %p173, %p174
    %p176 = scmp.ne.s32.totalorder %s165, %s166
    %p177 = scmp.eq.s32.totalorder %s19, 0
    %p178 = por %p176, %p177
    %p179 = scmp.ne.s32.totalorder %s165, %s166
    %p180 = scmp.eq.s32.totalorder %s20, 1
    %p181 = por %p179, %p180
    %p183 = scmp.ne.s32.totalorder %s166, %s182
    %p184 = scmp.eq.s32.totalorder %s20, 0
    %p185 = por %p183, %p184
    %p186 = scmp.le.s32.totalorder 1, %s14
    %p187 = scmp.lt.s32.totalorder %s14, 3
    %p188 = pnand %p186, %p187
    %p189 = pneg %p188
    // Predicated region
    $region9: #{relative_transformer_decoder_forward.9} parent=5 // pred_check
      _
    $region10: #{relative_transformer_decoder_forward.9} parent=5 // pred_check_branch
      %191 = sbr.rel (%p188) target = $region12
    $region11: #{relative_transformer_decoder_forward.9} parent=5 // pred_region
      %s192 = ssub.s32 %s14, 1
      // Predicated region
      $region13: #{relative_transformer_decoder_forward.9} parent=11 // pred_check
        %p193 = pneg %p148
      $region14: #{relative_transformer_decoder_forward.9} parent=11 // pred_check_branch
        %195 = sbr.rel (%p193) target = $region16
      $region15: #{relative_transformer_decoder_forward.9} parent=11 // pred_region
        %s196 = sld [smem:[#allocation6 + %s24]]
        %s197 = sld [smem:[#allocation7 + %s24]]
        %s198 = ssub.s32 %s196, %s197
        %p199 = scmp.lt.s32.totalorder %s198, 0
        %s200 = scalar_select %p199, %s198, 0
        %s201 = smul.addr %s200, 4
        %s202 = smul.addr %s201, 4
        %s203 = scalar_lea.vmem %s5, %s202
        %s204 = sld [smem:[#allocation6 + %s24]]
        %s205 = sld [smem:[#allocation7 + %s24]]
        %s206 = ssub.s32 %s204, %s205
      $region16: #{relative_transformer_decoder_forward.9} parent=11 // pred_fallthru
        _
    $region12: #{relative_transformer_decoder_forward.9} parent=5 // pred_fallthru
      _
    %p207 = scmp.lt.s32.totalorder %s14, 2
    // Predicated region
    $region17: #{relative_transformer_decoder_forward.9} parent=5 // pred_check
      %p208 = pneg %p207
    $region18: #{relative_transformer_decoder_forward.9} parent=5 // pred_check_branch
      %210 = sbr.rel (%p208) target = $region20
    $region19: #{relative_transformer_decoder_forward.9} parent=5 // pred_region
      // Predicated region
      $region21: #{relative_transformer_decoder_forward.9} parent=19 // pred_check
        %p211 = pneg %p50
      $region22: #{relative_transformer_decoder_forward.9} parent=19 // pred_check_branch
        %213 = sbr.rel (%p211) target = $region24
      $region23: #{relative_transformer_decoder_forward.9} parent=19 // pred_region
        %s214 = sld [smem:[#allocation6 + %s22]]
        %p215 = scmp.lt.s32.totalorder %s21, 1
        %s216 = scalar_select %p215, %s21, 1
        %p217 = scmp.lt.s32.totalorder %s214, 0
        %s218 = scalar_select %p217, %s214, 0
        %s219 = smul.addr %s216, 4
        %s220 = sadd.s32 %s218, %s219
        %s221 = smul.addr %s220, 4
        %s222 = scalar_lea.vmem %s2, %s221
        %s223 = sld [smem:[#allocation6 + %s22]]
      $region24: #{relative_transformer_decoder_forward.9} parent=19 // pred_fallthru
        _
      // Predicated region
      $region25: #{relative_transformer_decoder_forward.9} parent=19 // pred_check
        %p224 = pneg %p80
      $region26: #{relative_transformer_decoder_forward.9} parent=19 // pred_check_branch
        %226 = sbr.rel (%p224) target = $region28
      $region27: #{relative_transformer_decoder_forward.9} parent=19 // pred_region
        %s227 = sld [smem:[#allocation7 + %s22]]
        %p228 = scmp.lt.s32.totalorder %s21, 1
        %s229 = scalar_select %p228, %s21, 1
        %p230 = scmp.lt.s32.totalorder %s227, 0
        %s231 = scalar_select %p230, %s227, 0
        %s232 = smul.addr %s229, 4
        %s233 = sadd.s32 %s231, %s232
        %s234 = smul.addr %s233, 4
        %s235 = scalar_lea.vmem %s3, %s234
        %s236 = sld [smem:[#allocation7 + %s22]]
      $region28: #{relative_transformer_decoder_forward.9} parent=19 // pred_fallthru
        _
      // Predicated region
      $region29: #{relative_transformer_decoder_forward.9} parent=19 // pred_check
        %p237 = pneg %p110
      $region30: #{relative_transformer_decoder_forward.9} parent=19 // pred_check_branch
        %239 = sbr.rel (%p237) target = $region32
      $region31: #{relative_transformer_decoder_forward.9} parent=19 // pred_region
        %s240 = sld [smem:[#allocation7 + %s22]]
        %p241 = scmp.lt.s32.totalorder %s21, 1
        %s242 = scalar_select %p241, %s21, 1
        %p243 = scmp.lt.s32.totalorder %s240, 0
        %s244 = scalar_select %p243, %s240, 0
        %s245 = smul.addr %s242, 4
        %s246 = sadd.s32 %s244, %s245
        %s247 = smul.addr %s246, 4
        %s248 = scalar_lea.vmem %s4, %s247
        %s249 = sld [smem:[#allocation7 + %s22]]
      $region32: #{relative_transformer_decoder_forward.9} parent=19 // pred_fallthru
        _
    $region20: #{relative_transformer_decoder_forward.9} parent=5 // pred_fallthru
      _
    %p250 = scmp.le.s32.totalorder 1, %s14
    %p251 = scmp.lt.s32.totalorder %s14, 3
    %p252 = pnand %p250, %p251
    %p253 = pneg %p252
    // Predicated region
    $region33: #{relative_transformer_decoder_forward.9} parent=5 // pred_check
      _
    $region34: #{relative_transformer_decoder_forward.9} parent=5 // pred_check_branch
      %255 = sbr.rel (%p252) target = $region36
    $region35: #{relative_transformer_decoder_forward.9} parent=5 // pred_region
      %s256 = ssub.s32 %s14, 1
      %s257 = sld [smem:[#allocation6 + %s24]]
      %p258 = scmp.lt.s32.totalorder %s23, 1
      %s259 = scalar_select %p258, %s23, 1
      %p260 = scmp.lt.s32.totalorder %s257, 0
      %s261 = scalar_select %p260, %s257, 0
      %s262 = smul.addr %s259, 4
      %s263 = sadd.s32 %s261, %s262
      %s264 = smul.addr %s263, 4
      %s265 = scalar_lea.vmem %s2, %s264
      %p266 = pneg %p56
      %p267 = pneg %p53
      %s268 = sld [smem:[#allocation7 + %s24]]
      %p269 = scmp.lt.s32.totalorder %s23, 1
      %s270 = scalar_select %p269, %s23, 1
      %p271 = scmp.lt.s32.totalorder %s268, 0
      %s272 = scalar_select %p271, %s268, 0
      %s273 = smul.addr %s270, 4
      %s274 = sadd.s32 %s272, %s273
      %s275 = smul.addr %s274, 4
      %s276 = scalar_lea.vmem %s3, %s275
      %p277 = pneg %p86
      %p278 = pneg %p83
      %s279 = sld [smem:[#allocation7 + %s24]]
      %p280 = scmp.lt.s32.totalorder %s23, 1
      %s281 = scalar_select %p280, %s23, 1
      %p282 = scmp.lt.s32.totalorder %s279, 0
      %s283 = scalar_select %p282, %s279, 0
      %s284 = smul.addr %s281, 4
      %s285 = sadd.s32 %s283, %s284
      %s286 = smul.addr %s285, 4
      %s287 = scalar_lea.vmem %s4, %s286
      %p288 = pneg %p116
      %p289 = pneg %p113
      %s290 = sld [smem:[#allocation6 + %s24]]
      %s291 = sld [smem:[#allocation7 + %s24]]
      %s292 = ssub.s32 %s290, %s291
      %p293 = scmp.lt.s32.totalorder %s292, 0
      %s294 = scalar_select %p293, %s292, 0
      %s295 = smul.addr %s294, 4
      %s296 = smul.addr %s295, 4
      %s297 = scalar_lea.vmem %s5, %s296
      %p298 = pneg %p148
      %p299 = pneg %p145
      %p300 = pneg %p178
      %p301 = pneg %p175
      %s302 = sld [smem:[#allocation6 + %s24]]
      %p303 = scmp.lt.s32.totalorder %s23, 1
      %s304 = scalar_select %p303, %s23, 1
      %p305 = scmp.lt.s32.totalorder %s302, 0
      %s306 = scalar_select %p305, %s302, 0
      %s307 = sadd.s32 %s306, %s304
      %s308 = smul.addr %s307, 4
      %s309 = scalar_lea.vmem %s6, %s308
      %s310 = sld [smem:[#allocation6 + %s24]]
      %p311 = scmp.lt.s32.totalorder %s23, 1
      %s312 = scalar_select %p311, %s23, 1
      %p313 = scmp.lt.s32.totalorder %s310, 0
      %s314 = scalar_select %p313, %s310, 0
      %s315 = smul.addr %s312, 4
      %s316 = sadd.s32 %s314, %s315
      %s317 = smul.addr %s316, 4
      %s318 = scalar_lea.vmem %s2, %s317
      %s319 = sld [smem:[#allocation6 + %s24]]
      %s320 = sld [smem:[#allocation7 + %s24]]
      %p321 = scmp.lt.s32.totalorder %s23, 1
      %s322 = scalar_select %p321, %s23, 1
      %p323 = scmp.lt.s32.totalorder %s320, 0
      %s324 = scalar_select %p323, %s320, 0
      %s325 = smul.addr %s322, 4
      %s326 = sadd.s32 %s324, %s325
      %s327 = smul.addr %s326, 4
      %s328 = scalar_lea.vmem %s3, %s327
      %s329 = sld [smem:[#allocation7 + %s24]]
      %s330 = sld [smem:[#allocation7 + %s24]]
      %p331 = scmp.lt.s32.totalorder %s23, 1
      %s332 = scalar_select %p331, %s23, 1
      %p333 = scmp.lt.s32.totalorder %s330, 0
      %s334 = scalar_select %p333, %s330, 0
      %s335 = smul.addr %s332, 4
      %s336 = sadd.s32 %s334, %s335
      %s337 = smul.addr %s336, 4
      %s338 = scalar_lea.vmem %s4, %s337
      %s339 = sld [smem:[#allocation7 + %s24]]
      %s340 = sld [smem:[#allocation6 + %s24]]
      %s341 = sld [smem:[#allocation7 + %s24]]
      %s342 = ssub.s32 %s340, %s341
      %p343 = scmp.lt.s32.totalorder %s342, 0
      %s344 = scalar_select %p343, %s342, 0
      %s345 = smul.addr %s344, 4
      %s346 = smul.addr %s345, 4
      %s347 = scalar_lea.vmem %s5, %s346
      %s348 = sld [smem:[#allocation6 + %s24]]
      %s349 = sld [smem:[#allocation7 + %s24]]
      %s350 = ssub.s32 %s348, %s349
      %s351 = sld [smem:[#allocation6 + %s24]]
      %p352 = scmp.lt.s32.totalorder %s23, 1
      %s353 = scalar_select %p352, %s23, 1
      %p354 = scmp.lt.s32.totalorder %s351, 0
      %s355 = scalar_select %p354, %s351, 0
      %s356 = sadd.s32 %s355, %s353
      %s357 = smul.addr %s356, 4
      %s358 = scalar_lea.vmem %s6, %s357
      %s359 = sld [smem:[#allocation6 + %s24]]
      %s361 = sld [smem:[#allocation6 + %s24]]
      %s362 = sld [smem:[#allocation7 + %s24]]
      %p363 = scmp.eq.s32.totalorder %s362, 0
      // Predicated region
      $region37: #{relative_transformer_decoder_forward.9} parent=35 // pred_check
        %p364 = pneg %p363
      $region38: #{relative_transformer_decoder_forward.9} parent=35 // pred_check_branch
        %366 = sbr.rel (%p364) target = $region40
      $region39: #{relative_transformer_decoder_forward.9} parent=35 // pred_region
        %vm367 = vcmask 7168
        %368 = vst.msk [vmem:[#allocation2] sm:$0xff] %vm367, -1e+30
        %369 = vst.msk [vmem:[#allocation2 + $0x8] sm:$0xff] %vm367, -1e+30
        %370 = vst.msk [vmem:[#allocation2 + $0x10] sm:$0xff] %vm367, -1e+30
        %371 = vst.msk [vmem:[#allocation2 + $0x18] sm:$0xff] %vm367, -1e+30
        %372 = vst.msk [vmem:[#allocation3] sm:$0xff] %vm367, 0.0
        %373 = vst.msk [vmem:[#allocation3 + $0x8] sm:$0xff] %vm367, 0.0
        %374 = vst.msk [vmem:[#allocation3 + $0x10] sm:$0xff] %vm367, 0.0
        %375 = vst.msk [vmem:[#allocation3 + $0x18] sm:$0xff] %vm367, 0.0
        %vm376 = vcmask 64512
        %377 = vst.msk [vmem:[#allocation4] sm:$0xff] %vm376, 0.0
        %378 = vst.msk [vmem:[#allocation4 + $0x8] sm:$0xff] %vm376, 0.0
        %379 = vst.msk [vmem:[#allocation4 + $0x10] sm:$0xff] %vm376, 0.0
        %380 = vst.msk [vmem:[#allocation4 + $0x18] sm:$0xff] %vm376, 0.0
      $region40: #{relative_transformer_decoder_forward.9} parent=35 // pred_fallthru
        _
      %v381 = vld [vmem:[%s318] sm:$0xf]
      %v382 = vld [vmem:[%s318 + $0x4] sm:$0xf]
      %v383 = vld [vmem:[%s318 + $0x8] sm:$0xf]
      %v384 = vld [vmem:[%s318 + $0xc] sm:$0xf]
      %v385 = vld [vmem:[%s328] sm:$0xf]
      %v386 = vld [vmem:[%s328 + $0x4] sm:$0xf]
      %v387 = vld [vmem:[%s328 + $0x8] sm:$0xf]
      %v388 = vld [vmem:[%s328 + $0xc] sm:$0xf]
      %v389 = vld [vmem:[%s338] sm:$0xf]
      %v390 = vld [vmem:[%s338 + $0x4] sm:$0xf]
      %v391 = vld [vmem:[%s338 + $0x8] sm:$0xf]
      %v392 = vld [vmem:[%s338 + $0xc] sm:$0xf]
      %vm393 = vcmask 64512
      %v395 = vsel %vm393, %v381, 0
      %v398 = vsel %vm393, %v385, 0
      %400 = vmatprep.subr.bf16.mxu0 0
      %401 = vmatpush1.bf16.xpose.msra.mxu0 %v398
      %402 = vmatprep.subr.bf16.mxu0 0
      %403 = vmatpush1.bf16.xpose.msra.mxu0 0
      %404 = vmatprep.subr.bf16.mxu0 0
      %405 = vmatpush1.bf16.xpose.msra.mxu0 0
      %406 = vmatprep.subr.bf16.mxu0 0
      %407 = vmatpush1.bf16.xpose.msra.mxu0 0
      %408 = vmatprep.subr.bf16.mxu0 0
      %409 = vmatpush1.bf16.xpose.msra.mxu0 0
      %410 = vmatprep.subr.bf16.mxu0 0
      %411 = vmatpush1.bf16.xpose.msra.mxu0 0
      %412 = vmatprep.subr.bf16.mxu0 0
      %413 = vmatpush1.bf16.xpose.msra.mxu0 0
      %414 = vmatprep.subr.bf16.mxu0 0
      %415 = vmatpush1.bf16.xpose.msra.mxu0 0
      %416 = vmatprep.subr.bf16.mxu0 0
      %417 = vmatpush1.bf16.xpose.msra.mxu0 0
      %418 = vmatprep.subr.bf16.mxu0 0
      %419 = vmatpush1.bf16.xpose.msra.mxu0 0
      %420 = vmatprep.subr.bf16.mxu0 0
      %421 = vmatpush1.bf16.xpose.msra.mxu0 0
      %422 = vmatprep.subr.bf16.mxu0 0
      %423 = vmatpush1.bf16.xpose.msra.mxu0 0
      %424 = vmatprep.subr.bf16.mxu0 0
      %425 = vmatpush1.bf16.xpose.msra.mxu0 0
      %426 = vmatprep.subr.bf16.mxu0 0
      %427 = vmatpush1.bf16.xpose.msra.mxu0 0
      %428 = vmatprep.subr.bf16.mxu0 0
      %429 = vmatpush1.bf16.xpose.msra.mxu0 0
      %430 = vmatprep.subr.bf16.mxu0 0
      %431 = vmatpush1.bf16.xpose.msra.mxu0 0
      %432 = vmatprep.mubr.bf16.mxu0 0
      %433 = vmatmul.mubr.bf16.gmra.mrb[0].mxu0 %v395
      %v434 = vpop.f32.mrb[0].mxu0
      %v435 = vadd.f32 0.0, %v434
      %v436 = vpop.f32.mrb[0].mxu0
      %v437 = vpop.f32.mrb[0].mxu0
      %v438 = vpop.f32.mrb[0].mxu0
      %439 = vdwg.mxu0
      %v441 = vsel %vm393, %v382, 0
      %v444 = vsel %vm393, %v386, 0
      %446 = vmatprep.subr.bf16.mxu0 0
      %447 = vmatpush1.bf16.xpose.msra.mxu0 %v444
      %448 = vmatprep.subr.bf16.mxu0 0
      %449 = vmatpush1.bf16.xpose.msra.mxu0 0
      %450 = vmatprep.subr.bf16.mxu0 0
      %451 = vmatpush1.bf16.xpose.msra.mxu0 0
      %452 = vmatprep.subr.bf16.mxu0 0
      %453 = vmatpush1.bf16.xpose.msra.mxu0 0
      %454 = vmatprep.subr.bf16.mxu0 0
      %455 = vmatpush1.bf16.xpose.msra.mxu0 0
      %456 = vmatprep.subr.bf16.mxu0 0
      %457 = vmatpush1.bf16.xpose.msra.mxu0 0
      %458 = vmatprep.subr.bf16.mxu0 0
      %459 = vmatpush1.bf16.xpose.msra.mxu0 0
      %460 = vmatprep.subr.bf16.mxu0 0
      %461 = vmatpush1.bf16.xpose.msra.mxu0 0
      %462 = vmatprep.subr.bf16.mxu0 0
      %463 = vmatpush1.bf16.xpose.msra.mxu0 0
      %464 = vmatprep.subr.bf16.mxu0 0
      %465 = vmatpush1.bf16.xpose.msra.mxu0 0
      %466 = vmatprep.subr.bf16.mxu0 0
      %467 = vmatpush1.bf16.xpose.msra.mxu0 0
      %468 = vmatprep.subr.bf16.mxu0 0
      %469 = vmatpush1.bf16.xpose.msra.mxu0 0
      %470 = vmatprep.subr.bf16.mxu0 0
      %471 = vmatpush1.bf16.xpose.msra.mxu0 0
      %472 = vmatprep.subr.bf16.mxu0 0
      %473 = vmatpush1.bf16.xpose.msra.mxu0 0
      %474 = vmatprep.subr.bf16.mxu0 0
      %475 = vmatpush1.bf16.xpose.msra.mxu0 0
      %476 = vmatprep.subr.bf16.mxu0 0
      %477 = vmatpush1.bf16.xpose.msra.mxu0 0
      %478 = vmatprep.mubr.bf16.mxu0 0
      %479 = vmatmul.mubr.bf16.gmra.mrb[0].mxu0 %v441
      %v480 = vpop.f32.mrb[0].mxu0
      %v481 = vadd.f32 0.0, %v480
      %v482 = vpop.f32.mrb[0].mxu0
      %v483 = vpop.f32.mrb[0].mxu0
      %v484 = vpop.f32.mrb[0].mxu0
      %485 = vdwg.mxu0
      %v487 = vsel %vm393, %v383, 0
      %v490 = vsel %vm393, %v387, 0
      %492 = vmatprep.subr.bf16.mxu0 0
      %493 = vmatpush1.bf16.xpose.msra.mxu0 %v490
      %494 = vmatprep.subr.bf16.mxu0 0
      %495 = vmatpush1.bf16.xpose.msra.mxu0 0
      %496 = vmatprep.subr.bf16.mxu0 0
      %497 = vmatpush1.bf16.xpose.msra.mxu0 0
      %498 = vmatprep.subr.bf16.mxu0 0
      %499 = vmatpush1.bf16.xpose.msra.mxu0 0
      %500 = vmatprep.subr.bf16.mxu0 0
      %501 = vmatpush1.bf16.xpose.msra.mxu0 0
      %502 = vmatprep.subr.bf16.mxu0 0
      %503 = vmatpush1.bf16.xpose.msra.mxu0 0
      %504 = vmatprep.subr.bf16.mxu0 0
      %505 = vmatpush1.bf16.xpose.msra.mxu0 0
      %506 = vmatprep.subr.bf16.mxu0 0
      %507 = vmatpush1.bf16.xpose.msra.mxu0 0
      %508 = vmatprep.subr.bf16.mxu0 0
      %509 = vmatpush1.bf16.xpose.msra.mxu0 0
      %510 = vmatprep.subr.bf16.mxu0 0
      %511 = vmatpush1.bf16.xpose.msra.mxu0 0
      %512 = vmatprep.subr.bf16.mxu0 0
      %513 = vmatpush1.bf16.xpose.msra.mxu0 0
      %514 = vmatprep.subr.bf16.mxu0 0
      %515 = vmatpush1.bf16.xpose.msra.mxu0 0
      %516 = vmatprep.subr.bf16.mxu0 0
      %517 = vmatpush1.bf16.xpose.msra.mxu0 0
      %518 = vmatprep.subr.bf16.mxu0 0
      %519 = vmatpush1.bf16.xpose.msra.mxu0 0
      %520 = vmatprep.subr.bf16.mxu0 0
      %521 = vmatpush1.bf16.xpose.msra.mxu0 0
      %522 = vmatprep.subr.bf16.mxu0 0
      %523 = vmatpush1.bf16.xpose.msra.mxu0 0
      %524 = vmatprep.mubr.bf16.mxu0 0
      %525 = vmatmul.mubr.bf16.gmra.mrb[0].mxu0 %v487
      %v526 = vpop.f32.mrb[0].mxu0
      %v527 = vadd.f32 0.0, %v526
      %v528 = vpop.f32.mrb[0].mxu0
      %v529 = vpop.f32.mrb[0].mxu0
      %v530 = vpop.f32.mrb[0].mxu0
      %531 = vdwg.mxu0
      %v533 = vsel %vm393, %v384, 0
      %v536 = vsel %vm393, %v388, 0
      %538 = vmatprep.subr.bf16.mxu0 0
      %539 = vmatpush1.bf16.xpose.msra.mxu0 %v536
      %540 = vmatprep.subr.bf16.mxu0 0
      %541 = vmatpush1.bf16.xpose.msra.mxu0 0
      %542 = vmatprep.subr.bf16.mxu0 0
      %543 = vmatpush1.bf16.xpose.msra.mxu0 0
      %544 = vmatprep.subr.bf16.mxu0 0
      %545 = vmatpush1.bf16.xpose.msra.mxu0 0
      %546 = vmatprep.subr.bf16.mxu0 0
      %547 = vmatpush1.bf16.xpose.msra.mxu0 0
      %548 = vmatprep.subr.bf16.mxu0 0
      %549 = vmatpush1.bf16.xpose.msra.mxu0 0
      %550 = vmatprep.subr.bf16.mxu0 0
      %551 = vmatpush1.bf16.xpose.msra.mxu0 0
      %552 = vmatprep.subr.bf16.mxu0 0
      %553 = vmatpush1.bf16.xpose.msra.mxu0 0
      %554 = vmatprep.subr.bf16.mxu0 0
      %555 = vmatpush1.bf16.xpose.msra.mxu0 0
      %556 = vmatprep.subr.bf16.mxu0 0
      %557 = vmatpush1.bf16.xpose.msra.mxu0 0
      %558 = vmatprep.subr.bf16.mxu0 0
      %559 = vmatpush1.bf16.xpose.msra.mxu0 0
      %560 = vmatprep.subr.bf16.mxu0 0
      %561 = vmatpush1.bf16.xpose.msra.mxu0 0
      %562 = vmatprep.subr.bf16.mxu0 0
      %563 = vmatpush1.bf16.xpose.msra.mxu0 0
      %564 = vmatprep.subr.bf16.mxu0 0
      %565 = vmatpush1.bf16.xpose.msra.mxu0 0
      %566 = vmatprep.subr.bf16.mxu0 0
      %567 = vmatpush1.bf16.xpose.msra.mxu0 0
      %568 = vmatprep.subr.bf16.mxu0 0
      %569 = vmatpush1.bf16.xpose.msra.mxu0 0
      %570 = vmatprep.mubr.bf16.mxu0 0
      %571 = vmatmul.mubr.bf16.gmra.mrb[0].mxu0 %v533
      %v572 = vpop.f32.mrb[0].mxu0
      %v573 = vadd.f32 0.0, %v572
      %v574 = vpop.f32.mrb[0].mxu0
      %v575 = vpop.f32.mrb[0].mxu0
      %v576 = vpop.f32.mrb[0].mxu0
      %577 = vdwg.mxu0
      %v578 = vmul.f32 %v435, 0.35355338
      %v579 = vmul.f32 %v481, 0.35355338
      %v580 = vmul.f32 %v527, 0.35355338
      %v581 = vmul.f32 %v573, 0.35355338
      %v582 = vld [vmem:[%s347] sm:$0xf]
      %v583 = vld [vmem:[%s347 + $0x4] sm:$0xf]
      %v584 = vld [vmem:[%s347 + $0x8] sm:$0xf]
      %v585 = vld [vmem:[%s347 + $0xc] sm:$0xf]
      %v586 = vunpack.c.l.bf16 %v582
      %v587 = vunpack.c.l.bf16 %v583
      %v588 = vunpack.c.l.bf16 %v584
      %v589 = vunpack.c.l.bf16 %v585
      %v590 = vadd.f32 %v578, %v586
      %v591 = vadd.f32 %v579, %v587
      %v592 = vadd.f32 %v580, %v588
      %v593 = vadd.f32 %v581, %v589
      %s594 = smul.u32 %s361, 8
      %v595 = vlaneseq
      %v596 = vshrl.u32 %v595, 7
      %v597 = vstv %s594
      %v598 = vadd.s32 %v597, %v596
      %s599 = smul.u32 %s362, 8
      %v600 = vlaneseq
      %v601 = vand.u32 %v600, 127
      %v602 = vstv %s599
      %v603 = vadd.s32 %v602, %v601
      %vm604 = vcmp.ge.s32.totalorder %v603, 8
      %vm605 = vcmp.gt.s32.totalorder %v603, %v598
      %vm606 = vmor %vm604, %vm605
      %v607 = vsel %vm606, 1, 0
      %vm608 = vcmp.eq.s32.totalorder %v607, 1
      %v609 = vsel %vm608, -1e+30, %v590
      %v610 = vsel %vm608, -1e+30, %v591
      %v611 = vsel %vm608, -1e+30, %v592
      %v612 = vsel %vm608, -1e+30, %v593
      %v613 = vld [vmem:[#allocation2] sm:$0xff]
      %v614 = vld [vmem:[#allocation2 + $0x8] sm:$0xff]
      %v615 = vld [vmem:[#allocation2 + $0x10] sm:$0xff]
      %v616 = vld [vmem:[#allocation2 + $0x18] sm:$0xff]
      %v617 = vsel %vm393, %v609, -inf
      %618 = vmax.xlane.f32.xlu0 %v617
      %v619 = vpop.xlane.xlu0 %618
      %v620 = vsel %vm393, %v610, -inf
      %621 = vmax.xlane.f32.xlu0 %v620
      %v622 = vpop.xlane.xlu0 %621
      %v623 = vsel %vm393, %v611, -inf
      %624 = vmax.xlane.f32.xlu0 %v623
      %v625 = vpop.xlane.xlu0 %624
      %v626 = vsel %vm393, %v612, -inf
      %627 = vmax.xlane.f32.xlu0 %v626
      %v628 = vpop.xlane.xlu0 %627
      %v629 = vmax.f32 %v613, %v619
      %v630 = vmax.f32 %v614, %v622
      %v631 = vmax.f32 %v615, %v625
      %v632 = vmax.f32 %v616, %v628
      %v633 = vsub.f32 %v613, %v629
      %v634 = vsub.f32 %v614, %v630
      %v635 = vsub.f32 %v615, %v631
      %v636 = vsub.f32 %v616, %v632
      %v637 = vmul.f32 %v633, 1.442695
      %v638 = vpow.pop %v637
      %v639 = vmul.f32 %v634, 1.442695
      %v640 = vpow.pop %v639
      %v641 = vmul.f32 %v635, 1.442695
      %v642 = vpow.pop %v641
      %v643 = vmul.f32 %v636, 1.442695
      %v644 = vpow.pop %v643
      %646 = vset.pattern.permute.xlu0 0
      %647 = vperm.xlu0 %646, %v629
      %v648 = vpop.permute.xlu0 %647
      %651 = vset.pattern.permute.xlu0 0
      %652 = vperm.xlu0 %651, %v630
      %v653 = vpop.permute.xlu0 %652
      %656 = vset.pattern.permute.xlu0 0
      %657 = vperm.xlu0 %656, %v631
      %v658 = vpop.permute.xlu0 %657
      %661 = vset.pattern.permute.xlu0 0
      %662 = vperm.xlu0 %661, %v632
      %v663 = vpop.permute.xlu0 %662
      %v665 = vsub.f32 %v609, %v648
      %v666 = vsub.f32 %v610, %v653
      %v667 = vsub.f32 %v611, %v658
      %v668 = vsub.f32 %v612, %v663
      %v669 = vmul.f32 %v665, 1.442695
      %v670 = vpow.pop %v669
      %v671 = vmul.f32 %v666, 1.442695
      %v672 = vpow.pop %v671
      %v673 = vmul.f32 %v667, 1.442695
      %v674 = vpow.pop %v673
      %v675 = vmul.f32 %v668, 1.442695
      %v676 = vpow.pop %v675
      %v677 = vld [vmem:[#allocation3] sm:$0xff]
      %v678 = vld [vmem:[#allocation3 + $0x8] sm:$0xff]
      %v679 = vld [vmem:[#allocation3 + $0x10] sm:$0xff]
      %v680 = vld [vmem:[#allocation3 + $0x18] sm:$0xff]
      %v681 = vmul.f32 %v638, %v677
      %v682 = vmul.f32 %v640, %v678
      %v683 = vmul.f32 %v642, %v679
      %v684 = vmul.f32 %v644, %v680
      %v685 = vsel %vm393, %v670, 0.0
      %686 = vadd.xlane.f32.xlu0 %v685
      %v687 = vpop.xlane.xlu0 %686
      %v688 = vsel %vm393, %v672, 0.0
      %689 = vadd.xlane.f32.xlu0 %v688
      %v690 = vpop.xlane.xlu0 %689
      %v691 = vsel %vm393, %v674, 0.0
      %692 = vadd.xlane.f32.xlu0 %v691
      %v693 = vpop.xlane.xlu0 %692
      %v694 = vsel %vm393, %v676, 0.0
      %695 = vadd.xlane.f32.xlu0 %v694
      %v696 = vpop.xlane.xlu0 %695
      %v697 = vadd.f32 %v681, %v687
      %v698 = vadd.f32 %v682, %v690
      %v699 = vadd.f32 %v683, %v693
      %v700 = vadd.f32 %v684, %v696
      %vm701 = vcmask 7168
      %702 = vst.msk [vmem:[#allocation3] sm:$0xff] %vm701, %v697
      %703 = vst.msk [vmem:[#allocation3 + $0x8] sm:$0xff] %vm701, %v698
      %704 = vst.msk [vmem:[#allocation3 + $0x10] sm:$0xff] %vm701, %v699
      %705 = vst.msk [vmem:[#allocation3 + $0x18] sm:$0xff] %vm701, %v700
      %v706 = vld [vmem:[#allocation4] sm:$0xff]
      %v707 = vld [vmem:[#allocation4 + $0x8] sm:$0xff]
      %v708 = vld [vmem:[#allocation4 + $0x10] sm:$0xff]
      %v709 = vld [vmem:[#allocation4 + $0x18] sm:$0xff]
      %711 = vset.pattern.permute.xlu0 0
      %712 = vperm.xlu0 %711, %v638
      %v713 = vpop.permute.xlu0 %712
      %716 = vset.pattern.permute.xlu0 0
      %717 = vperm.xlu0 %716, %v640
      %v718 = vpop.permute.xlu0 %717
      %721 = vset.pattern.permute.xlu0 0
      %722 = vperm.xlu0 %721, %v642
      %v723 = vpop.permute.xlu0 %722
      %726 = vset.pattern.permute.xlu0 0
      %727 = vperm.xlu0 %726, %v644
      %v728 = vpop.permute.xlu0 %727
      %v730 = vmul.f32 %v713, %v706
      %v731 = vmul.f32 %v718, %v707
      %v732 = vmul.f32 %v723, %v708
      %v733 = vmul.f32 %v728, %v709
      %v734 = vpack.c.bf16 %v670, %v670
      %v735 = vpack.c.bf16 %v672, %v672
      %v736 = vpack.c.bf16 %v674, %v674
      %v737 = vpack.c.bf16 %v676, %v676
      %v739 = vsel %vm393, %v734, 0
      %vm741 = vcmask 1043456
      %v743 = vsel %vm741, %v389, 0
      %745 = vmatprep.subr.bf16.mxu0 0
      %746 = vmatpush1.bf16.msra.mxu0 %v743
      %747 = vmatprep.subr.bf16.mxu0 0
      %748 = vmatpush1.bf16.msra.mxu0 0
      %749 = vmatprep.subr.bf16.mxu0 0
      %750 = vmatpush1.bf16.msra.mxu0 0
      %751 = vmatprep.subr.bf16.mxu0 0
      %752 = vmatpush1.bf16.msra.mxu0 0
      %753 = vmatprep.subr.bf16.mxu0 0
      %754 = vmatpush1.bf16.msra.mxu0 0
      %755 = vmatprep.subr.bf16.mxu0 0
      %756 = vmatpush1.bf16.msra.mxu0 0
      %757 = vmatprep.subr.bf16.mxu0 0
      %758 = vmatpush1.bf16.msra.mxu0 0
      %759 = vmatprep.subr.bf16.mxu0 0
      %760 = vmatpush1.bf16.msra.mxu0 0
      %761 = vmatprep.subr.bf16.mxu0 0
      %762 = vmatpush1.bf16.msra.mxu0 0
      %763 = vmatprep.subr.bf16.mxu0 0
      %764 = vmatpush1.bf16.msra.mxu0 0
      %765 = vmatprep.subr.bf16.mxu0 0
      %766 = vmatpush1.bf16.msra.mxu0 0
      %767 = vmatprep.subr.bf16.mxu0 0
      %768 = vmatpush1.bf16.msra.mxu0 0
      %769 = vmatprep.subr.bf16.mxu0 0
      %770 = vmatpush1.bf16.msra.mxu0 0
      %771 = vmatprep.subr.bf16.mxu0 0
      %772 = vmatpush1.bf16.msra.mxu0 0
      %773 = vmatprep.subr.bf16.mxu0 0
      %774 = vmatpush1.bf16.msra.mxu0 0
      %775 = vmatprep.subr.bf16.mxu0 0
      %776 = vmatpush1.bf16.msra.mxu0 0
      %777 = vmatprep.mubr.bf16.mxu0 0
      %778 = vmatmul.mubr.bf16.gmra.mrb[0].mxu0 %v739
      %v779 = vpop.f32.mrb[0].mxu0
      %v780 = vadd.f32 0.0, %v779
      %v781 = vpop.f32.mrb[0].mxu0
      %v782 = vpop.f32.mrb[0].mxu0
      %v783 = vpop.f32.mrb[0].mxu0
      %784 = vdwg.mxu0
      %v786 = vsel %vm393, %v735, 0
      %v789 = vsel %vm741, %v390, 0
      %791 = vmatprep.subr.bf16.mxu0 0
      %792 = vmatpush1.bf16.msra.mxu0 %v789
      %793 = vmatprep.subr.bf16.mxu0 0
      %794 = vmatpush1.bf16.msra.mxu0 0
      %795 = vmatprep.subr.bf16.mxu0 0
      %796 = vmatpush1.bf16.msra.mxu0 0
      %797 = vmatprep.subr.bf16.mxu0 0
      %798 = vmatpush1.bf16.msra.mxu0 0
      %799 = vmatprep.subr.bf16.mxu0 0
      %800 = vmatpush1.bf16.msra.mxu0 0
      %801 = vmatprep.subr.bf16.mxu0 0
      %802 = vmatpush1.bf16.msra.mxu0 0
      %803 = vmatprep.subr.bf16.mxu0 0
      %804 = vmatpush1.bf16.msra.mxu0 0
      %805 = vmatprep.subr.bf16.mxu0 0
      %806 = vmatpush1.bf16.msra.mxu0 0
      %807 = vmatprep.subr.bf16.mxu0 0
      %808 = vmatpush1.bf16.msra.mxu0 0
      %809 = vmatprep.subr.bf16.mxu0 0
      %810 = vmatpush1.bf16.msra.mxu0 0
      %811 = vmatprep.subr.bf16.mxu0 0
      %812 = vmatpush1.bf16.msra.mxu0 0
      %813 = vmatprep.subr.bf16.mxu0 0
      %814 = vmatpush1.bf16.msra.mxu0 0
      %815 = vmatprep.subr.bf16.mxu0 0
      %816 = vmatpush1.bf16.msra.mxu0 0
      %817 = vmatprep.subr.bf16.mxu0 0
      %818 = vmatpush1.bf16.msra.mxu0 0
      %819 = vmatprep.subr.bf16.mxu0 0
      %820 = vmatpush1.bf16.msra.mxu0 0
      %821 = vmatprep.subr.bf16.mxu0 0
      %822 = vmatpush1.bf16.msra.mxu0 0
      %823 = vmatprep.mubr.bf16.mxu0 0
      %824 = vmatmul.mubr.bf16.gmra.mrb[0].mxu0 %v786
      %v825 = vpop.f32.mrb[0].mxu0
      %v826 = vadd.f32 0.0, %v825
      %v827 = vpop.f32.mrb[0].mxu0
      %v828 = vpop.f32.mrb[0].mxu0
      %v829 = vpop.f32.mrb[0].mxu0
      %830 = vdwg.mxu0
      %v832 = vsel %vm393, %v736, 0
      %v835 = vsel %vm741, %v391, 0
      %837 = vmatprep.subr.bf16.mxu0 0
      %838 = vmatpush1.bf16.msra.mxu0 %v835
      %839 = vmatprep.subr.bf16.mxu0 0
      %840 = vmatpush1.bf16.msra.mxu0 0
      %841 = vmatprep.subr.bf16.mxu0 0
      %842 = vmatpush1.bf16.msra.mxu0 0
      %843 = vmatprep.subr.bf16.mxu0 0
      %844 = vmatpush1.bf16.msra.mxu0 0
      %845 = vmatprep.subr.bf16.mxu0 0
      %846 = vmatpush1.bf16.msra.mxu0 0
      %847 = vmatprep.subr.bf16.mxu0 0
      %848 = vmatpush1.bf16.msra.mxu0 0
      %849 = vmatprep.subr.bf16.mxu0 0
      %850 = vmatpush1.bf16.msra.mxu0 0
      %851 = vmatprep.subr.bf16.mxu0 0
      %852 = vmatpush1.bf16.msra.mxu0 0
      %853 = vmatprep.subr.bf16.mxu0 0
      %854 = vmatpush1.bf16.msra.mxu0 0
      %855 = vmatprep.subr.bf16.mxu0 0
      %856 = vmatpush1.bf16.msra.mxu0 0
      %857 = vmatprep.subr.bf16.mxu0 0
      %858 = vmatpush1.bf16.msra.mxu0 0
      %859 = vmatprep.subr.bf16.mxu0 0
      %860 = vmatpush1.bf16.msra.mxu0 0
      %861 = vmatprep.subr.bf16.mxu0 0
      %862 = vmatpush1.bf16.msra.mxu0 0
      %863 = vmatprep.subr.bf16.mxu0 0
      %864 = vmatpush1.bf16.msra.mxu0 0
      %865 = vmatprep.subr.bf16.mxu0 0
      %866 = vmatpush1.bf16.msra.mxu0 0
      %867 = vmatprep.subr.bf16.mxu0 0
      %868 = vmatpush1.bf16.msra.mxu0 0
      %869 = vmatprep.mubr.bf16.mxu0 0
      %870 = vmatmul.mubr.bf16.gmra.mrb[0].mxu0 %v832
      %v871 = vpop.f32.mrb[0].mxu0
      %v872 = vadd.f32 0.0, %v871
      %v873 = vpop.f32.mrb[0].mxu0
      %v874 = vpop.f32.mrb[0].mxu0
      %v875 = vpop.f32.mrb[0].mxu0
      %876 = vdwg.mxu0
      %v878 = vsel %vm393, %v737, 0
      %v881 = vsel %vm741, %v392, 0
      %883 = vmatprep.subr.bf16.mxu0 0
      %884 = vmatpush1.bf16.msra.mxu0 %v881
      %885 = vmatprep.subr.bf16.mxu0 0
      %886 = vmatpush1.bf16.msra.mxu0 0
      %887 = vmatprep.subr.bf16.mxu0 0
      %888 = vmatpush1.bf16.msra.mxu0 0
      %889 = vmatprep.subr.bf16.mxu0 0
      %890 = vmatpush1.bf16.msra.mxu0 0
      %891 = vmatprep.subr.bf16.mxu0 0
      %892 = vmatpush1.bf16.msra.mxu0 0
      %893 = vmatprep.subr.bf16.mxu0 0
      %894 = vmatpush1.bf16.msra.mxu0 0
      %895 = vmatprep.subr.bf16.mxu0 0
      %896 = vmatpush1.bf16.msra.mxu0 0
      %897 = vmatprep.subr.bf16.mxu0 0
      %898 = vmatpush1.bf16.msra.mxu0 0
      %899 = vmatprep.subr.bf16.mxu0 0
      %900 = vmatpush1.bf16.msra.mxu0 0
      %901 = vmatprep.subr.bf16.mxu0 0
      %902 = vmatpush1.bf16.msra.mxu0 0
      %903 = vmatprep.subr.bf16.mxu0 0
      %904 = vmatpush1.bf16.msra.mxu0 0
      %905 = vmatprep.subr.bf16.mxu0 0
      %906 = vmatpush1.bf16.msra.mxu0 0
      %907 = vmatprep.subr.bf16.mxu0 0
      %908 = vmatpush1.bf16.msra.mxu0 0
      %909 = vmatprep.subr.bf16.mxu0 0
      %910 = vmatpush1.bf16.msra.mxu0 0
      %911 = vmatprep.subr.bf16.mxu0 0
      %912 = vmatpush1.bf16.msra.mxu0 0
      %913 = vmatprep.subr.bf16.mxu0 0
      %914 = vmatpush1.bf16.msra.mxu0 0
      %915 = vmatprep.mubr.bf16.mxu0 0
      %916 = vmatmul.mubr.bf16.gmra.mrb[0].mxu0 %v878
      %v917 = vpop.f32.mrb[0].mxu0
      %v918 = vadd.f32 0.0, %v917
      %v919 = vpop.f32.mrb[0].mxu0
      %v920 = vpop.f32.mrb[0].mxu0
      %v921 = vpop.f32.mrb[0].mxu0
      %922 = vdwg.mxu0
      %v923 = vadd.f32 %v730, %v780
      %v924 = vadd.f32 %v731, %v826
      %v925 = vadd.f32 %v732, %v872
      %v926 = vadd.f32 %v733, %v918
      %927 = vst.msk [vmem:[#allocation4] sm:$0xff] %vm393, %v923
      %928 = vst.msk [vmem:[#allocation4 + $0x8] sm:$0xff] %vm393, %v924
      %929 = vst.msk [vmem:[#allocation4 + $0x10] sm:$0xff] %vm393, %v925
      %930 = vst.msk [vmem:[#allocation4 + $0x18] sm:$0xff] %vm393, %v926
      %931 = vst.msk [vmem:[#allocation2] sm:$0xff] %vm701, %v629
      %932 = vst.msk [vmem:[#allocation2 + $0x8] sm:$0xff] %vm701, %v630
      %933 = vst.msk [vmem:[#allocation2 + $0x10] sm:$0xff] %vm701, %v631
      %934 = vst.msk [vmem:[#allocation2 + $0x18] sm:$0xff] %vm701, %v632
      %p935 = scmp.eq.s32.totalorder %s362, %s361
      // Predicated region
      $region41: #{relative_transformer_decoder_forward.9} parent=35 // pred_check
        %p936 = pneg %p935
      $region42: #{relative_transformer_decoder_forward.9} parent=35 // pred_check_branch
        %938 = sbr.rel (%p936) target = $region44
      $region43: #{relative_transformer_decoder_forward.9} parent=35 // pred_region
        %v939 = vld [vmem:[#allocation3] sm:$0xff]
        %v940 = vld [vmem:[#allocation3 + $0x8] sm:$0xff]
        %v941 = vld [vmem:[#allocation3 + $0x10] sm:$0xff]
        %v942 = vld [vmem:[#allocation3 + $0x18] sm:$0xff]
        %v943 = vrcp.pop %v939
        %v944 = vrcp.pop %v940
        %v945 = vrcp.pop %v941
        %v946 = vrcp.pop %v942
        %v947 = vld [vmem:[#allocation4] sm:$0xff]
        %v948 = vld [vmem:[#allocation4 + $0x8] sm:$0xff]
        %v949 = vld [vmem:[#allocation4 + $0x10] sm:$0xff]
        %v950 = vld [vmem:[#allocation4 + $0x18] sm:$0xff]
        %952 = vset.pattern.permute.xlu0 0
        %953 = vperm.xlu0 %952, %v943
        %v954 = vpop.permute.xlu0 %953
        %957 = vset.pattern.permute.xlu0 0
        %958 = vperm.xlu0 %957, %v944
        %v959 = vpop.permute.xlu0 %958
        %962 = vset.pattern.permute.xlu0 0
        %963 = vperm.xlu0 %962, %v945
        %v964 = vpop.permute.xlu0 %963
        %967 = vset.pattern.permute.xlu0 0
        %968 = vperm.xlu0 %967, %v946
        %v969 = vpop.permute.xlu0 %968
        %v971 = vmul.f32 %v947, %v954
        %v972 = vmul.f32 %v948, %v959
        %v973 = vmul.f32 %v949, %v964
        %v974 = vmul.f32 %v950, %v969
        %976 = vrot.lane.b32.xlu0 %v972, 8
        %v977 = vpop.permute.xlu0 %976
        %980 = vrot.lane.b32.xlu0 %v973, 16
        %v981 = vpop.permute.xlu0 %980
        %984 = vrot.lane.b32.xlu0 %v974, 24
        %v985 = vpop.permute.xlu0 %984
        %v987 = vsel %vm393, %v971, %v977
        %vm988 = vcmask 130048
        %v989 = vsel %vm988, %v987, %v981
        %vm990 = vcmask 195584
        %v991 = vsel %vm990, %v989, %v985
        %v992 = vpack.c.bf16 %v991, %v991
        %vm993 = vcmask 257024
        %994 = vst.msk [vmem:[%s358] sm:$0xf] %vm993, %v992
      $region44: #{relative_transformer_decoder_forward.9} parent=35 // pred_fallthru
        _
      %s995 = sld [smem:[#allocation6 + %s24]]
      %p996 = scmp.lt.s32.totalorder %s23, 1
      %s997 = scalar_select %p996, %s23, 1
      %p998 = scmp.lt.s32.totalorder %s995, 0
      %s999 = scalar_select %p998, %s995, 0
      %s1000 = sadd.s32 %s999, %s997
      %s1001 = smul.addr %s1000, 4
      %s1002 = scalar_lea.vmem %s6, %s1001
      // Predicated region
      $region45: #{relative_transformer_decoder_forward.9} parent=35 // pred_check
        %p1003 = pneg %p175
      $region46: #{relative_transformer_decoder_forward.9} parent=35 // pred_check_branch
        %1005 = sbr.rel (%p1003) target = $region48
      $region47: #{relative_transformer_decoder_forward.9} parent=35 // pred_region
        %s1006 = sld [smem:[#allocation6 + %s24]]
      $region48: #{relative_transformer_decoder_forward.9} parent=35 // pred_fallthru
        _
    $region36: #{relative_transformer_decoder_forward.9} parent=5 // pred_fallthru
      _
    %p1007 = scmp.le.s32.totalorder 2, %s14
    // Predicated region
    $region49: #{relative_transformer_decoder_forward.9} parent=5 // pred_check
      %p1008 = pneg %p1007
    $region50: #{relative_transformer_decoder_forward.9} parent=5 // pred_check_branch
      %1010 = sbr.rel (%p1008) target = $region52
    $region51: #{relative_transformer_decoder_forward.9} parent=5 // pred_region
      %s1011 = ssub.s32 %s14, 2
      // Predicated region
      $region53: #{relative_transformer_decoder_forward.9} parent=51 // pred_check
        %p1012 = pneg %p181
      $region54: #{relative_transformer_decoder_forward.9} parent=51 // pred_check_branch
        %1014 = sbr.rel (%p1012) target = $region56
      $region55: #{relative_transformer_decoder_forward.9} parent=51 // pred_region
        %s1015 = sld [smem:[#allocation6 + %s26]]
        %p1016 = scmp.lt.s32.totalorder %s25, 1
        %s1017 = scalar_select %p1016, %s25, 1
        %p1018 = scmp.lt.s32.totalorder %s1015, 0
        %s1019 = scalar_select %p1018, %s1015, 0
        %s1020 = sadd.s32 %s1019, %s1017
        %s1021 = smul.addr %s1020, 4
        %s1022 = scalar_lea.vmem %s6, %s1021
      $region56: #{relative_transformer_decoder_forward.9} parent=51 // pred_fallthru
        _
    $region52: #{relative_transformer_decoder_forward.9} parent=5 // pred_fallthru
      _
  $region6: #{relative_transformer_decoder_forward.9} parent=0 // loop_footer
    %s18 = sadd.s32 1, %s14
  $region7: #{relative_transformer_decoder_forward.9} parent=0 // loop_footer_branch
    %13 = sbr.rel target = $region3
  $region8: #{relative_transformer_decoder_forward.9} parent=0 // loop_exit
    _

// kernel: relative_transformer_decoder_forward.15
$region0: #{relative_transformer_decoder_forward.15}
  #allocation0 [shape = 'u32[]', space=smem, size = 0x4, offset = 0x4, fixed_abs, tag = 'smem constant byte address 0x4 - core index']
  #allocation1 [shape = 'u32[144,128]{1,0:T(1,128)}', space=vmem, size = 0x12000, scoped, tag = 'internal scratch']
  %s0 = inlined_call_operand.vmem [shape: f32[16,32], index: 0, kind: input, shape index: {}]
  %s1 = inlined_call_operand.vmem [shape: bf16[32,64], index: 1, kind: input, shape index: {}]
  %s2 = inlined_call_operand.vmem [shape: f32[1,64], index: 2, kind: input, shape index: {}]
  %s3 = inlined_call_operand.vmem [shape: bf16[64,32], index: 3, kind: input, shape index: {}]
  %s4 = inlined_call_operand.vmem [shape: f32[1,32], index: 4, kind: input, shape index: {}]
  %s5 = inlined_call_operand.vmem [shape: f32[1,32], index: 5, kind: input, shape index: {}]
  %s6 = inlined_call_operand.vmem [shape: f32[1,32], index: 6, kind: input, shape index: {}]
  %s7 = inlined_call_operand.hbm [shape: f32[16,32], index: 7, kind: output, shape index: {}]
  %s8 = sld [smem:[#allocation0]]
  $region38: #{relative_transformer_decoder_forward.15} parent=0
    _
  %s10 = ssub.s32 1, %s8
  %s11 = scalar_select 0, %s10, %s8
  $region1: #{relative_transformer_decoder_forward.15} parent=0
    #allocation2 [shape = 'u8[8192]{0}', space=vmem, size = 0x2000, scoped, tag = 'output window, operand 0, single buffered']
    #allocation3 [shape = 's32[1]{0}', space=sflag, size = 0x4, scoped, tag = 'scoped memory for relative_transformer_decoder_forward.15']
    %12 = vsyncpa [#allocation3], 0
    // Predicated region
    $region2: #{relative_transformer_decoder_forward.15} parent=1 // pred_check
      _
    $region3: #{relative_transformer_decoder_forward.15} parent=1 // pred_check_branch
      %14 = sbr.rel (0) target = $region5
    $region4: #{relative_transformer_decoder_forward.15} parent=1 // pred_region
      _
    $region5: #{relative_transformer_decoder_forward.15} parent=1 // pred_fallthru
      _
    // Predicated region
    $region6: #{relative_transformer_decoder_forward.15} parent=1 // pred_check
      _
    $region7: #{relative_transformer_decoder_forward.15} parent=1 // pred_check_branch
      %16 = sbr.rel (0) target = $region9
    $region8: #{relative_transformer_decoder_forward.15} parent=1 // pred_region
      _
    $region9: #{relative_transformer_decoder_forward.15} parent=1 // pred_fallthru
      _
    // Predicated region
    $region10: #{relative_transformer_decoder_forward.15} parent=1 // pred_check
      _
    $region11: #{relative_transformer_decoder_forward.15} parent=1 // pred_check_branch
      %18 = sbr.rel (0) target = $region13
    $region12: #{relative_transformer_decoder_forward.15} parent=1 // pred_region
      _
    $region13: #{relative_transformer_decoder_forward.15} parent=1 // pred_fallthru
      _
    // Predicated region
    $region14: #{relative_transformer_decoder_forward.15} parent=1 // pred_check
      _
    $region15: #{relative_transformer_decoder_forward.15} parent=1 // pred_check_branch
      %20 = sbr.rel (0) target = $region17
    $region16: #{relative_transformer_decoder_forward.15} parent=1 // pred_region
      _
    $region17: #{relative_transformer_decoder_forward.15} parent=1 // pred_fallthru
      _
    // Predicated region
    $region18: #{relative_transformer_decoder_forward.15} parent=1 // pred_check
      _
    $region19: #{relative_transformer_decoder_forward.15} parent=1 // pred_check_branch
      %22 = sbr.rel (0) target = $region21
    $region20: #{relative_transformer_decoder_forward.15} parent=1 // pred_region
      _
    $region21: #{relative_transformer_decoder_forward.15} parent=1 // pred_fallthru
      _
    // Predicated region
    $region22: #{relative_transformer_decoder_forward.15} parent=1 // pred_check
      _
    $region23: #{relative_transformer_decoder_forward.15} parent=1 // pred_check_branch
      %24 = sbr.rel (0) target = $region25
    $region24: #{relative_transformer_decoder_forward.15} parent=1 // pred_region
      _
    $region25: #{relative_transformer_decoder_forward.15} parent=1 // pred_fallthru
      _
    // Predicated region
    $region26: #{relative_transformer_decoder_forward.15} parent=1 // pred_check
      _
    $region27: #{relative_transformer_decoder_forward.15} parent=1 // pred_check_branch
      %26 = sbr.rel (0) target = $region29
    $region28: #{relative_transformer_decoder_forward.15} parent=1 // pred_region
      _
    $region29: #{relative_transformer_decoder_forward.15} parent=1 // pred_fallthru
      _
    %v28 = vld [vmem:[%s0] sm:$0xff]
    %v29 = vld [vmem:[%s0 + $0x8] sm:$0xff]
    %v30 = vpack.c.bf16 %v29, %v28
    %v31 = vld [vmem:[%s1] sm:$0xf]
    %v32 = vld [vmem:[%s1 + $0x4] sm:$0xf]
    %v33 = vld [vmem:[%s1 + $0x8] sm:$0xf]
    %v34 = vld [vmem:[%s1 + $0xc] sm:$0xf]
    %v35 = vld [vmem:[%s2] sm:$0x1]
    %v37 = vlaneseq
    %v38 = vshrl.u32 %v37, 7
    %v39 = vsub.s32 0, %v38
    %v40 = vrot.slane %v35, %v39
    %v46 = vunpack.c.l.b16 %v31
    %v47 = vunpack.c.l.b16 %v32
    %v48 = vunpack.c.l.b16 %v33
    %v49 = vunpack.c.l.b16 %v34
    %v50 = vpack.c.b16 %v47, %v46
    %v51 = vpack.c.b16 %v49, %v48
    %vm54 = vcmask 261120
    %v56 = vsel %vm54, %v30, 0
    %58 = vmatprep.subr.bf16.mxu0 0
    %59 = vmatpush1.bf16.msra.mxu0 %v50
    %60 = vmatprep.subr.bf16.mxu0 0
    %61 = vmatpush1.bf16.msra.mxu0 %v51
    %62 = vmatprep.subr.bf16.mxu0 0
    %63 = vmatpush1.bf16.msra.mxu0 0
    %64 = vmatprep.subr.bf16.mxu0 0
    %65 = vmatpush1.bf16.msra.mxu0 0
    %66 = vmatprep.subr.bf16.mxu0 0
    %67 = vmatpush1.bf16.msra.mxu0 0
    %68 = vmatprep.subr.bf16.mxu0 0
    %69 = vmatpush1.bf16.msra.mxu0 0
    %70 = vmatprep.subr.bf16.mxu0 0
    %71 = vmatpush1.bf16.msra.mxu0 0
    %72 = vmatprep.subr.bf16.mxu0 0
    %73 = vmatpush1.bf16.msra.mxu0 0
    %74 = vmatprep.subr.bf16.mxu0 0
    %75 = vmatpush1.bf16.msra.mxu0 0
    %76 = vmatprep.subr.bf16.mxu0 0
    %77 = vmatpush1.bf16.msra.mxu0 0
    %78 = vmatprep.subr.bf16.mxu0 0
    %79 = vmatpush1.bf16.msra.mxu0 0
    %80 = vmatprep.subr.bf16.mxu0 0
    %81 = vmatpush1.bf16.msra.mxu0 0
    %82 = vmatprep.subr.bf16.mxu0 0
    %83 = vmatpush1.bf16.msra.mxu0 0
    %84 = vmatprep.subr.bf16.mxu0 0
    %85 = vmatpush1.bf16.msra.mxu0 0
    %86 = vmatprep.subr.bf16.mxu0 0
    %87 = vmatpush1.bf16.msra.mxu0 0
    %88 = vmatprep.subr.bf16.mxu0 0
    %89 = vmatpush1.bf16.msra.mxu0 0
    %90 = vmatprep.mubr.bf16.mxu0 0
    %91 = vmatmul.mubr.bf16.gmra.mrb[0].mxu0 %v56
    %v92 = vpop.f32.mrb[0].mxu0
    %v93 = vadd.f32 %v40, %v92
    %v94 = vpop.f32.mrb[0].mxu0
    %v95 = vpop.f32.mrb[0].mxu0
    %v96 = vadd.f32 %v40, %v95
    %v97 = vpop.f32.mrb[0].mxu0
    %98 = vdwg.mxu0
    %v99 = vmax.f32 %v93, 0.0
    %v100 = vmax.f32 %v96, 0.0
    %v101 = vpack.c.bf16 %v100, %v99
    %v102 = vld [vmem:[%s3] sm:$0xf]
    %v103 = vld [vmem:[%s3 + $0x4] sm:$0xf]
    %v104 = vld [vmem:[%s3 + $0x8] sm:$0xf]
    %v105 = vld [vmem:[%s3 + $0xc] sm:$0xf]
    %v106 = vld [vmem:[%s3 + $0x10] sm:$0xf]
    %v107 = vld [vmem:[%s3 + $0x14] sm:$0xf]
    %v108 = vld [vmem:[%s3 + $0x18] sm:$0xf]
    %v109 = vld [vmem:[%s3 + $0x1c] sm:$0xf]
    %v110 = vld [vmem:[%s4] sm:$0x1]
    %v112 = vlaneseq
    %v113 = vshrl.u32 %v112, 7
    %v114 = vsub.s32 0, %v113
    %v115 = vrot.slane %v110, %v114
    %v125 = vunpack.c.l.b16 %v102
    %v126 = vunpack.c.l.b16 %v103
    %v127 = vunpack.c.l.b16 %v104
    %v128 = vunpack.c.l.b16 %v105
    %v129 = vunpack.c.l.b16 %v106
    %v130 = vunpack.c.l.b16 %v107
    %v131 = vunpack.c.l.b16 %v108
    %v132 = vunpack.c.l.b16 %v109
    %v133 = vpack.c.b16 %v126, %v125
    %v134 = vpack.c.b16 %v128, %v127
    %v135 = vpack.c.b16 %v130, %v129
    %v136 = vpack.c.b16 %v132, %v131
    %vm141 = vcmask 523264
    %v143 = vsel %vm141, %v101, 0
    %145 = vmatprep.subr.bf16.mxu0 0
    %146 = vmatpush1.bf16.msra.mxu0 %v133
    %147 = vmatprep.subr.bf16.mxu0 0
    %148 = vmatpush1.bf16.msra.mxu0 %v134
    %149 = vmatprep.subr.bf16.mxu0 0
    %150 = vmatpush1.bf16.msra.mxu0 %v135
    %151 = vmatprep.subr.bf16.mxu0 0
    %152 = vmatpush1.bf16.msra.mxu0 %v136
    %153 = vmatprep.subr.bf16.mxu0 0
    %154 = vmatpush1.bf16.msra.mxu0 0
    %155 = vmatprep.subr.bf16.mxu0 0
    %156 = vmatpush1.bf16.msra.mxu0 0
    %157 = vmatprep.subr.bf16.mxu0 0
    %158 = vmatpush1.bf16.msra.mxu0 0
    %159 = vmatprep.subr.bf16.mxu0 0
    %160 = vmatpush1.bf16.msra.mxu0 0
    %161 = vmatprep.subr.bf16.mxu0 0
    %162 = vmatpush1.bf16.msra.mxu0 0
    %163 = vmatprep.subr.bf16.mxu0 0
    %164 = vmatpush1.bf16.msra.mxu0 0
    %165 = vmatprep.subr.bf16.mxu0 0
    %166 = vmatpush1.bf16.msra.mxu0 0
    %167 = vmatprep.subr.bf16.mxu0 0
    %168 = vmatpush1.bf16.msra.mxu0 0
    %169 = vmatprep.subr.bf16.mxu0 0
    %170 = vmatpush1.bf16.msra.mxu0 0
    %171 = vmatprep.subr.bf16.mxu0 0
    %172 = vmatpush1.bf16.msra.mxu0 0
    %173 = vmatprep.subr.bf16.mxu0 0
    %174 = vmatpush1.bf16.msra.mxu0 0
    %175 = vmatprep.subr.bf16.mxu0 0
    %176 = vmatpush1.bf16.msra.mxu0 0
    %177 = vmatprep.mubr.bf16.mxu0 0
    %178 = vmatmul.mubr.bf16.gmra.mrb[0].mxu0 %v143
    %v179 = vpop.f32.mrb[0].mxu0
    %v180 = vadd.f32 %v115, %v179
    %v181 = vpop.f32.mrb[0].mxu0
    %v182 = vpop.f32.mrb[0].mxu0
    %v183 = vadd.f32 %v115, %v182
    %v184 = vpop.f32.mrb[0].mxu0
    %185 = vdwg.mxu0
    %v186 = vadd.f32 %v180, %v28
    %v187 = vadd.f32 %v183, %v29
    %v188 = vsel %vm54, %v186, 0.0
    %189 = vadd.xlane.f32.xlu0 %v188
    %v190 = vpop.xlane.xlu0 %189
    %v191 = vsel %vm54, %v187, 0.0
    %192 = vadd.xlane.f32.xlu0 %v191
    %v193 = vpop.xlane.xlu0 %192
    %v194 = vrcp.pop 32.0
    %v195 = vmul.f32 %v190, %v194
    %v196 = vmul.f32 %v193, %v194
    %v197 = vsub.f32 %v186, %v195
    %v198 = vsub.f32 %v187, %v196
    %v199 = vmul.f32 %v197, %v197
    %v200 = vmul.f32 %v198, %v198
    %v201 = vsel %vm54, %v199, 0.0
    %202 = vadd.xlane.f32.xlu0 %v201
    %v203 = vpop.xlane.xlu0 %202
    %v204 = vsel %vm54, %v200, 0.0
    %205 = vadd.xlane.f32.xlu0 %v204
    %v206 = vpop.xlane.xlu0 %205
    %v207 = vmul.f32 %v203, %v194
    %v208 = vmul.f32 %v206, %v194
    %v209 = vadd.f32 %v207, 1e-05
    %v210 = vadd.f32 %v208, 1e-05
    %v211 = vrsqrt.pop %v209
    %v212 = vrsqrt.pop %v210
    %v213 = vmul.f32 %v197, %v211
    %v214 = vmul.f32 %v198, %v212
    %v215 = vld [vmem:[%s5] sm:$0x1]
    %v217 = vlaneseq
    %v218 = vshrl.u32 %v217, 7
    %v219 = vsub.s32 0, %v218
    %v220 = vrot.slane %v215, %v219
    %v222 = vmul.f32 %v213, %v220
    %v223 = vmul.f32 %v214, %v220
    %v224 = vld [vmem:[%s6] sm:$0x1]
    %v226 = vlaneseq
    %v227 = vshrl.u32 %v226, 7
    %v228 = vsub.s32 0, %v227
    %v229 = vrot.slane %v224, %v228
    %v231 = vadd.f32 %v222, %v229
    %v232 = vadd.f32 %v223, %v229
    %233 = vst.msk [vmem:[#allocation2] sm:$0xff] %vm54, %v231
    %234 = vst.msk [vmem:[#allocation2 + $0x8] sm:$0xff] %vm54, %v232
    // Predicated region
    $region30: #{relative_transformer_decoder_forward.15} parent=1 // pred_check
      _
    $region31: #{relative_transformer_decoder_forward.15} parent=1 // pred_check_branch
      %236 = sbr.rel (0) target = $region33
    $region32: #{relative_transformer_decoder_forward.15} parent=1 // pred_region
      %s238 = ssub.s32 256, 256
      %239 = vsyncadd [#allocation3], %s238
      %s240 = sshll.u32 [#allocation2], 4
      %s241 = int_to_ptr.vmem [resolvable:$true] %s240
      %246 = dma.vmem_to_hbm [thread:$0]  %s241, 256, %s7, [#allocation3], 128, 128, 8
    $region33: #{relative_transformer_decoder_forward.15} parent=1 // pred_fallthru
      _
    // Predicated region
    $region34: #{relative_transformer_decoder_forward.15} parent=1 // pred_check
      _
    $region35: #{relative_transformer_decoder_forward.15} parent=1 // pred_check_branch
      %248 = sbr.rel (0) target = $region37
    $region36: #{relative_transformer_decoder_forward.15} parent=1 // pred_region
      %249 = dma.done [#allocation3], 256
    $region37: #{relative_transformer_decoder_forward.15} parent=1 // pred_fallthru
      _
    %250 = vsyncpa [#allocation3], 1

</llo_original>
